<compile_context>
chip_gen: v6e
topology: v6e:2x2x1
jax: 0.10.0
libtpu: 0.0.40
codegen_flags: <defaults>
</compile_context>

<pallas_src>
import functools

import jax
import jax.numpy as jnp
from jax.experimental import pallas as pl
from jax.experimental.pallas import tpu as pltpu


def _round_up(x, m):
    return (x + m - 1) // m * m


def _pick_batch_tile(n):
    """Images per grid step.

    Amortizes the per-grid-step overhead while keeping >= 2 grid steps so
    dimension_semantics=("parallel",) can still split the batch across the
    two TensorCores of a v7x chip.  Per-step VMEM stays ~(0.2 MB * B), far
    below even v7x's scoped limit.
    """
    for b in (8, 4, 2):
        if n % b == 0 and n // b >= 2:
            return b
    return 1


def _fused_conv_kernel(x_ref, w0_ref, b0_ref, w1t_ref, b1_ref, out_ref,
                       xpad_ref, h0_ref, *,
                       H, W, pad0, S, KH, KW, C0, C1, L0, L1):
    """Fused pad + conv0 + conv1 for a tile of B images.

    x_ref   : (B, 1, H, W)   raw input images
    w0_ref  : (C0, T)        conv0 weights, taps on the minor dim
    b0_ref  : (C0, 1)        conv0 bias
    w1t_ref : (T, C1, C0)    conv1 weights, one (C1, C0) matrix per tap
    b1_ref  : (C1, 1)        conv1 bias
    out_ref : (B, C1, L1)    lane-dense wide output (valid cols r = y*S + x, x < Wc1)
    xpad_ref: (B, LP) VMEM   zero-padded images, flattened with stride S
    h0_ref  : (C0, L0) VMEM  conv0 activation (reused per image)
    """
    B = out_ref.shape[0]
    T = KH * KW

    # Zero the padded-image scratch every step (cheap: B*LP f32).  We do not
    # rely on a program_id==0 init because the grid axis is "parallel" and a
    # megacore split would leave one core's scratch uninitialized.
    xpad_ref[...] = jnp.zeros_like(xpad_ref)

    w0 = w0_ref[...]            # (C0, T)
    b0 = b0_ref[...]            # (C0, 1)
    b1 = b1_ref[...]            # (C1, 1)

    for b in range(B):
        # ---- fused zero-padding: scatter the H x W rows into the flat
        #      (stride S) padded image; everything else stays zero. ----
        ximg = x_ref[b, 0]                                      # (H, W)
        for r in range(H):
            off = (pad0 + r) * S + pad0
            xpad_ref[pl.ds(b, 1), pl.ds(off, W)] = ximg[r:r + 1, :]

        # ---- conv0 (Cin=1): 9 VPU broadcast multiply-adds,
        #      accumulator initialized from the bias. ----
        acc0 = b0 + w0[:, 0:1] * xpad_ref[pl.ds(b, 1), pl.ds(0, L0)]
        for t in range(1, T):
            i, j = divmod(t, KW)
            off = i * S + j
            acc0 = acc0 + w0[:, t:t + 1] * xpad_ref[pl.ds(b, 1), pl.ds(off, L0)]
        h0_ref[...] = acc0                                      # (C0, L0), lane-dense

        # ---- conv1: 9 accumulating MXU matmuls over shifted h0 views
        #      (no im2col scratch; f32 accumulation). ----
        acc1 = None
        for t in range(T):
            i, j = divmod(t, KW)
            off = i * S + j
            part = jnp.dot(w1t_ref[t], h0_ref[:, pl.ds(off, L1)],
                           preferred_element_type=jnp.float32)  # (C1, L1)
            acc1 = part if acc1 is None else acc1 + part
        out_ref[b] = acc1 + b1


def fused_conv_forward(x_nchw, params, *, pad0=5):
    """Conv2d(1,16,3,pad=5) -> Conv2d(16,32,3), PyTorch semantics, NCHW in/out."""
    N, Cin, H, W = x_nchw.shape
    assert Cin == 1
    w0, b0, w1, b1 = params["w0"], params["b0"], params["w1"], params["b1"]
    C0, _, KH, KW = w0.shape                      # (16, 1, 3, 3)
    C1 = w1.shape[0]                              # 32
    T = KH * KW

    Hp, Wp = H + 2 * pad0, W + 2 * pad0           # padded input spatial
    Hc0, Wc0 = Hp - KH + 1, Wp - KW + 1           # conv0 output spatial
    Hc1, Wc1 = Hc0 - KH + 1, Wc0 - KW + 1         # conv1 output spatial
    S = Wp                                        # flattened-spatial stride
    max_off = (KH - 1) * S + (KW - 1)             # largest tap offset
    L1 = _round_up(Hc1 * S, 128)                  # lane-dense output width
    L0 = _round_up(L1 + max_off, 128)             # h0 columns needed by conv1
    LP = _round_up(L0 + max_off, 128)             # flat padded-image length
    assert LP >= (pad0 + H - 1) * S + pad0 + W    # pad scatter stays in-bounds

    B = _pick_batch_tile(N)
    G = N // B

    # Weight / bias re-layout (tiny, one-time glue).
    w0f = w0.reshape(C0, T)                                    # (16, 9)
    b0c = b0.reshape(C0, 1)
    w1t = jnp.transpose(w1, (2, 3, 0, 1)).reshape(T, C1, C0)   # (9, 32, 16)
    b1c = b1.reshape(C1, 1)

    kernel = functools.partial(
        _fused_conv_kernel, H=H, W=W, pad0=pad0, S=S, KH=KH, KW=KW,
        C0=C0, C1=C1, L0=L0, L1=L1)

    out_wide = pl.pallas_call(
        kernel,
        out_shape=jax.ShapeDtypeStruct((N, C1, L1), jnp.float32),
        grid_spec=pltpu.PrefetchScalarGridSpec(
            num_scalar_prefetch=0,
            grid=(G,),
            in_specs=[
                pl.BlockSpec((B, 1, H, W), lambda g: (g, 0, 0, 0)),
                pl.BlockSpec((C0, T), lambda g: (0, 0)),
                pl.BlockSpec((C0, 1), lambda g: (0, 0)),
                pl.BlockSpec((T, C1, C0), lambda g: (0, 0, 0)),
                pl.BlockSpec((C1, 1), lambda g: (0, 0)),
            ],
            out_specs=pl.BlockSpec((B, C1, L1), lambda g: (g, 0, 0)),
            scratch_shapes=[
                pltpu.VMEM((B, LP), jnp.float32),    # fused-pad image scratch
                pltpu.VMEM((C0, L0), jnp.float32),   # conv0 activation
            ],
        ),
        compiler_params=pltpu.CompilerParams(
            dimension_semantics=("parallel",)),
    )(x_nchw, w0f, b0c, w1t, b1c)

    # Valid output columns are r = y*S + x with x < Wc1.  A fused consumer
    # could read the lane-dense wide layout directly; this narrowing exists
    # only to honor the module's NCHW output contract.
    out = out_wide[:, :, :Hc1 * S].reshape(N, C1, Hc1, S)[:, :, :, :Wc1]
    return out


def init_params(key):
    k0, k1, k2, k3 = jax.random.split(key, 4)
    return {
        "w0": jax.random.normal(k0, (16, 1, 3, 3), jnp.float32) * 0.1,
        "b0": jax.random.normal(k1, (16,), jnp.float32) * 0.1,
        "w1": jax.random.normal(k2, (32, 16, 3, 3), jnp.float32) * 0.1,
        "b1": jax.random.normal(k3, (32,), jnp.float32) * 0.1,
    }


@jax.jit
def model_forward(x_nchw, params):
    return fused_conv_forward(x_nchw, params, pad0=5)


def ref_forward(x, params):
    h = jax.lax.conv_general_dilated(
        x, params["w0"], (1, 1), [(5, 5), (5, 5)],
        dimension_numbers=("NCHW", "OIHW", "NCHW"))
    h = h + params["b0"][None, :, None, None]
    h = jax.lax.conv_general_dilated(
        h, params["w1"], (1, 1), [(0, 0), (0, 0)],
        dimension_numbers=("NCHW", "OIHW", "NCHW"))
    h = h + params["b1"][None, :, None, None]
    return h


if __name__ == "__main__":
    key = jax.random.PRNGKey(0)
    kx, kp = jax.random.split(key)
    # NCHW, Conv2d expects 1 input channel.
    x = jax.random.normal(kx, (2, 1, 16, 16), jnp.float32)
    params = init_params(kp)

    out = model_forward(x, params)
    out = jax.block_until_ready(out)

    assert out.shape == (2, 32, 22, 22), out.shape

    ref = ref_forward(x, params)
    err = float(jnp.max(jnp.abs(out - ref)))
    assert jnp.allclose(out, ref, rtol=1e-3, atol=1e-3), err

    print("KERNEL_OK")
</pallas_src>

<mosaic_0001>
module attributes {stable_mosaic.version = 11 : i64} {
  func.func @_fused_conv_kernel(%arg0: i32, %arg1: memref<1x1x16x16xf32, #tpu.memory_space<vmem>>, %arg2: memref<16x9xf32, #tpu.memory_space<vmem>>, %arg3: memref<16x1xf32, #tpu.memory_space<vmem>>, %arg4: memref<9x32x16xf32, #tpu.memory_space<vmem>>, %arg5: memref<32x1xf32, #tpu.memory_space<vmem>>, %arg6: memref<1x32x640xf32, #tpu.memory_space<vmem>>, %arg7: memref<1x896xf32, #tpu.memory_space<vmem>>, %arg8: memref<16x768xf32, #tpu.memory_space<vmem>>) attributes {dimension_semantics = [#tpu.dimension_semantics<parallel>], iteration_bounds = array<i64: 2>, scalar_prefetch = 0 : i64, scratch_operands = 2 : i64, tpu.core_type = #tpu.core_type<tc>, window_params = [{transform_indices = @transform_0, window_bounds = array<i64: 1, 1, 16, 16>}, {pipeline_mode = #tpu.pipeline_mode<synchronous>, transform_indices = @transform_1, window_bounds = array<i64: 16, 9>}, {pipeline_mode = #tpu.pipeline_mode<synchronous>, transform_indices = @transform_2, window_bounds = array<i64: 16, 1>}, {pipeline_mode = #tpu.pipeline_mode<synchronous>, transform_indices = @transform_3, window_bounds = array<i64: 9, 32, 16>}, {pipeline_mode = #tpu.pipeline_mode<synchronous>, transform_indices = @transform_4, window_bounds = array<i64: 32, 1>}, {transform_indices = @transform_5, window_bounds = array<i64: 1, 32, 640>}]} {
    %cst = arith.constant 0.000000e+00 : f32
    %0 = vector.broadcast %cst : f32 to vector<1x896xf32>
    %c0 = arith.constant 0 : index
    %c0_0 = arith.constant 0 : index
    %1 = vector.load %arg7[%c0, %c0_0] : memref<1x896xf32, #tpu.memory_space<vmem>>, vector<1x896xf32>
    tpu.vector_store %arg7[%c0, %c0_0], %0 {strides = array<i32>} : memref<1x896xf32, #tpu.memory_space<vmem>>, vector<1x896xf32>,
    %c0_1 = arith.constant 0 : index
    %c0_2 = arith.constant 0 : index
    %2 = vector.load %arg2[%c0_1, %c0_2] : memref<16x9xf32, #tpu.memory_space<vmem>>, vector<16x9xf32>
    %c0_3 = arith.constant 0 : index
    %c0_4 = arith.constant 0 : index
    %3 = vector.load %arg3[%c0_3, %c0_4] : memref<16x1xf32, #tpu.memory_space<vmem>>, vector<16x1xf32>
    %c0_5 = arith.constant 0 : index
    %c0_6 = arith.constant 0 : index
    %4 = vector.load %arg5[%c0_5, %c0_6] : memref<32x1xf32, #tpu.memory_space<vmem>>, vector<32x1xf32>
    %c0_7 = arith.constant 0 : index
    %c0_8 = arith.constant 0 : index
    %c0_9 = arith.constant 0 : index
    %c0_10 = arith.constant 0 : index
    %5 = vector.load %arg1[%c0_7, %c0_8, %c0_9, %c0_10] : memref<1x1x16x16xf32, #tpu.memory_space<vmem>>, vector<1x1x16x16xf32>
    %6 = vector.shape_cast %5 : vector<1x1x16x16xf32> to vector<16x16xf32>
    %7 = vector.extract_strided_slice %6 {offsets = [0, 0], sizes = [1, 16], strides = [1, 1]} : vector<16x16xf32> to vector<1x16xf32>
    %c0_11 = arith.constant 0 : index
    %c135 = arith.constant 135 : index
    %8 = vector.load %arg7[%c0_11, %c135] : memref<1x896xf32, #tpu.memory_space<vmem>>, vector<1x16xf32>
    tpu.vector_store %arg7[%c0_11, %c135], %7 {strides = array<i32>} : memref<1x896xf32, #tpu.memory_space<vmem>>, vector<1x16xf32>,
    %9 = vector.extract_strided_slice %6 {offsets = [1, 0], sizes = [1, 16], strides = [1, 1]} : vector<16x16xf32> to vector<1x16xf32>
    %c0_12 = arith.constant 0 : index
    %c161 = arith.constant 161 : index
    %10 = vector.load %arg7[%c0_12, %c161] : memref<1x896xf32, #tpu.memory_space<vmem>>, vector<1x16xf32>
    tpu.vector_store %arg7[%c0_12, %c161], %9 {strides = array<i32>} : memref<1x896xf32, #tpu.memory_space<vmem>>, vector<1x16xf32>,
    %11 = vector.extract_strided_slice %6 {offsets = [2, 0], sizes = [1, 16], strides = [1, 1]} : vector<16x16xf32> to vector<1x16xf32>
    %c0_13 = arith.constant 0 : index
    %c187 = arith.constant 187 : index
    %12 = vector.load %arg7[%c0_13, %c187] : memref<1x896xf32, #tpu.memory_space<vmem>>, vector<1x16xf32>
    tpu.vector_store %arg7[%c0_13, %c187], %11 {strides = array<i32>} : memref<1x896xf32, #tpu.memory_space<vmem>>, vector<1x16xf32>,
    %13 = vector.extract_strided_slice %6 {offsets = [3, 0], sizes = [1, 16], strides = [1, 1]} : vector<16x16xf32> to vector<1x16xf32>
    %c0_14 = arith.constant 0 : index
    %c213 = arith.constant 213 : index
    %14 = vector.load %arg7[%c0_14, %c213] : memref<1x896xf32, #tpu.memory_space<vmem>>, vector<1x16xf32>
    tpu.vector_store %arg7[%c0_14, %c213], %13 {strides = array<i32>} : memref<1x896xf32, #tpu.memory_space<vmem>>, vector<1x16xf32>,
    %15 = vector.extract_strided_slice %6 {offsets = [4, 0], sizes = [1, 16], strides = [1, 1]} : vector<16x16xf32> to vector<1x16xf32>
    %c0_15 = arith.constant 0 : index
    %c239 = arith.constant 239 : index
    %16 = vector.load %arg7[%c0_15, %c239] : memref<1x896xf32, #tpu.memory_space<vmem>>, vector<1x16xf32>
    tpu.vector_store %arg7[%c0_15, %c239], %15 {strides = array<i32>} : memref<1x896xf32, #tpu.memory_space<vmem>>, vector<1x16xf32>,
    %17 = vector.extract_strided_slice %6 {offsets = [5, 0], sizes = [1, 16], strides = [1, 1]} : vector<16x16xf32> to vector<1x16xf32>
    %c0_16 = arith.constant 0 : index
    %c265 = arith.constant 265 : index
    %18 = vector.load %arg7[%c0_16, %c265] : memref<1x896xf32, #tpu.memory_space<vmem>>, vector<1x16xf32>
    tpu.vector_store %arg7[%c0_16, %c265], %17 {strides = array<i32>} : memref<1x896xf32, #tpu.memory_space<vmem>>, vector<1x16xf32>,
    %19 = vector.extract_strided_slice %6 {offsets = [6, 0], sizes = [1, 16], strides = [1, 1]} : vector<16x16xf32> to vector<1x16xf32>
    %c0_17 = arith.constant 0 : index
    %c291 = arith.constant 291 : index
    %20 = vector.load %arg7[%c0_17, %c291] : memref<1x896xf32, #tpu.memory_space<vmem>>, vector<1x16xf32>
    tpu.vector_store %arg7[%c0_17, %c291], %19 {strides = array<i32>} : memref<1x896xf32, #tpu.memory_space<vmem>>, vector<1x16xf32>,
    %21 = vector.extract_strided_slice %6 {offsets = [7, 0], sizes = [1, 16], strides = [1, 1]} : vector<16x16xf32> to vector<1x16xf32>
    %c0_18 = arith.constant 0 : index
    %c317 = arith.constant 317 : index
    %22 = vector.load %arg7[%c0_18, %c317] : memref<1x896xf32, #tpu.memory_space<vmem>>, vector<1x16xf32>
    tpu.vector_store %arg7[%c0_18, %c317], %21 {strides = array<i32>} : memref<1x896xf32, #tpu.memory_space<vmem>>, vector<1x16xf32>,
    %23 = vector.extract_strided_slice %6 {offsets = [8, 0], sizes = [1, 16], strides = [1, 1]} : vector<16x16xf32> to vector<1x16xf32>
    %c0_19 = arith.constant 0 : index
    %c343 = arith.constant 343 : index
    %24 = vector.load %arg7[%c0_19, %c343] : memref<1x896xf32, #tpu.memory_space<vmem>>, vector<1x16xf32>
    tpu.vector_store %arg7[%c0_19, %c343], %23 {strides = array<i32>} : memref<1x896xf32, #tpu.memory_space<vmem>>, vector<1x16xf32>,
    %25 = vector.extract_strided_slice %6 {offsets = [9, 0], sizes = [1, 16], strides = [1, 1]} : vector<16x16xf32> to vector<1x16xf32>
    %c0_20 = arith.constant 0 : index
    %c369 = arith.constant 369 : index
    %26 = vector.load %arg7[%c0_20, %c369] : memref<1x896xf32, #tpu.memory_space<vmem>>, vector<1x16xf32>
    tpu.vector_store %arg7[%c0_20, %c369], %25 {strides = array<i32>} : memref<1x896xf32, #tpu.memory_space<vmem>>, vector<1x16xf32>,
    %27 = vector.extract_strided_slice %6 {offsets = [10, 0], sizes = [1, 16], strides = [1, 1]} : vector<16x16xf32> to vector<1x16xf32>
    %c0_21 = arith.constant 0 : index
    %c395 = arith.constant 395 : index
    %28 = vector.load %arg7[%c0_21, %c395] : memref<1x896xf32, #tpu.memory_space<vmem>>, vector<1x16xf32>
    tpu.vector_store %arg7[%c0_21, %c395], %27 {strides = array<i32>} : memref<1x896xf32, #tpu.memory_space<vmem>>, vector<1x16xf32>,
    %29 = vector.extract_strided_slice %6 {offsets = [11, 0], sizes = [1, 16], strides = [1, 1]} : vector<16x16xf32> to vector<1x16xf32>
    %c0_22 = arith.constant 0 : index
    %c421 = arith.constant 421 : index
    %30 = vector.load %arg7[%c0_22, %c421] : memref<1x896xf32, #tpu.memory_space<vmem>>, vector<1x16xf32>
    tpu.vector_store %arg7[%c0_22, %c421], %29 {strides = array<i32>} : memref<1x896xf32, #tpu.memory_space<vmem>>, vector<1x16xf32>,
    %31 = vector.extract_strided_slice %6 {offsets = [12, 0], sizes = [1, 16], strides = [1, 1]} : vector<16x16xf32> to vector<1x16xf32>
    %c0_23 = arith.constant 0 : index
    %c447 = arith.constant 447 : index
    %32 = vector.load %arg7[%c0_23, %c447] : memref<1x896xf32, #tpu.memory_space<vmem>>, vector<1x16xf32>
    tpu.vector_store %arg7[%c0_23, %c447], %31 {strides = array<i32>} : memref<1x896xf32, #tpu.memory_space<vmem>>, vector<1x16xf32>,
    %33 = vector.extract_strided_slice %6 {offsets = [13, 0], sizes = [1, 16], strides = [1, 1]} : vector<16x16xf32> to vector<1x16xf32>
    %c0_24 = arith.constant 0 : index
    %c473 = arith.constant 473 : index
    %34 = vector.load %arg7[%c0_24, %c473] : memref<1x896xf32, #tpu.memory_space<vmem>>, vector<1x16xf32>
    tpu.vector_store %arg7[%c0_24, %c473], %33 {strides = array<i32>} : memref<1x896xf32, #tpu.memory_space<vmem>>, vector<1x16xf32>,
    %35 = vector.extract_strided_slice %6 {offsets = [14, 0], sizes = [1, 16], strides = [1, 1]} : vector<16x16xf32> to vector<1x16xf32>
    %c0_25 = arith.constant 0 : index
    %c499 = arith.constant 499 : index
    %36 = vector.load %arg7[%c0_25, %c499] : memref<1x896xf32, #tpu.memory_space<vmem>>, vector<1x16xf32>
    tpu.vector_store %arg7[%c0_25, %c499], %35 {strides = array<i32>} : memref<1x896xf32, #tpu.memory_space<vmem>>, vector<1x16xf32>,
    %37 = vector.extract_strided_slice %6 {offsets = [15, 0], sizes = [1, 16], strides = [1, 1]} : vector<16x16xf32> to vector<1x16xf32>
    %c0_26 = arith.constant 0 : index
    %c525 = arith.constant 525 : index
    %38 = vector.load %arg7[%c0_26, %c525] : memref<1x896xf32, #tpu.memory_space<vmem>>, vector<1x16xf32>
    tpu.vector_store %arg7[%c0_26, %c525], %37 {strides = array<i32>} : memref<1x896xf32, #tpu.memory_space<vmem>>, vector<1x16xf32>,
    %39 = vector.extract_strided_slice %2 {offsets = [0, 0], sizes = [16, 1], strides = [1, 1]} : vector<16x9xf32> to vector<16x1xf32>
    %c0_27 = arith.constant 0 : index
    %c0_28 = arith.constant 0 : index
    %40 = vector.load %arg7[%c0_27, %c0_28] : memref<1x896xf32, #tpu.memory_space<vmem>>, vector<1x768xf32>
    %41 = vector.broadcast %39 : vector<16x1xf32> to vector<16x768xf32>
    %42 = vector.broadcast %40 : vector<1x768xf32> to vector<16x768xf32>
    %43 = arith.mulf %41, %42 : vector<16x768xf32>
    %44 = vector.broadcast %3 : vector<16x1xf32> to vector<16x768xf32>
    %45 = arith.addf %44, %43 : vector<16x768xf32>
    %46 = vector.extract_strided_slice %2 {offsets = [0, 1], sizes = [16, 1], strides = [1, 1]} : vector<16x9xf32> to vector<16x1xf32>
    %c0_29 = arith.constant 0 : index
    %c1 = arith.constant 1 : index
    %47 = vector.load %arg7[%c0_29, %c1] : memref<1x896xf32, #tpu.memory_space<vmem>>, vector<1x768xf32>
    %48 = vector.broadcast %46 : vector<16x1xf32> to vector<16x768xf32>
    %49 = vector.broadcast %47 : vector<1x768xf32> to vector<16x768xf32>
    %50 = arith.mulf %48, %49 : vector<16x768xf32>
    %51 = arith.addf %45, %50 : vector<16x768xf32>
    %52 = vector.extract_strided_slice %2 {offsets = [0, 2], sizes = [16, 1], strides = [1, 1]} : vector<16x9xf32> to vector<16x1xf32>
    %c0_30 = arith.constant 0 : index
    %c2 = arith.constant 2 : index
    %53 = vector.load %arg7[%c0_30, %c2] : memref<1x896xf32, #tpu.memory_space<vmem>>, vector<1x768xf32>
    %54 = vector.broadcast %52 : vector<16x1xf32> to vector<16x768xf32>
    %55 = vector.broadcast %53 : vector<1x768xf32> to vector<16x768xf32>
    %56 = arith.mulf %54, %55 : vector<16x768xf32>
    %57 = arith.addf %51, %56 : vector<16x768xf32>
    %58 = vector.extract_strided_slice %2 {offsets = [0, 3], sizes = [16, 1], strides = [1, 1]} : vector<16x9xf32> to vector<16x1xf32>
    %c0_31 = arith.constant 0 : index
    %c26 = arith.constant 26 : index
    %59 = vector.load %arg7[%c0_31, %c26] : memref<1x896xf32, #tpu.memory_space<vmem>>, vector<1x768xf32>
    %60 = vector.broadcast %58 : vector<16x1xf32> to vector<16x768xf32>
    %61 = vector.broadcast %59 : vector<1x768xf32> to vector<16x768xf32>
    %62 = arith.mulf %60, %61 : vector<16x768xf32>
    %63 = arith.addf %57, %62 : vector<16x768xf32>
    %64 = vector.extract_strided_slice %2 {offsets = [0, 4], sizes = [16, 1], strides = [1, 1]} : vector<16x9xf32> to vector<16x1xf32>
    %c0_32 = arith.constant 0 : index
    %c27 = arith.constant 27 : index
    %65 = vector.load %arg7[%c0_32, %c27] : memref<1x896xf32, #tpu.memory_space<vmem>>, vector<1x768xf32>
    %66 = vector.broadcast %64 : vector<16x1xf32> to vector<16x768xf32>
    %67 = vector.broadcast %65 : vector<1x768xf32> to vector<16x768xf32>
    %68 = arith.mulf %66, %67 : vector<16x768xf32>
    %69 = arith.addf %63, %68 : vector<16x768xf32>
    %70 = vector.extract_strided_slice %2 {offsets = [0, 5], sizes = [16, 1], strides = [1, 1]} : vector<16x9xf32> to vector<16x1xf32>
    %c0_33 = arith.constant 0 : index
    %c28 = arith.constant 28 : index
    %71 = vector.load %arg7[%c0_33, %c28] : memref<1x896xf32, #tpu.memory_space<vmem>>, vector<1x768xf32>
    %72 = vector.broadcast %70 : vector<16x1xf32> to vector<16x768xf32>
    %73 = vector.broadcast %71 : vector<1x768xf32> to vector<16x768xf32>
    %74 = arith.mulf %72, %73 : vector<16x768xf32>
    %75 = arith.addf %69, %74 : vector<16x768xf32>
    %76 = vector.extract_strided_slice %2 {offsets = [0, 6], sizes = [16, 1], strides = [1, 1]} : vector<16x9xf32> to vector<16x1xf32>
    %c0_34 = arith.constant 0 : index
    %c52 = arith.constant 52 : index
    %77 = vector.load %arg7[%c0_34, %c52] : memref<1x896xf32, #tpu.memory_space<vmem>>, vector<1x768xf32>
    %78 = vector.broadcast %76 : vector<16x1xf32> to vector<16x768xf32>
    %79 = vector.broadcast %77 : vector<1x768xf32> to vector<16x768xf32>
    %80 = arith.mulf %78, %79 : vector<16x768xf32>
    %81 = arith.addf %75, %80 : vector<16x768xf32>
    %82 = vector.extract_strided_slice %2 {offsets = [0, 7], sizes = [16, 1], strides = [1, 1]} : vector<16x9xf32> to vector<16x1xf32>
    %c0_35 = arith.constant 0 : index
    %c53 = arith.constant 53 : index
    %83 = vector.load %arg7[%c0_35, %c53] : memref<1x896xf32, #tpu.memory_space<vmem>>, vector<1x768xf32>
    %84 = vector.broadcast %82 : vector<16x1xf32> to vector<16x768xf32>
    %85 = vector.broadcast %83 : vector<1x768xf32> to vector<16x768xf32>
    %86 = arith.mulf %84, %85 : vector<16x768xf32>
    %87 = arith.addf %81, %86 : vector<16x768xf32>
    %88 = vector.extract_strided_slice %2 {offsets = [0, 8], sizes = [16, 1], strides = [1, 1]} : vector<16x9xf32> to vector<16x1xf32>
    %c0_36 = arith.constant 0 : index
    %c54 = arith.constant 54 : index
    %89 = vector.load %arg7[%c0_36, %c54] : memref<1x896xf32, #tpu.memory_space<vmem>>, vector<1x768xf32>
    %90 = vector.broadcast %88 : vector<16x1xf32> to vector<16x768xf32>
    %91 = vector.broadcast %89 : vector<1x768xf32> to vector<16x768xf32>
    %92 = arith.mulf %90, %91 : vector<16x768xf32>
    %93 = arith.addf %87, %92 : vector<16x768xf32>
    %c0_37 = arith.constant 0 : index
    %c0_38 = arith.constant 0 : index
    %94 = vector.load %arg8[%c0_37, %c0_38] : memref<16x768xf32, #tpu.memory_space<vmem>>, vector<16x768xf32>
    tpu.vector_store %arg8[%c0_37, %c0_38], %93 {strides = array<i32>} : memref<16x768xf32, #tpu.memory_space<vmem>>, vector<16x768xf32>,
    %c0_39 = arith.constant 0 : index
    %c0_40 = arith.constant 0 : index
    %c0_41 = arith.constant 0 : index
    %95 = vector.load %arg4[%c0_39, %c0_40, %c0_41] : memref<9x32x16xf32, #tpu.memory_space<vmem>>, vector<1x32x16xf32>
    %96 = vector.shape_cast %95 : vector<1x32x16xf32> to vector<32x16xf32>
    %c0_42 = arith.constant 0 : index
    %c0_43 = arith.constant 0 : index
    %97 = vector.load %arg8[%c0_42, %c0_43] : memref<16x768xf32, #tpu.memory_space<vmem>>, vector<16x640xf32>
    %cst_44 = arith.constant dense<0.000000e+00> : vector<32x640xf32>
    %98 = tpu.matmul %96, %97, %cst_44 {dimension_numbers = #tpu.dot_dimension_numbers<[1], [0], [0], [1], [0, 0, 1, 1], [], []>} : vector<32x16xf32>, vector<16x640xf32>, vector<32x640xf32> -> vector<32x640xf32>
    %c1_45 = arith.constant 1 : index
    %c0_46 = arith.constant 0 : index
    %c0_47 = arith.constant 0 : index
    %99 = vector.load %arg4[%c1_45, %c0_46, %c0_47] : memref<9x32x16xf32, #tpu.memory_space<vmem>>, vector<1x32x16xf32>
    %100 = vector.shape_cast %99 : vector<1x32x16xf32> to vector<32x16xf32>
    %c0_48 = arith.constant 0 : index
    %c1_49 = arith.constant 1 : index
    %101 = vector.load %arg8[%c0_48, %c1_49] : memref<16x768xf32, #tpu.memory_space<vmem>>, vector<16x640xf32>
    %cst_50 = arith.constant dense<0.000000e+00> : vector<32x640xf32>
    %102 = tpu.matmul %100, %101, %cst_50 {dimension_numbers = #tpu.dot_dimension_numbers<[1], [0], [0], [1], [0, 0, 1, 1], [], []>} : vector<32x16xf32>, vector<16x640xf32>, vector<32x640xf32> -> vector<32x640xf32>
    %103 = arith.addf %98, %102 : vector<32x640xf32>
    %c2_51 = arith.constant 2 : index
    %c0_52 = arith.constant 0 : index
    %c0_53 = arith.constant 0 : index
    %104 = vector.load %arg4[%c2_51, %c0_52, %c0_53] : memref<9x32x16xf32, #tpu.memory_space<vmem>>, vector<1x32x16xf32>
    %105 = vector.shape_cast %104 : vector<1x32x16xf32> to vector<32x16xf32>
    %c0_54 = arith.constant 0 : index
    %c2_55 = arith.constant 2 : index
    %106 = vector.load %arg8[%c0_54, %c2_55] : memref<16x768xf32, #tpu.memory_space<vmem>>, vector<16x640xf32>
    %cst_56 = arith.constant dense<0.000000e+00> : vector<32x640xf32>
    %107 = tpu.matmul %105, %106, %cst_56 {dimension_numbers = #tpu.dot_dimension_numbers<[1], [0], [0], [1], [0, 0, 1, 1], [], []>} : vector<32x16xf32>, vector<16x640xf32>, vector<32x640xf32> -> vector<32x640xf32>
    %108 = arith.addf %103, %107 : vector<32x640xf32>
    %c3 = arith.constant 3 : index
    %c0_57 = arith.constant 0 : index
    %c0_58 = arith.constant 0 : index
    %109 = vector.load %arg4[%c3, %c0_57, %c0_58] : memref<9x32x16xf32, #tpu.memory_space<vmem>>, vector<1x32x16xf32>
    %110 = vector.shape_cast %109 : vector<1x32x16xf32> to vector<32x16xf32>
    %c0_59 = arith.constant 0 : index
    %c26_60 = arith.constant 26 : index
    %111 = vector.load %arg8[%c0_59, %c26_60] : memref<16x768xf32, #tpu.memory_space<vmem>>, vector<16x640xf32>
    %cst_61 = arith.constant dense<0.000000e+00> : vector<32x640xf32>
    %112 = tpu.matmul %110, %111, %cst_61 {dimension_numbers = #tpu.dot_dimension_numbers<[1], [0], [0], [1], [0, 0, 1, 1], [], []>} : vector<32x16xf32>, vector<16x640xf32>, vector<32x640xf32> -> vector<32x640xf32>
    %113 = arith.addf %108, %112 : vector<32x640xf32>
    %c4 = arith.constant 4 : index
    %c0_62 = arith.constant 0 : index
    %c0_63 = arith.constant 0 : index
    %114 = vector.load %arg4[%c4, %c0_62, %c0_63] : memref<9x32x16xf32, #tpu.memory_space<vmem>>, vector<1x32x16xf32>
    %115 = vector.shape_cast %114 : vector<1x32x16xf32> to vector<32x16xf32>
    %c0_64 = arith.constant 0 : index
    %c27_65 = arith.constant 27 : index
    %116 = vector.load %arg8[%c0_64, %c27_65] : memref<16x768xf32, #tpu.memory_space<vmem>>, vector<16x640xf32>
    %cst_66 = arith.constant dense<0.000000e+00> : vector<32x640xf32>
    %117 = tpu.matmul %115, %116, %cst_66 {dimension_numbers = #tpu.dot_dimension_numbers<[1], [0], [0], [1], [0, 0, 1, 1], [], []>} : vector<32x16xf32>, vector<16x640xf32>, vector<32x640xf32> -> vector<32x640xf32>
    %118 = arith.addf %113, %117 : vector<32x640xf32>
    %c5 = arith.constant 5 : index
    %c0_67 = arith.constant 0 : index
    %c0_68 = arith.constant 0 : index
    %119 = vector.load %arg4[%c5, %c0_67, %c0_68] : memref<9x32x16xf32, #tpu.memory_space<vmem>>, vector<1x32x16xf32>
    %120 = vector.shape_cast %119 : vector<1x32x16xf32> to vector<32x16xf32>
    %c0_69 = arith.constant 0 : index
    %c28_70 = arith.constant 28 : index
    %121 = vector.load %arg8[%c0_69, %c28_70] : memref<16x768xf32, #tpu.memory_space<vmem>>, vector<16x640xf32>
    %cst_71 = arith.constant dense<0.000000e+00> : vector<32x640xf32>
    %122 = tpu.matmul %120, %121, %cst_71 {dimension_numbers = #tpu.dot_dimension_numbers<[1], [0], [0], [1], [0, 0, 1, 1], [], []>} : vector<32x16xf32>, vector<16x640xf32>, vector<32x640xf32> -> vector<32x640xf32>
    %123 = arith.addf %118, %122 : vector<32x640xf32>
    %c6 = arith.constant 6 : index
    %c0_72 = arith.constant 0 : index
    %c0_73 = arith.constant 0 : index
    %124 = vector.load %arg4[%c6, %c0_72, %c0_73] : memref<9x32x16xf32, #tpu.memory_space<vmem>>, vector<1x32x16xf32>
    %125 = vector.shape_cast %124 : vector<1x32x16xf32> to vector<32x16xf32>
    %c0_74 = arith.constant 0 : index
    %c52_75 = arith.constant 52 : index
    %126 = vector.load %arg8[%c0_74, %c52_75] : memref<16x768xf32, #tpu.memory_space<vmem>>, vector<16x640xf32>
    %cst_76 = arith.constant dense<0.000000e+00> : vector<32x640xf32>
    %127 = tpu.matmul %125, %126, %cst_76 {dimension_numbers = #tpu.dot_dimension_numbers<[1], [0], [0], [1], [0, 0, 1, 1], [], []>} : vector<32x16xf32>, vector<16x640xf32>, vector<32x640xf32> -> vector<32x640xf32>
    %128 = arith.addf %123, %127 : vector<32x640xf32>
    %c7 = arith.constant 7 : index
    %c0_77 = arith.constant 0 : index
    %c0_78 = arith.constant 0 : index
    %129 = vector.load %arg4[%c7, %c0_77, %c0_78] : memref<9x32x16xf32, #tpu.memory_space<vmem>>, vector<1x32x16xf32>
    %130 = vector.shape_cast %129 : vector<1x32x16xf32> to vector<32x16xf32>
    %c0_79 = arith.constant 0 : index
    %c53_80 = arith.constant 53 : index
    %131 = vector.load %arg8[%c0_79, %c53_80] : memref<16x768xf32, #tpu.memory_space<vmem>>, vector<16x640xf32>
    %cst_81 = arith.constant dense<0.000000e+00> : vector<32x640xf32>
    %132 = tpu.matmul %130, %131, %cst_81 {dimension_numbers = #tpu.dot_dimension_numbers<[1], [0], [0], [1], [0, 0, 1, 1], [], []>} : vector<32x16xf32>, vector<16x640xf32>, vector<32x640xf32> -> vector<32x640xf32>
    %133 = arith.addf %128, %132 : vector<32x640xf32>
    %c8 = arith.constant 8 : index
    %c0_82 = arith.constant 0 : index
    %c0_83 = arith.constant 0 : index
    %134 = vector.load %arg4[%c8, %c0_82, %c0_83] : memref<9x32x16xf32, #tpu.memory_space<vmem>>, vector<1x32x16xf32>
    %135 = vector.shape_cast %134 : vector<1x32x16xf32> to vector<32x16xf32>
    %c0_84 = arith.constant 0 : index
    %c54_85 = arith.constant 54 : index
    %136 = vector.load %arg8[%c0_84, %c54_85] : memref<16x768xf32, #tpu.memory_space<vmem>>, vector<16x640xf32>
    %cst_86 = arith.constant dense<0.000000e+00> : vector<32x640xf32>
    %137 = tpu.matmul %135, %136, %cst_86 {dimension_numbers = #tpu.dot_dimension_numbers<[1], [0], [0], [1], [0, 0, 1, 1], [], []>} : vector<32x16xf32>, vector<16x640xf32>, vector<32x640xf32> -> vector<32x640xf32>
    %138 = arith.addf %133, %137 : vector<32x640xf32>
    %139 = vector.broadcast %4 : vector<32x1xf32> to vector<32x640xf32>
    %140 = arith.addf %138, %139 : vector<32x640xf32>
    %c0_87 = arith.constant 0 : index
    %c0_88 = arith.constant 0 : index
    %c0_89 = arith.constant 0 : index
    %141 = vector.load %arg6[%c0_87, %c0_88, %c0_89] : memref<1x32x640xf32, #tpu.memory_space<vmem>>, vector<1x32x640xf32>
    %142 = vector.shape_cast %141 : vector<1x32x640xf32> to vector<32x640xf32>
    %143 = vector.shape_cast %140 : vector<32x640xf32> to vector<1x32x640xf32>
    tpu.vector_store %arg6[%c0_87, %c0_88, %c0_89], %143 {strides = array<i32>} : memref<1x32x640xf32, #tpu.memory_space<vmem>>, vector<1x32x640xf32>,
    return
  }
  func.func @transform_0(%arg0: i32) -> (i32, i32, i32, i32) {
    %c0_i32 = arith.constant 0 : i32
    %c0_i32_0 = arith.constant 0 : i32
    %c0_i32_1 = arith.constant 0 : i32
    %c0_i32_2 = arith.constant 0 : i32
    return %arg0, %c0_i32, %c0_i32_0, %c0_i32_1 : i32, i32, i32, i32
  }
  func.func @transform_1(%arg0: i32) -> (i32, i32) {
    %c0_i32 = arith.constant 0 : i32
    %c0_i32_0 = arith.constant 0 : i32
    %c0_i32_1 = arith.constant 0 : i32
    return %c0_i32, %c0_i32_0 : i32, i32
  }
  func.func @transform_2(%arg0: i32) -> (i32, i32) {
    %c0_i32 = arith.constant 0 : i32
    %c0_i32_0 = arith.constant 0 : i32
    %c0_i32_1 = arith.constant 0 : i32
    return %c0_i32, %c0_i32_0 : i32, i32
  }
  func.func @transform_3(%arg0: i32) -> (i32, i32, i32) {
    %c0_i32 = arith.constant 0 : i32
    %c0_i32_0 = arith.constant 0 : i32
    %c0_i32_1 = arith.constant 0 : i32
    %c0_i32_2 = arith.constant 0 : i32
    return %c0_i32, %c0_i32_0, %c0_i32_1 : i32, i32, i32
  }
  func.func @transform_4(%arg0: i32) -> (i32, i32) {
    %c0_i32 = arith.constant 0 : i32
    %c0_i32_0 = arith.constant 0 : i32
    %c0_i32_1 = arith.constant 0 : i32
    return %c0_i32, %c0_i32_0 : i32, i32
  }
  func.func @transform_5(%arg0: i32) -> (i32, i32, i32) {
    %c0_i32 = arith.constant 0 : i32
    %c0_i32_0 = arith.constant 0 : i32
    %c0_i32_1 = arith.constant 0 : i32
    return %arg0, %c0_i32, %c0_i32_0 : i32, i32, i32
  }
}

</mosaic_0001>

<llo_original>
// kernel: model_forward.1
$region0: #{model_forward.1}
  #allocation0 [shape = 'u32[]', space=smem, size = 0x4, offset = 0x4, fixed_abs, tag = 'smem constant byte address 0x4 - core index']
  #allocation1 [shape = 'u32[144,128]{1,0:T(1,128)}', space=vmem, size = 0x12000, scoped, tag = 'internal scratch']
  #allocation2 [shape = 'f32[1,896]{1,0:T(1,128)}', space=vmem, size = 0xe00, scoped, tag = 'scratch operand']
  #allocation3 [shape = 'f32[16,768]{1,0:T(8,128)}', space=vmem, size = 0xc000, scoped, tag = 'scratch operand']
  %s0 = inlined_call_operand.vmem [shape: f32[2,1,16,16], index: 0, kind: input, shape index: {}]
  %s1 = inlined_call_operand.vmem [shape: f32[16,9], index: 1, kind: input, shape index: {}]
  %s2 = inlined_call_operand.vmem [shape: f32[16,1], index: 2, kind: input, shape index: {}]
  %s3 = inlined_call_operand.vmem [shape: f32[9,32,16], index: 3, kind: input, shape index: {}]
  %s4 = inlined_call_operand.vmem [shape: f32[32,1], index: 4, kind: input, shape index: {}]
  %s5 = inlined_call_operand.vmem [shape: f32[2,32,640], index: 5, kind: output, shape index: {}]
  %s6 = sld [smem:[#allocation0]]
  $region53: #{model_forward.1} parent=0
    _
  %s8 = ssub.s32 1, %s6
  %s9 = scalar_select 0, %s8, %s6
  loop: start=0, step=1, limit=4
  $region2: #{model_forward.1} parent=0 // loop_pre_header
    _
  $region3: #{model_forward.1} parent=0 // loop_header
    %s11 = sphi 0, %s15
    %p12 = scmp.ge.s32.totalorder %s11, 4
    %s21 = sphi 0, %s23
    %s24 = sphi 0, %s21
    %s25 = sphi 0, %s24
    %s41 = sphi 0, %s25
    %s45 = sphi 0, %s45
    %s47 = sphi 0, %s45
    %s48 = sphi 0, %s47
    %s62 = sphi 0, %s48
    %s66 = sphi 0, %s66
    %s68 = sphi 0, %s66
    %s69 = sphi 0, %s68
    %s83 = sphi 0, %s69
    %s87 = sphi 0, %s87
    %s89 = sphi 0, %s87
    %s90 = sphi 0, %s89
    %s104 = sphi 0, %s90
    %s108 = sphi 0, %s108
    %s110 = sphi 0, %s108
    %s111 = sphi 0, %s110
    %s125 = sphi 0, %s111
    %s131 = sphi 0, %s133
    %s134 = sphi 0, %s131
    %s135 = sphi 0, %s134
    %s151 = sphi 0, %s135
  $region4: #{model_forward.1} parent=0 // loop_header_branch
    %14 = sbr.rel (%p12) target = $region8
  $region5: #{model_forward.1} parent=0 // loop_body
    %s16 = ssub.s32 %s11, 1
    %s17 = ssub.s32 %s11, 2
    %s18 = sadd.s32 %s11, 1
    %s19 = ssub.s32 %s11, %s18
    %p20 = scmp.eq.s32.totalorder %s19, 0
    %s22 = sadd.s32 %s21, 1
    %s23 = scalar_select %p20, %s21, %s22
    %p26 = pneg %p20
    %p27 = scmp.eq.s32.totalorder %s11, 1
    %p28 = por %p26, %p27
    %p29 = scmp.ne.s32.totalorder %s21, %s24
    %p30 = scmp.eq.s32.totalorder %s11, 0
    %p31 = por %p29, %p30
    %p32 = scmp.ne.s32.totalorder %s21, %s24
    %p33 = scmp.eq.s32.totalorder %s16, 1
    %p34 = por %p32, %p33
    %p35 = scmp.ne.s32.totalorder %s24, %s25
    %p36 = scmp.eq.s32.totalorder %s16, 0
    %p37 = por %p35, %p36
    %p38 = scmp.ne.s32.totalorder %s24, %s25
    %p39 = scmp.eq.s32.totalorder %s17, 1
    %p40 = por %p38, %p39
    %p42 = scmp.ne.s32.totalorder %s25, %s41
    %p43 = scmp.eq.s32.totalorder %s17, 0
    %p44 = por %p42, %p43
    %s46 = sadd.s32 %s45, 1
    %p49 = scmp.eq.s32.totalorder %s11, 1
    %p50 = scmp.ne.s32.totalorder %s45, %s47
    %p51 = scmp.eq.s32.totalorder %s11, 0
    %p52 = por %p50, %p51
    %p53 = scmp.ne.s32.totalorder %s45, %s47
    %p54 = scmp.eq.s32.totalorder %s16, 1
    %p55 = por %p53, %p54
    %p56 = scmp.ne.s32.totalorder %s47, %s48
    %p57 = scmp.eq.s32.totalorder %s16, 0
    %p58 = por %p56, %p57
    %p59 = scmp.ne.s32.totalorder %s47, %s48
    %p60 = scmp.eq.s32.totalorder %s17, 1
    %p61 = por %p59, %p60
    %p63 = scmp.ne.s32.totalorder %s48, %s62
    %p64 = scmp.eq.s32.totalorder %s17, 0
    %p65 = por %p63, %p64
    %s67 = sadd.s32 %s66, 1
    %p70 = scmp.eq.s32.totalorder %s11, 1
    %p71 = scmp.ne.s32.totalorder %s66, %s68
    %p72 = scmp.eq.s32.totalorder %s11, 0
    %p73 = por %p71, %p72
    %p74 = scmp.ne.s32.totalorder %s66, %s68
    %p75 = scmp.eq.s32.totalorder %s16, 1
    %p76 = por %p74, %p75
    %p77 = scmp.ne.s32.totalorder %s68, %s69
    %p78 = scmp.eq.s32.totalorder %s16, 0
    %p79 = por %p77, %p78
    %p80 = scmp.ne.s32.totalorder %s68, %s69
    %p81 = scmp.eq.s32.totalorder %s17, 1
    %p82 = por %p80, %p81
    %p84 = scmp.ne.s32.totalorder %s69, %s83
    %p85 = scmp.eq.s32.totalorder %s17, 0
    %p86 = por %p84, %p85
    %s88 = sadd.s32 %s87, 1
    %p91 = scmp.eq.s32.totalorder %s11, 1
    %p92 = scmp.ne.s32.totalorder %s87, %s89
    %p93 = scmp.eq.s32.totalorder %s11, 0
    %p94 = por %p92, %p93
    %p95 = scmp.ne.s32.totalorder %s87, %s89
    %p96 = scmp.eq.s32.totalorder %s16, 1
    %p97 = por %p95, %p96
    %p98 = scmp.ne.s32.totalorder %s89, %s90
    %p99 = scmp.eq.s32.totalorder %s16, 0
    %p100 = por %p98, %p99
    %p101 = scmp.ne.s32.totalorder %s89, %s90
    %p102 = scmp.eq.s32.totalorder %s17, 1
    %p103 = por %p101, %p102
    %p105 = scmp.ne.s32.totalorder %s90, %s104
    %p106 = scmp.eq.s32.totalorder %s17, 0
    %p107 = por %p105, %p106
    %s109 = sadd.s32 %s108, 1
    %p112 = scmp.eq.s32.totalorder %s11, 1
    %p113 = scmp.ne.s32.totalorder %s108, %s110
    %p114 = scmp.eq.s32.totalorder %s11, 0
    %p115 = por %p113, %p114
    %p116 = scmp.ne.s32.totalorder %s108, %s110
    %p117 = scmp.eq.s32.totalorder %s16, 1
    %p118 = por %p116, %p117
    %p119 = scmp.ne.s32.totalorder %s110, %s111
    %p120 = scmp.eq.s32.totalorder %s16, 0
    %p121 = por %p119, %p120
    %p122 = scmp.ne.s32.totalorder %s110, %s111
    %p123 = scmp.eq.s32.totalorder %s17, 1
    %p124 = por %p122, %p123
    %p126 = scmp.ne.s32.totalorder %s111, %s125
    %p127 = scmp.eq.s32.totalorder %s17, 0
    %p128 = por %p126, %p127
    %s129 = ssub.s32 %s11, %s18
    %p130 = scmp.eq.s32.totalorder %s129, 0
    %s132 = sadd.s32 %s131, 1
    %s133 = scalar_select %p130, %s131, %s132
    %p136 = pneg %p130
    %p137 = scmp.eq.s32.totalorder %s11, 1
    %p138 = por %p136, %p137
    %p139 = scmp.ne.s32.totalorder %s131, %s134
    %p140 = scmp.eq.s32.totalorder %s11, 0
    %p141 = por %p139, %p140
    %p142 = scmp.ne.s32.totalorder %s131, %s134
    %p143 = scmp.eq.s32.totalorder %s16, 1
    %p144 = por %p142, %p143
    %p145 = scmp.ne.s32.totalorder %s134, %s135
    %p146 = scmp.eq.s32.totalorder %s16, 0
    %p147 = por %p145, %p146
    %p148 = scmp.ne.s32.totalorder %s134, %s135
    %p149 = scmp.eq.s32.totalorder %s17, 1
    %p150 = por %p148, %p149
    %p152 = scmp.ne.s32.totalorder %s135, %s151
    %p153 = scmp.eq.s32.totalorder %s17, 0
    %p154 = por %p152, %p153
    %p155 = scmp.le.s32.totalorder 1, %s11
    %p156 = scmp.lt.s32.totalorder %s11, 3
    %p157 = pnand %p155, %p156
    %p158 = pneg %p157
    // Predicated region
    $region9: #{model_forward.1} parent=5 // pred_check
      _
    $region10: #{model_forward.1} parent=5 // pred_check_branch
      %160 = sbr.rel (%p157) target = $region12
    $region11: #{model_forward.1} parent=5 // pred_region
      %s161 = ssub.s32 %s11, 1
      // Predicated region
      $region13: #{model_forward.1} parent=11 // pred_check
        %p162 = pneg %p58
      $region14: #{model_forward.1} parent=11 // pred_check_branch
        %164 = sbr.rel (%p162) target = $region16
      $region15: #{model_forward.1} parent=11 // pred_region
        _
      $region16: #{model_forward.1} parent=11 // pred_fallthru
        _
      // Predicated region
      $region17: #{model_forward.1} parent=11 // pred_check
        %p165 = pneg %p79
      $region18: #{model_forward.1} parent=11 // pred_check_branch
        %167 = sbr.rel (%p165) target = $region20
      $region19: #{model_forward.1} parent=11 // pred_region
        _
      $region20: #{model_forward.1} parent=11 // pred_fallthru
        _
      // Predicated region
      $region21: #{model_forward.1} parent=11 // pred_check
        %p168 = pneg %p100
      $region22: #{model_forward.1} parent=11 // pred_check_branch
        %170 = sbr.rel (%p168) target = $region24
      $region23: #{model_forward.1} parent=11 // pred_region
        _
      $region24: #{model_forward.1} parent=11 // pred_fallthru
        _
      // Predicated region
      $region25: #{model_forward.1} parent=11 // pred_check
        %p171 = pneg %p121
      $region26: #{model_forward.1} parent=11 // pred_check_branch
        %173 = sbr.rel (%p171) target = $region28
      $region27: #{model_forward.1} parent=11 // pred_region
        _
      $region28: #{model_forward.1} parent=11 // pred_fallthru
        _
    $region12: #{model_forward.1} parent=5 // pred_fallthru
      _
    %p174 = scmp.lt.s32.totalorder %s11, 2
    // Predicated region
    $region29: #{model_forward.1} parent=5 // pred_check
      %p175 = pneg %p174
    $region30: #{model_forward.1} parent=5 // pred_check_branch
      %177 = sbr.rel (%p175) target = $region32
    $region31: #{model_forward.1} parent=5 // pred_region
      // Predicated region
      $region33: #{model_forward.1} parent=31 // pred_check
        %p178 = pneg %p31
      $region34: #{model_forward.1} parent=31 // pred_check_branch
        %180 = sbr.rel (%p178) target = $region36
      $region35: #{model_forward.1} parent=31 // pred_region
        %p181 = scmp.lt.s32.totalorder %s11, 1
        %s182 = scalar_select %p181, %s11, 1
        %s183 = smul.addr %s182, 2
        %s184 = smul.addr %s183, 8
        %s185 = scalar_lea.vmem %s0, %s184
      $region36: #{model_forward.1} parent=31 // pred_fallthru
        _
    $region32: #{model_forward.1} parent=5 // pred_fallthru
      _
    %p186 = scmp.le.s32.totalorder 1, %s11
    %p187 = scmp.lt.s32.totalorder %s11, 3
    %p188 = pnand %p186, %p187
    %p189 = pneg %p188
    // Predicated region
    $region37: #{model_forward.1} parent=5 // pred_check
      _
    $region38: #{model_forward.1} parent=5 // pred_check_branch
      %191 = sbr.rel (%p188) target = $region40
    $region39: #{model_forward.1} parent=5 // pred_region
      %s192 = ssub.s32 %s11, 1
      %p193 = scmp.lt.s32.totalorder %s16, 1
      %s194 = scalar_select %p193, %s16, 1
      %s195 = smul.addr %s194, 2
      %s196 = smul.addr %s195, 8
      %s197 = scalar_lea.vmem %s0, %s196
      %p198 = pneg %p37
      %p199 = pneg %p34
      %p200 = pneg %p58
      %p201 = pneg %p55
      %p202 = pneg %p79
      %p203 = pneg %p76
      %p204 = pneg %p100
      %p205 = pneg %p97
      %p206 = pneg %p121
      %p207 = pneg %p118
      %p208 = pneg %p147
      %p209 = pneg %p144
      %p210 = scmp.lt.s32.totalorder %s16, 1
      %s211 = scalar_select %p210, %s16, 1
      %s212 = smul.addr %s211, 20
      %s213 = smul.addr %s212, 8
      %s214 = scalar_lea.vmem %s5, %s213
      %p215 = scmp.lt.s32.totalorder %s16, 1
      %s216 = scalar_select %p215, %s16, 1
      %s217 = smul.addr %s216, 2
      %s218 = smul.addr %s217, 8
      %s219 = scalar_lea.vmem %s0, %s218
      %p220 = scmp.lt.s32.totalorder %s16, 1
      %s221 = scalar_select %p220, %s16, 1
      %s222 = smul.addr %s221, 20
      %s223 = smul.addr %s222, 8
      %s224 = scalar_lea.vmem %s5, %s223
      %v225 = vlaneseq
      %vm226 = vcmp.ge.s32.totalorder %v225, 0
      %vm227 = vcmp.lt.s32.totalorder %v225, 896
      %vm228 = vmand %vm226, %vm227
      %229 = vst.msk [vmem:[#allocation2] sm:$0x7f] %vm228, 0.0
      %v230 = vld [vmem:[%s1] sm:$0xff]
      %v231 = vld [vmem:[%s1 + $0x8] sm:$0xff]
      %v232 = vld [vmem:[%s2] sm:$0xff]
      %v233 = vld [vmem:[%s2 + $0x8] sm:$0xff]
      %v234 = vld [vmem:[%s4] sm:$0xff]
      %v235 = vld [vmem:[%s4 + $0x8] sm:$0xff]
      %v236 = vld [vmem:[%s4 + $0x10] sm:$0xff]
      %v237 = vld [vmem:[%s4 + $0x18] sm:$0xff]
      %v238 = vld [vmem:[%s219] sm:$0xff]
      %v239 = vld [vmem:[%s219 + $0x8] sm:$0xff]
      %v242 = vunpack.c.l.s4 1966171168
      %v243 = vunpack.c.0.s8 %v242
      %v244 = vlaneseq
      %v245 = vshrl.u32 %v244, 7
      %v246 = vsub.s32 %v243, %v245
      %v247 = vrot.slane %v238, %v246
      %v249 = vunpack.c.l.s4 1966171168
      %v250 = vunpack.c.0.s8 %v249
      %v251 = vlaneseq
      %v252 = vshrl.u32 %v251, 7
      %v253 = vsub.s32 %v250, %v252
      %v254 = vrot.slane %v247, %v253
      %255 = vrot.lane.b32.xlu0 %v254, 7
      %v256 = vpop.permute.xlu0 %255
      %vm258 = vcmp.ge.s32.totalorder %v225, 7
      %vm259 = vcmp.lt.s32.totalorder %v225, 23
      %vm260 = vmand %vm258, %vm259
      %261 = vst.msk [vmem:[#allocation2 + $0x1] sm:$0x1] %vm260, %v256
      %v262 = vcombine.high %v247, %v247
      %v264 = vunpack.c.l.s4 1966171168
      %v265 = vunpack.c.0.s8 %v264
      %v266 = vlaneseq
      %v267 = vshrl.u32 %v266, 7
      %v268 = vsub.s32 %v265, %v267
      %v269 = vrot.slane %v262, %v268
      %270 = vrot.lane.b32.xlu0 %v269, 33
      %v271 = vpop.permute.xlu0 %270
      %vm273 = vcmp.ge.s32.totalorder %v225, 33
      %vm274 = vcmp.lt.s32.totalorder %v225, 49
      %vm275 = vmand %vm273, %vm274
      %276 = vst.msk [vmem:[#allocation2 + $0x1] sm:$0x1] %vm275, %v271
      %v277 = vcombine.high %v254, %v254
      %278 = vrot.lane.b32.xlu0 %v277, 59
      %v279 = vpop.permute.xlu0 %278
      %vm281 = vcmp.ge.s32.totalorder %v225, 59
      %vm282 = vcmp.lt.s32.totalorder %v225, 75
      %vm283 = vmand %vm281, %vm282
      %284 = vst.msk [vmem:[#allocation2 + $0x1] sm:$0x1] %vm283, %v279
      %v285 = vcombine.high %v269, %v269
      %286 = vrot.lane.b32.xlu0 %v285, 85
      %v287 = vpop.permute.xlu0 %286
      %vm289 = vcmp.ge.s32.totalorder %v225, 85
      %vm290 = vcmp.lt.s32.totalorder %v225, 101
      %vm291 = vmand %vm289, %vm290
      %292 = vst.msk [vmem:[#allocation2 + $0x1] sm:$0x1] %vm291, %v287
      %v293 = vcombine.high %v238, %v238
      %v295 = vunpack.c.l.s4 1966171168
      %v296 = vunpack.c.0.s8 %v295
      %v297 = vlaneseq
      %v298 = vshrl.u32 %v297, 7
      %v299 = vsub.s32 %v296, %v298
      %v300 = vrot.slane %v293, %v299
      %v302 = vunpack.c.l.s4 1966171168
      %v303 = vunpack.c.0.s8 %v302
      %v304 = vlaneseq
      %v305 = vshrl.u32 %v304, 7
      %v306 = vsub.s32 %v303, %v305
      %v307 = vrot.slane %v300, %v306
      %308 = vrot.lane.b32.xlu0 %v307, 111
      %v309 = vpop.permute.xlu0 %308
      %vm311 = vcmp.ge.s32.totalorder %v225, 111
      %vm312 = vcmp.lt.s32.totalorder %v225, 127
      %vm313 = vmand %vm311, %vm312
      %314 = vst.msk [vmem:[#allocation2 + $0x1] sm:$0x1] %vm313, %v309
      %v315 = vcombine.high %v300, %v300
      %v317 = vunpack.c.l.s4 1966171168
      %v318 = vunpack.c.0.s8 %v317
      %v319 = vlaneseq
      %v320 = vshrl.u32 %v319, 7
      %v321 = vsub.s32 %v318, %v320
      %v322 = vrot.slane %v315, %v321
      %323 = vrot.lane.b32.xlu0 %v322, 9
      %v324 = vpop.permute.xlu0 %323
      %vm326 = vcmp.ge.s32.totalorder %v225, 9
      %vm327 = vcmp.lt.s32.totalorder %v225, 25
      %vm328 = vmand %vm326, %vm327
      %329 = vst.msk [vmem:[#allocation2 + $0x2] sm:$0x1] %vm328, %v324
      %v330 = vcombine.high %v307, %v307
      %331 = vrot.lane.b32.xlu0 %v330, 35
      %v332 = vpop.permute.xlu0 %331
      %vm334 = vcmp.ge.s32.totalorder %v225, 35
      %vm335 = vcmp.lt.s32.totalorder %v225, 51
      %vm336 = vmand %vm334, %vm335
      %337 = vst.msk [vmem:[#allocation2 + $0x2] sm:$0x1] %vm336, %v332
      %v338 = vcombine.high %v322, %v322
      %339 = vrot.lane.b32.xlu0 %v338, 61
      %v340 = vpop.permute.xlu0 %339
      %vm342 = vcmp.ge.s32.totalorder %v225, 61
      %vm343 = vcmp.lt.s32.totalorder %v225, 77
      %vm344 = vmand %vm342, %vm343
      %345 = vst.msk [vmem:[#allocation2 + $0x2] sm:$0x1] %vm344, %v340
      %v348 = vunpack.c.l.s4 1966171168
      %v349 = vunpack.c.0.s8 %v348
      %v350 = vlaneseq
      %v351 = vshrl.u32 %v350, 7
      %v352 = vsub.s32 %v349, %v351
      %v353 = vrot.slane %v239, %v352
      %v355 = vunpack.c.l.s4 1966171168
      %v356 = vunpack.c.0.s8 %v355
      %v357 = vlaneseq
      %v358 = vshrl.u32 %v357, 7
      %v359 = vsub.s32 %v356, %v358
      %v360 = vrot.slane %v353, %v359
      %361 = vrot.lane.b32.xlu0 %v360, 87
      %v362 = vpop.permute.xlu0 %361
      %vm364 = vcmp.ge.s32.totalorder %v225, 87
      %vm365 = vcmp.lt.s32.totalorder %v225, 103
      %vm366 = vmand %vm364, %vm365
      %367 = vst.msk [vmem:[#allocation2 + $0x2] sm:$0x1] %vm366, %v362
      %v368 = vcombine.high %v353, %v353
      %v370 = vunpack.c.l.s4 1966171168
      %v371 = vunpack.c.0.s8 %v370
      %v372 = vlaneseq
      %v373 = vshrl.u32 %v372, 7
      %v374 = vsub.s32 %v371, %v373
      %v375 = vrot.slane %v368, %v374
      %376 = vrot.lane.b32.xlu0 %v375, 113
      %v377 = vpop.permute.xlu0 %376
      %v378 = vrot.slane %v377, 7
      %vm379 = vcmask 924672
      %v380 = vsel %vm379, %v378, %v377
      %vm382 = vcmp.ge.s32.totalorder %v225, 113
      %vm383 = vcmp.lt.s32.totalorder %v225, 129
      %vm384 = vmand %vm382, %vm383
      %385 = vst.msk [vmem:[#allocation2 + $0x2] sm:$0x3] %vm384, %v380
      %v386 = vcombine.high %v360, %v360
      %387 = vrot.lane.b32.xlu0 %v386, 11
      %v388 = vpop.permute.xlu0 %387
      %vm390 = vcmp.ge.s32.totalorder %v225, 11
      %vm391 = vcmp.lt.s32.totalorder %v225, 27
      %vm392 = vmand %vm390, %vm391
      %393 = vst.msk [vmem:[#allocation2 + $0x3] sm:$0x1] %vm392, %v388
      %v394 = vcombine.high %v375, %v375
      %395 = vrot.lane.b32.xlu0 %v394, 37
      %v396 = vpop.permute.xlu0 %395
      %vm398 = vcmp.ge.s32.totalorder %v225, 37
      %vm399 = vcmp.lt.s32.totalorder %v225, 53
      %vm400 = vmand %vm398, %vm399
      %401 = vst.msk [vmem:[#allocation2 + $0x3] sm:$0x1] %vm400, %v396
      %v402 = vcombine.high %v239, %v239
      %v404 = vunpack.c.l.s4 1966171168
      %v405 = vunpack.c.0.s8 %v404
      %v406 = vlaneseq
      %v407 = vshrl.u32 %v406, 7
      %v408 = vsub.s32 %v405, %v407
      %v409 = vrot.slane %v402, %v408
      %v411 = vunpack.c.l.s4 1966171168
      %v412 = vunpack.c.0.s8 %v411
      %v413 = vlaneseq
      %v414 = vshrl.u32 %v413, 7
      %v415 = vsub.s32 %v412, %v414
      %v416 = vrot.slane %v409, %v415
      %417 = vrot.lane.b32.xlu0 %v416, 63
      %v418 = vpop.permute.xlu0 %417
      %vm420 = vcmp.ge.s32.totalorder %v225, 63
      %vm421 = vcmp.lt.s32.totalorder %v225, 79
      %vm422 = vmand %vm420, %vm421
      %423 = vst.msk [vmem:[#allocation2 + $0x3] sm:$0x1] %vm422, %v418
      %v424 = vcombine.high %v409, %v409
      %v426 = vunpack.c.l.s4 1966171168
      %v427 = vunpack.c.0.s8 %v426
      %v428 = vlaneseq
      %v429 = vshrl.u32 %v428, 7
      %v430 = vsub.s32 %v427, %v429
      %v431 = vrot.slane %v424, %v430
      %432 = vrot.lane.b32.xlu0 %v431, 89
      %v433 = vpop.permute.xlu0 %432
      %vm435 = vcmp.ge.s32.totalorder %v225, 89
      %vm436 = vcmp.lt.s32.totalorder %v225, 105
      %vm437 = vmand %vm435, %vm436
      %438 = vst.msk [vmem:[#allocation2 + $0x3] sm:$0x1] %vm437, %v433
      %v439 = vcombine.high %v416, %v416
      %440 = vrot.lane.b32.xlu0 %v439, 115
      %v441 = vpop.permute.xlu0 %440
      %v442 = vrot.slane %v441, 7
      %vm443 = vcmask 941056
      %v444 = vsel %vm443, %v442, %v441
      %vm446 = vcmp.ge.s32.totalorder %v225, 115
      %vm447 = vcmp.lt.s32.totalorder %v225, 131
      %vm448 = vmand %vm446, %vm447
      %449 = vst.msk [vmem:[#allocation2 + $0x3] sm:$0x3] %vm448, %v444
      %v450 = vcombine.high %v431, %v431
      %451 = vrot.lane.b32.xlu0 %v450, 13
      %v452 = vpop.permute.xlu0 %451
      %vm454 = vcmp.ge.s32.totalorder %v225, 13
      %vm455 = vcmp.lt.s32.totalorder %v225, 29
      %vm456 = vmand %vm454, %vm455
      %457 = vst.msk [vmem:[#allocation2 + $0x4] sm:$0x1] %vm456, %v452
      %v458 = vld [vmem:[#allocation2] sm:$0x3f]
      %460 = vset.pattern.permute.xlu0 0
      %461 = vperm.xlu0 %460, %v230
      %v462 = vpop.permute.xlu0 %461
      %465 = vset.pattern.permute.xlu0 0
      %466 = vperm.xlu0 %465, %v231
      %v467 = vpop.permute.xlu0 %466
      %v470 = vlaneseq
      %v471 = vshrl.u32 %v470, 7
      %v472 = vsub.s32 0, %v471
      %v473 = vrot.slane %v458, %v472
      %v474 = vlaneseq
      %v475 = vshrl.u32 %v474, 7
      %v476 = vsub.s32 1, %v475
      %v477 = vrot.slane %v458, %v476
      %v478 = vlaneseq
      %v479 = vshrl.u32 %v478, 7
      %v480 = vsub.s32 2, %v479
      %v481 = vrot.slane %v458, %v480
      %v482 = vlaneseq
      %v483 = vshrl.u32 %v482, 7
      %v484 = vsub.s32 3, %v483
      %v485 = vrot.slane %v458, %v484
      %v486 = vlaneseq
      %v487 = vshrl.u32 %v486, 7
      %v488 = vsub.s32 4, %v487
      %v489 = vrot.slane %v458, %v488
      %v490 = vlaneseq
      %v491 = vshrl.u32 %v490, 7
      %v492 = vsub.s32 5, %v491
      %v493 = vrot.slane %v458, %v492
      %v500 = vmul.f32 %v462, %v473
      %v501 = vmul.f32 %v462, %v477
      %v502 = vmul.f32 %v462, %v481
      %v503 = vmul.f32 %v462, %v485
      %v504 = vmul.f32 %v462, %v489
      %v505 = vmul.f32 %v462, %v493
      %v506 = vmul.f32 %v467, %v473
      %v507 = vmul.f32 %v467, %v477
      %v508 = vmul.f32 %v467, %v481
      %v509 = vmul.f32 %v467, %v485
      %v510 = vmul.f32 %v467, %v489
      %v511 = vmul.f32 %v467, %v493
      %513 = vset.pattern.permute.xlu0 0
      %514 = vperm.xlu0 %513, %v232
      %v515 = vpop.permute.xlu0 %514
      %518 = vset.pattern.permute.xlu0 0
      %519 = vperm.xlu0 %518, %v233
      %v520 = vpop.permute.xlu0 %519
      %v522 = vadd.f32 %v515, %v500
      %v523 = vadd.f32 %v515, %v501
      %v524 = vadd.f32 %v515, %v502
      %v525 = vadd.f32 %v515, %v503
      %v526 = vadd.f32 %v515, %v504
      %v527 = vadd.f32 %v515, %v505
      %v528 = vadd.f32 %v520, %v506
      %v529 = vadd.f32 %v520, %v507
      %v530 = vadd.f32 %v520, %v508
      %v531 = vadd.f32 %v520, %v509
      %v532 = vadd.f32 %v520, %v510
      %v533 = vadd.f32 %v520, %v511
      %v534 = vld [vmem:[#allocation2] sm:$0x7f]
      %535 = vset.pattern.permute.xlu0 1
      %536 = vperm.xlu0 %535, %v230
      %v537 = vpop.permute.xlu0 %536
      %539 = vset.pattern.permute.xlu0 1
      %540 = vperm.xlu0 %539, %v231
      %v541 = vpop.permute.xlu0 %540
      %v544 = vlaneseq
      %v545 = vshrl.u32 %v544, 7
      %v546 = vsub.s32 0, %v545
      %v547 = vrot.slane %v534, %v546
      %v548 = vlaneseq
      %v549 = vshrl.u32 %v548, 7
      %v550 = vsub.s32 1, %v549
      %v551 = vrot.slane %v534, %v550
      %v552 = vlaneseq
      %v553 = vshrl.u32 %v552, 7
      %v554 = vsub.s32 2, %v553
      %v555 = vrot.slane %v534, %v554
      %v556 = vlaneseq
      %v557 = vshrl.u32 %v556, 7
      %v558 = vsub.s32 3, %v557
      %v559 = vrot.slane %v534, %v558
      %v560 = vlaneseq
      %v561 = vshrl.u32 %v560, 7
      %v562 = vsub.s32 4, %v561
      %v563 = vrot.slane %v534, %v562
      %v564 = vlaneseq
      %v565 = vshrl.u32 %v564, 7
      %v566 = vsub.s32 5, %v565
      %v567 = vrot.slane %v534, %v566
      %v568 = vlaneseq
      %v569 = vshrl.u32 %v568, 7
      %v570 = vsub.s32 6, %v569
      %v571 = vrot.slane %v534, %v570
      %v579 = vmul.f32 %v537, %v547
      %v580 = vmul.f32 %v537, %v551
      %v581 = vmul.f32 %v537, %v555
      %v582 = vmul.f32 %v537, %v559
      %v583 = vmul.f32 %v537, %v563
      %v584 = vmul.f32 %v537, %v567
      %v585 = vmul.f32 %v537, %v571
      %v586 = vmul.f32 %v541, %v547
      %v587 = vmul.f32 %v541, %v551
      %v588 = vmul.f32 %v541, %v555
      %v589 = vmul.f32 %v541, %v559
      %v590 = vmul.f32 %v541, %v563
      %v591 = vmul.f32 %v541, %v567
      %v592 = vmul.f32 %v541, %v571
      %607 = vrot.lane.b32.xlu0 %v579, 127
      %v608 = vpop.permute.xlu0 %607
      %609 = vrot.lane.b32.xlu0 %v580, 127
      %v610 = vpop.permute.xlu0 %609
      %611 = vrot.lane.b32.xlu0 %v581, 127
      %v612 = vpop.permute.xlu0 %611
      %613 = vrot.lane.b32.xlu0 %v582, 127
      %v614 = vpop.permute.xlu0 %613
      %615 = vrot.lane.b32.xlu0 %v583, 127
      %v616 = vpop.permute.xlu0 %615
      %617 = vrot.lane.b32.xlu0 %v584, 127
      %v618 = vpop.permute.xlu0 %617
      %619 = vrot.lane.b32.xlu0 %v585, 127
      %v620 = vpop.permute.xlu0 %619
      %621 = vrot.lane.b32.xlu0 %v586, 127
      %v622 = vpop.permute.xlu0 %621
      %623 = vrot.lane.b32.xlu0 %v587, 127
      %v624 = vpop.permute.xlu0 %623
      %625 = vrot.lane.b32.xlu0 %v588, 127
      %v626 = vpop.permute.xlu0 %625
      %627 = vrot.lane.b32.xlu0 %v589, 127
      %v628 = vpop.permute.xlu0 %627
      %629 = vrot.lane.b32.xlu0 %v590, 127
      %v630 = vpop.permute.xlu0 %629
      %631 = vrot.lane.b32.xlu0 %v591, 127
      %v632 = vpop.permute.xlu0 %631
      %633 = vrot.lane.b32.xlu0 %v592, 127
      %v634 = vpop.permute.xlu0 %633
      %vm635 = vcmask 1039360
      %v636 = vsel %vm635, %v608, %v610
      %v637 = vsel %vm635, %v610, %v612
      %v638 = vsel %vm635, %v612, %v614
      %v639 = vsel %vm635, %v614, %v616
      %v640 = vsel %vm635, %v616, %v618
      %v641 = vsel %vm635, %v618, %v620
      %v642 = vsel %vm635, %v622, %v624
      %v643 = vsel %vm635, %v624, %v626
      %v644 = vsel %vm635, %v626, %v628
      %v645 = vsel %vm635, %v628, %v630
      %v646 = vsel %vm635, %v630, %v632
      %v647 = vsel %vm635, %v632, %v634
      %v660 = vadd.f32 %v522, %v636
      %v661 = vadd.f32 %v523, %v637
      %v662 = vadd.f32 %v524, %v638
      %v663 = vadd.f32 %v525, %v639
      %v664 = vadd.f32 %v526, %v640
      %v665 = vadd.f32 %v527, %v641
      %v666 = vadd.f32 %v528, %v642
      %v667 = vadd.f32 %v529, %v643
      %v668 = vadd.f32 %v530, %v644
      %v669 = vadd.f32 %v531, %v645
      %v670 = vadd.f32 %v532, %v646
      %v671 = vadd.f32 %v533, %v647
      %672 = vset.pattern.permute.xlu0 2
      %673 = vperm.xlu0 %672, %v230
      %v674 = vpop.permute.xlu0 %673
      %676 = vset.pattern.permute.xlu0 2
      %677 = vperm.xlu0 %676, %v231
      %v678 = vpop.permute.xlu0 %677
      %v680 = vmul.f32 %v674, %v547
      %v681 = vmul.f32 %v674, %v551
      %v682 = vmul.f32 %v674, %v555
      %v683 = vmul.f32 %v674, %v559
      %v684 = vmul.f32 %v674, %v563
      %v685 = vmul.f32 %v674, %v567
      %v686 = vmul.f32 %v674, %v571
      %v687 = vmul.f32 %v678, %v547
      %v688 = vmul.f32 %v678, %v551
      %v689 = vmul.f32 %v678, %v555
      %v690 = vmul.f32 %v678, %v559
      %v691 = vmul.f32 %v678, %v563
      %v692 = vmul.f32 %v678, %v567
      %v693 = vmul.f32 %v678, %v571
      %708 = vrot.lane.b32.xlu0 %v680, 126
      %v709 = vpop.permute.xlu0 %708
      %710 = vrot.lane.b32.xlu0 %v681, 126
      %v711 = vpop.permute.xlu0 %710
      %712 = vrot.lane.b32.xlu0 %v682, 126
      %v713 = vpop.permute.xlu0 %712
      %714 = vrot.lane.b32.xlu0 %v683, 126
      %v715 = vpop.permute.xlu0 %714
      %716 = vrot.lane.b32.xlu0 %v684, 126
      %v717 = vpop.permute.xlu0 %716
      %718 = vrot.lane.b32.xlu0 %v685, 126
      %v719 = vpop.permute.xlu0 %718
      %720 = vrot.lane.b32.xlu0 %v686, 126
      %v721 = vpop.permute.xlu0 %720
      %722 = vrot.lane.b32.xlu0 %v687, 126
      %v723 = vpop.permute.xlu0 %722
      %724 = vrot.lane.b32.xlu0 %v688, 126
      %v725 = vpop.permute.xlu0 %724
      %726 = vrot.lane.b32.xlu0 %v689, 126
      %v727 = vpop.permute.xlu0 %726
      %728 = vrot.lane.b32.xlu0 %v690, 126
      %v729 = vpop.permute.xlu0 %728
      %730 = vrot.lane.b32.xlu0 %v691, 126
      %v731 = vpop.permute.xlu0 %730
      %732 = vrot.lane.b32.xlu0 %v692, 126
      %v733 = vpop.permute.xlu0 %732
      %734 = vrot.lane.b32.xlu0 %v693, 126
      %v735 = vpop.permute.xlu0 %734
      %vm736 = vcmask 1031168
      %v737 = vsel %vm736, %v709, %v711
      %v738 = vsel %vm736, %v711, %v713
      %v739 = vsel %vm736, %v713, %v715
      %v740 = vsel %vm736, %v715, %v717
      %v741 = vsel %vm736, %v717, %v719
      %v742 = vsel %vm736, %v719, %v721
      %v743 = vsel %vm736, %v723, %v725
      %v744 = vsel %vm736, %v725, %v727
      %v745 = vsel %vm736, %v727, %v729
      %v746 = vsel %vm736, %v729, %v731
      %v747 = vsel %vm736, %v731, %v733
      %v748 = vsel %vm736, %v733, %v735
      %v761 = vadd.f32 %v660, %v737
      %v762 = vadd.f32 %v661, %v738
      %v763 = vadd.f32 %v662, %v739
      %v764 = vadd.f32 %v663, %v740
      %v765 = vadd.f32 %v664, %v741
      %v766 = vadd.f32 %v665, %v742
      %v767 = vadd.f32 %v666, %v743
      %v768 = vadd.f32 %v667, %v744
      %v769 = vadd.f32 %v668, %v745
      %v770 = vadd.f32 %v669, %v746
      %v771 = vadd.f32 %v670, %v747
      %v772 = vadd.f32 %v671, %v748
      %773 = vset.pattern.permute.xlu0 3
      %774 = vperm.xlu0 %773, %v230
      %v775 = vpop.permute.xlu0 %774
      %777 = vset.pattern.permute.xlu0 3
      %778 = vperm.xlu0 %777, %v231
      %v779 = vpop.permute.xlu0 %778
      %v781 = vmul.f32 %v775, %v547
      %v782 = vmul.f32 %v775, %v551
      %v783 = vmul.f32 %v775, %v555
      %v784 = vmul.f32 %v775, %v559
      %v785 = vmul.f32 %v775, %v563
      %v786 = vmul.f32 %v775, %v567
      %v787 = vmul.f32 %v775, %v571
      %v788 = vmul.f32 %v779, %v547
      %v789 = vmul.f32 %v779, %v551
      %v790 = vmul.f32 %v779, %v555
      %v791 = vmul.f32 %v779, %v559
      %v792 = vmul.f32 %v779, %v563
      %v793 = vmul.f32 %v779, %v567
      %v794 = vmul.f32 %v779, %v571
      %809 = vrot.lane.b32.xlu0 %v781, 102
      %v810 = vpop.permute.xlu0 %809
      %811 = vrot.lane.b32.xlu0 %v782, 102
      %v812 = vpop.permute.xlu0 %811
      %813 = vrot.lane.b32.xlu0 %v783, 102
      %v814 = vpop.permute.xlu0 %813
      %815 = vrot.lane.b32.xlu0 %v784, 102
      %v816 = vpop.permute.xlu0 %815
      %817 = vrot.lane.b32.xlu0 %v785, 102
      %v818 = vpop.permute.xlu0 %817
      %819 = vrot.lane.b32.xlu0 %v786, 102
      %v820 = vpop.permute.xlu0 %819
      %821 = vrot.lane.b32.xlu0 %v787, 102
      %v822 = vpop.permute.xlu0 %821
      %823 = vrot.lane.b32.xlu0 %v788, 102
      %v824 = vpop.permute.xlu0 %823
      %825 = vrot.lane.b32.xlu0 %v789, 102
      %v826 = vpop.permute.xlu0 %825
      %827 = vrot.lane.b32.xlu0 %v790, 102
      %v828 = vpop.permute.xlu0 %827
      %829 = vrot.lane.b32.xlu0 %v791, 102
      %v830 = vpop.permute.xlu0 %829
      %831 = vrot.lane.b32.xlu0 %v792, 102
      %v832 = vpop.permute.xlu0 %831
      %833 = vrot.lane.b32.xlu0 %v793, 102
      %v834 = vpop.permute.xlu0 %833
      %835 = vrot.lane.b32.xlu0 %v794, 102
      %v836 = vpop.permute.xlu0 %835
      %vm837 = vcmask 834560
      %v838 = vsel %vm837, %v810, %v812
      %v839 = vsel %vm837, %v812, %v814
      %v840 = vsel %vm837, %v814, %v816
      %v841 = vsel %vm837, %v816, %v818
      %v842 = vsel %vm837, %v818, %v820
      %v843 = vsel %vm837, %v820, %v822
      %v844 = vsel %vm837, %v824, %v826
      %v845 = vsel %vm837, %v826, %v828
      %v846 = vsel %vm837, %v828, %v830
      %v847 = vsel %vm837, %v830, %v832
      %v848 = vsel %vm837, %v832, %v834
      %v849 = vsel %vm837, %v834, %v836
      %v862 = vadd.f32 %v761, %v838
      %v863 = vadd.f32 %v762, %v839
      %v864 = vadd.f32 %v763, %v840
      %v865 = vadd.f32 %v764, %v841
      %v866 = vadd.f32 %v765, %v842
      %v867 = vadd.f32 %v766, %v843
      %v868 = vadd.f32 %v767, %v844
      %v869 = vadd.f32 %v768, %v845
      %v870 = vadd.f32 %v769, %v846
      %v871 = vadd.f32 %v770, %v847
      %v872 = vadd.f32 %v771, %v848
      %v873 = vadd.f32 %v772, %v849
      %874 = vset.pattern.permute.xlu0 4
      %875 = vperm.xlu0 %874, %v230
      %v876 = vpop.permute.xlu0 %875
      %878 = vset.pattern.permute.xlu0 4
      %879 = vperm.xlu0 %878, %v231
      %v880 = vpop.permute.xlu0 %879
      %v882 = vmul.f32 %v876, %v547
      %v883 = vmul.f32 %v876, %v551
      %v884 = vmul.f32 %v876, %v555
      %v885 = vmul.f32 %v876, %v559
      %v886 = vmul.f32 %v876, %v563
      %v887 = vmul.f32 %v876, %v567
      %v888 = vmul.f32 %v876, %v571
      %v889 = vmul.f32 %v880, %v547
      %v890 = vmul.f32 %v880, %v551
      %v891 = vmul.f32 %v880, %v555
      %v892 = vmul.f32 %v880, %v559
      %v893 = vmul.f32 %v880, %v563
      %v894 = vmul.f32 %v880, %v567
      %v895 = vmul.f32 %v880, %v571
      %910 = vrot.lane.b32.xlu0 %v882, 101
      %v911 = vpop.permute.xlu0 %910
      %912 = vrot.lane.b32.xlu0 %v883, 101
      %v913 = vpop.permute.xlu0 %912
      %914 = vrot.lane.b32.xlu0 %v884, 101
      %v915 = vpop.permute.xlu0 %914
      %916 = vrot.lane.b32.xlu0 %v885, 101
      %v917 = vpop.permute.xlu0 %916
      %918 = vrot.lane.b32.xlu0 %v886, 101
      %v919 = vpop.permute.xlu0 %918
      %920 = vrot.lane.b32.xlu0 %v887, 101
      %v921 = vpop.permute.xlu0 %920
      %922 = vrot.lane.b32.xlu0 %v888, 101
      %v923 = vpop.permute.xlu0 %922
      %924 = vrot.lane.b32.xlu0 %v889, 101
      %v925 = vpop.permute.xlu0 %924
      %926 = vrot.lane.b32.xlu0 %v890, 101
      %v927 = vpop.permute.xlu0 %926
      %928 = vrot.lane.b32.xlu0 %v891, 101
      %v929 = vpop.permute.xlu0 %928
      %930 = vrot.lane.b32.xlu0 %v892, 101
      %v931 = vpop.permute.xlu0 %930
      %932 = vrot.lane.b32.xlu0 %v893, 101
      %v933 = vpop.permute.xlu0 %932
      %934 = vrot.lane.b32.xlu0 %v894, 101
      %v935 = vpop.permute.xlu0 %934
      %936 = vrot.lane.b32.xlu0 %v895, 101
      %v937 = vpop.permute.xlu0 %936
      %vm938 = vcmask 826368
      %v939 = vsel %vm938, %v911, %v913
      %v940 = vsel %vm938, %v913, %v915
      %v941 = vsel %vm938, %v915, %v917
      %v942 = vsel %vm938, %v917, %v919
      %v943 = vsel %vm938, %v919, %v921
      %v944 = vsel %vm938, %v921, %v923
      %v945 = vsel %vm938, %v925, %v927
      %v946 = vsel %vm938, %v927, %v929
      %v947 = vsel %vm938, %v929, %v931
      %v948 = vsel %vm938, %v931, %v933
      %v949 = vsel %vm938, %v933, %v935
      %v950 = vsel %vm938, %v935, %v937
      %v963 = vadd.f32 %v862, %v939
      %v964 = vadd.f32 %v863, %v940
      %v965 = vadd.f32 %v864, %v941
      %v966 = vadd.f32 %v865, %v942
      %v967 = vadd.f32 %v866, %v943
      %v968 = vadd.f32 %v867, %v944
      %v969 = vadd.f32 %v868, %v945
      %v970 = vadd.f32 %v869, %v946
      %v971 = vadd.f32 %v870, %v947
      %v972 = vadd.f32 %v871, %v948
      %v973 = vadd.f32 %v872, %v949
      %v974 = vadd.f32 %v873, %v950
      %975 = vset.pattern.permute.xlu0 5
      %976 = vperm.xlu0 %975, %v230
      %v977 = vpop.permute.xlu0 %976
      %979 = vset.pattern.permute.xlu0 5
      %980 = vperm.xlu0 %979, %v231
      %v981 = vpop.permute.xlu0 %980
      %v983 = vmul.f32 %v977, %v547
      %v984 = vmul.f32 %v977, %v551
      %v985 = vmul.f32 %v977, %v555
      %v986 = vmul.f32 %v977, %v559
      %v987 = vmul.f32 %v977, %v563
      %v988 = vmul.f32 %v977, %v567
      %v989 = vmul.f32 %v977, %v571
      %v990 = vmul.f32 %v981, %v547
      %v991 = vmul.f32 %v981, %v551
      %v992 = vmul.f32 %v981, %v555
      %v993 = vmul.f32 %v981, %v559
      %v994 = vmul.f32 %v981, %v563
      %v995 = vmul.f32 %v981, %v567
      %v996 = vmul.f32 %v981, %v571
      %1011 = vrot.lane.b32.xlu0 %v983, 100
      %v1012 = vpop.permute.xlu0 %1011
      %1013 = vrot.lane.b32.xlu0 %v984, 100
      %v1014 = vpop.permute.xlu0 %1013
      %1015 = vrot.lane.b32.xlu0 %v985, 100
      %v1016 = vpop.permute.xlu0 %1015
      %1017 = vrot.lane.b32.xlu0 %v986, 100
      %v1018 = vpop.permute.xlu0 %1017
      %1019 = vrot.lane.b32.xlu0 %v987, 100
      %v1020 = vpop.permute.xlu0 %1019
      %1021 = vrot.lane.b32.xlu0 %v988, 100
      %v1022 = vpop.permute.xlu0 %1021
      %1023 = vrot.lane.b32.xlu0 %v989, 100
      %v1024 = vpop.permute.xlu0 %1023
      %1025 = vrot.lane.b32.xlu0 %v990, 100
      %v1026 = vpop.permute.xlu0 %1025
      %1027 = vrot.lane.b32.xlu0 %v991, 100
      %v1028 = vpop.permute.xlu0 %1027
      %1029 = vrot.lane.b32.xlu0 %v992, 100
      %v1030 = vpop.permute.xlu0 %1029
      %1031 = vrot.lane.b32.xlu0 %v993, 100
      %v1032 = vpop.permute.xlu0 %1031
      %1033 = vrot.lane.b32.xlu0 %v994, 100
      %v1034 = vpop.permute.xlu0 %1033
      %1035 = vrot.lane.b32.xlu0 %v995, 100
      %v1036 = vpop.permute.xlu0 %1035
      %1037 = vrot.lane.b32.xlu0 %v996, 100
      %v1038 = vpop.permute.xlu0 %1037
      %vm1039 = vcmask 818176
      %v1040 = vsel %vm1039, %v1012, %v1014
      %v1041 = vsel %vm1039, %v1014, %v1016
      %v1042 = vsel %vm1039, %v1016, %v1018
      %v1043 = vsel %vm1039, %v1018, %v1020
      %v1044 = vsel %vm1039, %v1020, %v1022
      %v1045 = vsel %vm1039, %v1022, %v1024
      %v1046 = vsel %vm1039, %v1026, %v1028
      %v1047 = vsel %vm1039, %v1028, %v1030
      %v1048 = vsel %vm1039, %v1030, %v1032
      %v1049 = vsel %vm1039, %v1032, %v1034
      %v1050 = vsel %vm1039, %v1034, %v1036
      %v1051 = vsel %vm1039, %v1036, %v1038
      %v1064 = vadd.f32 %v963, %v1040
      %v1065 = vadd.f32 %v964, %v1041
      %v1066 = vadd.f32 %v965, %v1042
      %v1067 = vadd.f32 %v966, %v1043
      %v1068 = vadd.f32 %v967, %v1044
      %v1069 = vadd.f32 %v968, %v1045
      %v1070 = vadd.f32 %v969, %v1046
      %v1071 = vadd.f32 %v970, %v1047
      %v1072 = vadd.f32 %v971, %v1048
      %v1073 = vadd.f32 %v972, %v1049
      %v1074 = vadd.f32 %v973, %v1050
      %v1075 = vadd.f32 %v974, %v1051
      %1076 = vset.pattern.permute.xlu0 6
      %1077 = vperm.xlu0 %1076, %v230
      %v1078 = vpop.permute.xlu0 %1077
      %1080 = vset.pattern.permute.xlu0 6
      %1081 = vperm.xlu0 %1080, %v231
      %v1082 = vpop.permute.xlu0 %1081
      %v1084 = vmul.f32 %v1078, %v547
      %v1085 = vmul.f32 %v1078, %v551
      %v1086 = vmul.f32 %v1078, %v555
      %v1087 = vmul.f32 %v1078, %v559
      %v1088 = vmul.f32 %v1078, %v563
      %v1089 = vmul.f32 %v1078, %v567
      %v1090 = vmul.f32 %v1078, %v571
      %v1091 = vmul.f32 %v1082, %v547
      %v1092 = vmul.f32 %v1082, %v551
      %v1093 = vmul.f32 %v1082, %v555
      %v1094 = vmul.f32 %v1082, %v559
      %v1095 = vmul.f32 %v1082, %v563
      %v1096 = vmul.f32 %v1082, %v567
      %v1097 = vmul.f32 %v1082, %v571
      %1112 = vrot.lane.b32.xlu0 %v1084, 76
      %v1113 = vpop.permute.xlu0 %1112
      %1114 = vrot.lane.b32.xlu0 %v1085, 76
      %v1115 = vpop.permute.xlu0 %1114
      %1116 = vrot.lane.b32.xlu0 %v1086, 76
      %v1117 = vpop.permute.xlu0 %1116
      %1118 = vrot.lane.b32.xlu0 %v1087, 76
      %v1119 = vpop.permute.xlu0 %1118
      %1120 = vrot.lane.b32.xlu0 %v1088, 76
      %v1121 = vpop.permute.xlu0 %1120
      %1122 = vrot.lane.b32.xlu0 %v1089, 76
      %v1123 = vpop.permute.xlu0 %1122
      %1124 = vrot.lane.b32.xlu0 %v1090, 76
      %v1125 = vpop.permute.xlu0 %1124
      %1126 = vrot.lane.b32.xlu0 %v1091, 76
      %v1127 = vpop.permute.xlu0 %1126
      %1128 = vrot.lane.b32.xlu0 %v1092, 76
      %v1129 = vpop.permute.xlu0 %1128
      %1130 = vrot.lane.b32.xlu0 %v1093, 76
      %v1131 = vpop.permute.xlu0 %1130
      %1132 = vrot.lane.b32.xlu0 %v1094, 76
      %v1133 = vpop.permute.xlu0 %1132
      %1134 = vrot.lane.b32.xlu0 %v1095, 76
      %v1135 = vpop.permute.xlu0 %1134
      %1136 = vrot.lane.b32.xlu0 %v1096, 76
      %v1137 = vpop.permute.xlu0 %1136
      %1138 = vrot.lane.b32.xlu0 %v1097, 76
      %v1139 = vpop.permute.xlu0 %1138
      %vm1140 = vcmask 621568
      %v1141 = vsel %vm1140, %v1113, %v1115
      %v1142 = vsel %vm1140, %v1115, %v1117
      %v1143 = vsel %vm1140, %v1117, %v1119
      %v1144 = vsel %vm1140, %v1119, %v1121
      %v1145 = vsel %vm1140, %v1121, %v1123
      %v1146 = vsel %vm1140, %v1123, %v1125
      %v1147 = vsel %vm1140, %v1127, %v1129
      %v1148 = vsel %vm1140, %v1129, %v1131
      %v1149 = vsel %vm1140, %v1131, %v1133
      %v1150 = vsel %vm1140, %v1133, %v1135
      %v1151 = vsel %vm1140, %v1135, %v1137
      %v1152 = vsel %vm1140, %v1137, %v1139
      %v1165 = vadd.f32 %v1064, %v1141
      %v1166 = vadd.f32 %v1065, %v1142
      %v1167 = vadd.f32 %v1066, %v1143
      %v1168 = vadd.f32 %v1067, %v1144
      %v1169 = vadd.f32 %v1068, %v1145
      %v1170 = vadd.f32 %v1069, %v1146
      %v1171 = vadd.f32 %v1070, %v1147
      %v1172 = vadd.f32 %v1071, %v1148
      %v1173 = vadd.f32 %v1072, %v1149
      %v1174 = vadd.f32 %v1073, %v1150
      %v1175 = vadd.f32 %v1074, %v1151
      %v1176 = vadd.f32 %v1075, %v1152
      %1177 = vset.pattern.permute.xlu0 7
      %1178 = vperm.xlu0 %1177, %v230
      %v1179 = vpop.permute.xlu0 %1178
      %1181 = vset.pattern.permute.xlu0 7
      %1182 = vperm.xlu0 %1181, %v231
      %v1183 = vpop.permute.xlu0 %1182
      %v1185 = vmul.f32 %v1179, %v547
      %v1186 = vmul.f32 %v1179, %v551
      %v1187 = vmul.f32 %v1179, %v555
      %v1188 = vmul.f32 %v1179, %v559
      %v1189 = vmul.f32 %v1179, %v563
      %v1190 = vmul.f32 %v1179, %v567
      %v1191 = vmul.f32 %v1179, %v571
      %v1192 = vmul.f32 %v1183, %v547
      %v1193 = vmul.f32 %v1183, %v551
      %v1194 = vmul.f32 %v1183, %v555
      %v1195 = vmul.f32 %v1183, %v559
      %v1196 = vmul.f32 %v1183, %v563
      %v1197 = vmul.f32 %v1183, %v567
      %v1198 = vmul.f32 %v1183, %v571
      %1213 = vrot.lane.b32.xlu0 %v1185, 75
      %v1214 = vpop.permute.xlu0 %1213
      %1215 = vrot.lane.b32.xlu0 %v1186, 75
      %v1216 = vpop.permute.xlu0 %1215
      %1217 = vrot.lane.b32.xlu0 %v1187, 75
      %v1218 = vpop.permute.xlu0 %1217
      %1219 = vrot.lane.b32.xlu0 %v1188, 75
      %v1220 = vpop.permute.xlu0 %1219
      %1221 = vrot.lane.b32.xlu0 %v1189, 75
      %v1222 = vpop.permute.xlu0 %1221
      %1223 = vrot.lane.b32.xlu0 %v1190, 75
      %v1224 = vpop.permute.xlu0 %1223
      %1225 = vrot.lane.b32.xlu0 %v1191, 75
      %v1226 = vpop.permute.xlu0 %1225
      %1227 = vrot.lane.b32.xlu0 %v1192, 75
      %v1228 = vpop.permute.xlu0 %1227
      %1229 = vrot.lane.b32.xlu0 %v1193, 75
      %v1230 = vpop.permute.xlu0 %1229
      %1231 = vrot.lane.b32.xlu0 %v1194, 75
      %v1232 = vpop.permute.xlu0 %1231
      %1233 = vrot.lane.b32.xlu0 %v1195, 75
      %v1234 = vpop.permute.xlu0 %1233
      %1235 = vrot.lane.b32.xlu0 %v1196, 75
      %v1236 = vpop.permute.xlu0 %1235
      %1237 = vrot.lane.b32.xlu0 %v1197, 75
      %v1238 = vpop.permute.xlu0 %1237
      %1239 = vrot.lane.b32.xlu0 %v1198, 75
      %v1240 = vpop.permute.xlu0 %1239
      %vm1241 = vcmask 613376
      %v1242 = vsel %vm1241, %v1214, %v1216
      %v1243 = vsel %vm1241, %v1216, %v1218
      %v1244 = vsel %vm1241, %v1218, %v1220
      %v1245 = vsel %vm1241, %v1220, %v1222
      %v1246 = vsel %vm1241, %v1222, %v1224
      %v1247 = vsel %vm1241, %v1224, %v1226
      %v1248 = vsel %vm1241, %v1228, %v1230
      %v1249 = vsel %vm1241, %v1230, %v1232
      %v1250 = vsel %vm1241, %v1232, %v1234
      %v1251 = vsel %vm1241, %v1234, %v1236
      %v1252 = vsel %vm1241, %v1236, %v1238
      %v1253 = vsel %vm1241, %v1238, %v1240
      %v1266 = vadd.f32 %v1165, %v1242
      %v1267 = vadd.f32 %v1166, %v1243
      %v1268 = vadd.f32 %v1167, %v1244
      %v1269 = vadd.f32 %v1168, %v1245
      %v1270 = vadd.f32 %v1169, %v1246
      %v1271 = vadd.f32 %v1170, %v1247
      %v1272 = vadd.f32 %v1171, %v1248
      %v1273 = vadd.f32 %v1172, %v1249
      %v1274 = vadd.f32 %v1173, %v1250
      %v1275 = vadd.f32 %v1174, %v1251
      %v1276 = vadd.f32 %v1175, %v1252
      %v1277 = vadd.f32 %v1176, %v1253
      %1278 = vset.pattern.permute.xlu0 8
      %1279 = vperm.xlu0 %1278, %v230
      %v1280 = vpop.permute.xlu0 %1279
      %1282 = vset.pattern.permute.xlu0 8
      %1283 = vperm.xlu0 %1282, %v231
      %v1284 = vpop.permute.xlu0 %1283
      %v1286 = vmul.f32 %v1280, %v547
      %v1287 = vmul.f32 %v1280, %v551
      %v1288 = vmul.f32 %v1280, %v555
      %v1289 = vmul.f32 %v1280, %v559
      %v1290 = vmul.f32 %v1280, %v563
      %v1291 = vmul.f32 %v1280, %v567
      %v1292 = vmul.f32 %v1280, %v571
      %v1293 = vmul.f32 %v1284, %v547
      %v1294 = vmul.f32 %v1284, %v551
      %v1295 = vmul.f32 %v1284, %v555
      %v1296 = vmul.f32 %v1284, %v559
      %v1297 = vmul.f32 %v1284, %v563
      %v1298 = vmul.f32 %v1284, %v567
      %v1299 = vmul.f32 %v1284, %v571
      %1314 = vrot.lane.b32.xlu0 %v1286, 74
      %v1315 = vpop.permute.xlu0 %1314
      %1316 = vrot.lane.b32.xlu0 %v1287, 74
      %v1317 = vpop.permute.xlu0 %1316
      %1318 = vrot.lane.b32.xlu0 %v1288, 74
      %v1319 = vpop.permute.xlu0 %1318
      %1320 = vrot.lane.b32.xlu0 %v1289, 74
      %v1321 = vpop.permute.xlu0 %1320
      %1322 = vrot.lane.b32.xlu0 %v1290, 74
      %v1323 = vpop.permute.xlu0 %1322
      %1324 = vrot.lane.b32.xlu0 %v1291, 74
      %v1325 = vpop.permute.xlu0 %1324
      %1326 = vrot.lane.b32.xlu0 %v1292, 74
      %v1327 = vpop.permute.xlu0 %1326
      %1328 = vrot.lane.b32.xlu0 %v1293, 74
      %v1329 = vpop.permute.xlu0 %1328
      %1330 = vrot.lane.b32.xlu0 %v1294, 74
      %v1331 = vpop.permute.xlu0 %1330
      %1332 = vrot.lane.b32.xlu0 %v1295, 74
      %v1333 = vpop.permute.xlu0 %1332
      %1334 = vrot.lane.b32.xlu0 %v1296, 74
      %v1335 = vpop.permute.xlu0 %1334
      %1336 = vrot.lane.b32.xlu0 %v1297, 74
      %v1337 = vpop.permute.xlu0 %1336
      %1338 = vrot.lane.b32.xlu0 %v1298, 74
      %v1339 = vpop.permute.xlu0 %1338
      %1340 = vrot.lane.b32.xlu0 %v1299, 74
      %v1341 = vpop.permute.xlu0 %1340
      %vm1342 = vcmask 605184
      %v1343 = vsel %vm1342, %v1315, %v1317
      %v1344 = vsel %vm1342, %v1317, %v1319
      %v1345 = vsel %vm1342, %v1319, %v1321
      %v1346 = vsel %vm1342, %v1321, %v1323
      %v1347 = vsel %vm1342, %v1323, %v1325
      %v1348 = vsel %vm1342, %v1325, %v1327
      %v1349 = vsel %vm1342, %v1329, %v1331
      %v1350 = vsel %vm1342, %v1331, %v1333
      %v1351 = vsel %vm1342, %v1333, %v1335
      %v1352 = vsel %vm1342, %v1335, %v1337
      %v1353 = vsel %vm1342, %v1337, %v1339
      %v1354 = vsel %vm1342, %v1339, %v1341
      %v1367 = vadd.f32 %v1266, %v1343
      %v1368 = vadd.f32 %v1267, %v1344
      %v1369 = vadd.f32 %v1268, %v1345
      %v1370 = vadd.f32 %v1269, %v1346
      %v1371 = vadd.f32 %v1270, %v1347
      %v1372 = vadd.f32 %v1271, %v1348
      %v1373 = vadd.f32 %v1272, %v1349
      %v1374 = vadd.f32 %v1273, %v1350
      %v1375 = vadd.f32 %v1274, %v1351
      %v1376 = vadd.f32 %v1275, %v1352
      %v1377 = vadd.f32 %v1276, %v1353
      %v1378 = vadd.f32 %v1277, %v1354
      %1379 = vst [vmem:[#allocation3] sm:$0xff] %v1367
      %1380 = vst [vmem:[#allocation3 + $0x8] sm:$0xff] %v1368
      %1381 = vst [vmem:[#allocation3 + $0x10] sm:$0xff] %v1369
      %1382 = vst [vmem:[#allocation3 + $0x18] sm:$0xff] %v1370
      %1383 = vst [vmem:[#allocation3 + $0x20] sm:$0xff] %v1371
      %1384 = vst [vmem:[#allocation3 + $0x28] sm:$0xff] %v1372
      %1385 = vst [vmem:[#allocation3 + $0x30] sm:$0xff] %v1373
      %1386 = vst [vmem:[#allocation3 + $0x38] sm:$0xff] %v1374
      %1387 = vst [vmem:[#allocation3 + $0x40] sm:$0xff] %v1375
      %1388 = vst [vmem:[#allocation3 + $0x48] sm:$0xff] %v1376
      %1389 = vst [vmem:[#allocation3 + $0x50] sm:$0xff] %v1377
      %1390 = vst [vmem:[#allocation3 + $0x58] sm:$0xff] %v1378
      %v1391 = vld [vmem:[%s3] sm:$0xff]
      %v1392 = vld [vmem:[%s3 + $0x8] sm:$0xff]
      %v1393 = vld [vmem:[%s3 + $0x10] sm:$0xff]
      %v1394 = vld [vmem:[%s3 + $0x18] sm:$0xff]
      %v1395 = vld [vmem:[#allocation3] sm:$0xff]
      %v1396 = vld [vmem:[#allocation3 + $0x8] sm:$0xff]
      %v1397 = vld [vmem:[#allocation3 + $0x10] sm:$0xff]
      %v1398 = vld [vmem:[#allocation3 + $0x18] sm:$0xff]
      %v1399 = vld [vmem:[#allocation3 + $0x20] sm:$0xff]
      %v1400 = vld [vmem:[#allocation3 + $0x30] sm:$0xff]
      %v1401 = vld [vmem:[#allocation3 + $0x38] sm:$0xff]
      %v1402 = vld [vmem:[#allocation3 + $0x40] sm:$0xff]
      %v1403 = vld [vmem:[#allocation3 + $0x48] sm:$0xff]
      %v1404 = vld [vmem:[#allocation3 + $0x50] sm:$0xff]
      %s1405 = scalar_lea.vmem %s3, 32
      %v1406 = vld [vmem:[%s1405] sm:$0xff]
      %v1407 = vld [vmem:[%s1405 + $0x8] sm:$0xff]
      %v1408 = vld [vmem:[%s1405 + $0x10] sm:$0xff]
      %v1409 = vld [vmem:[%s1405 + $0x18] sm:$0xff]
      %v1410 = vld [vmem:[#allocation3] sm:$0xff]
      %v1411 = vld [vmem:[#allocation3 + $0x8] sm:$0xff]
      %v1412 = vld [vmem:[#allocation3 + $0x10] sm:$0xff]
      %v1413 = vld [vmem:[#allocation3 + $0x18] sm:$0xff]
      %v1414 = vld [vmem:[#allocation3 + $0x20] sm:$0xff]
      %v1415 = vld [vmem:[#allocation3 + $0x28] sm:$0xff]
      %v1416 = vld [vmem:[#allocation3 + $0x30] sm:$0xff]
      %v1417 = vld [vmem:[#allocation3 + $0x38] sm:$0xff]
      %v1418 = vld [vmem:[#allocation3 + $0x40] sm:$0xff]
      %v1419 = vld [vmem:[#allocation3 + $0x48] sm:$0xff]
      %v1420 = vld [vmem:[#allocation3 + $0x50] sm:$0xff]
      %v1421 = vld [vmem:[#allocation3 + $0x58] sm:$0xff]
      %1434 = vrot.lane.b32.xlu0 %v1410, 127
      %v1435 = vpop.permute.xlu0 %1434
      %1436 = vrot.lane.b32.xlu0 %v1411, 127
      %v1437 = vpop.permute.xlu0 %1436
      %1438 = vrot.lane.b32.xlu0 %v1412, 127
      %v1439 = vpop.permute.xlu0 %1438
      %1440 = vrot.lane.b32.xlu0 %v1413, 127
      %v1441 = vpop.permute.xlu0 %1440
      %1442 = vrot.lane.b32.xlu0 %v1414, 127
      %v1443 = vpop.permute.xlu0 %1442
      %1444 = vrot.lane.b32.xlu0 %v1415, 127
      %v1445 = vpop.permute.xlu0 %1444
      %1446 = vrot.lane.b32.xlu0 %v1416, 127
      %v1447 = vpop.permute.xlu0 %1446
      %1448 = vrot.lane.b32.xlu0 %v1417, 127
      %v1449 = vpop.permute.xlu0 %1448
      %1450 = vrot.lane.b32.xlu0 %v1418, 127
      %v1451 = vpop.permute.xlu0 %1450
      %1452 = vrot.lane.b32.xlu0 %v1419, 127
      %v1453 = vpop.permute.xlu0 %1452
      %1454 = vrot.lane.b32.xlu0 %v1420, 127
      %v1455 = vpop.permute.xlu0 %1454
      %1456 = vrot.lane.b32.xlu0 %v1421, 127
      %v1457 = vpop.permute.xlu0 %1456
      %v1458 = vsel %vm635, %v1435, %v1437
      %v1459 = vsel %vm635, %v1437, %v1439
      %v1460 = vsel %vm635, %v1439, %v1441
      %v1461 = vsel %vm635, %v1441, %v1443
      %v1462 = vsel %vm635, %v1443, %v1445
      %v1463 = vsel %vm635, %v1447, %v1449
      %v1464 = vsel %vm635, %v1449, %v1451
      %v1465 = vsel %vm635, %v1451, %v1453
      %v1466 = vsel %vm635, %v1453, %v1455
      %v1467 = vsel %vm635, %v1455, %v1457
      %vm1478 = vcmask 130048
      %v1480 = vsel %vm1478, %v1406, 0
      %v1483 = vsel %vm1478, %v1407, 0
      %v1486 = vsel %vm1478, %v1408, 0
      %v1489 = vsel %vm1478, %v1409, 0
      %1491 = vmatprep.subr.mxu0 0.0
      %1492 = vmatpush1.msra.mxu0 0.0
      %1493 = vmatprep.subr.mxu0 0.0
      %1494 = vmatpush1.msra.mxu0 0.0
      %1495 = vmatprep.subr.mxu0 0.0
      %1496 = vmatpush1.msra.mxu0 0.0
      %1497 = vmatprep.subr.mxu0 0.0
      %1498 = vmatpush1.msra.mxu0 0.0
      %1499 = vmatprep.subr.mxu0 0.0
      %1500 = vmatpush1.msra.mxu0 0.0
      %1501 = vmatprep.subr.mxu0 0.0
      %1502 = vmatpush1.msra.mxu0 0.0
      %1503 = vmatprep.subr.mxu0 0.0
      %1504 = vmatpush1.msra.mxu0 0.0
      %1505 = vmatprep.subr.mxu0 0.0
      %1506 = vmatpush1.msra.mxu0 0.0
      %1507 = vmatprep.subr.mxu0 0.0
      %1508 = vmatpush1.msra.mxu0 0.0
      %1509 = vmatprep.subr.mxu0 0.0
      %1510 = vmatpush1.msra.mxu0 0.0
      %1511 = vmatprep.subr.mxu0 0.0
      %1512 = vmatpush1.msra.mxu0 0.0
      %1513 = vmatprep.subr.mxu0 0.0
      %1514 = vmatpush1.msra.mxu0 0.0
      %1515 = vmatprep.subr.mxu0 0.0
      %1516 = vmatpush1.msra.mxu0 0.0
      %1517 = vmatprep.subr.mxu0 0.0
      %1518 = vmatpush1.msra.mxu0 0.0
      %1519 = vmatprep.subr.mxu0 %v1464
      %1520 = vmatpush1.msra.mxu0 %v1463
      %1521 = vmatprep.subr.mxu0 %v1459
      %1522 = vmatpush1.msra.mxu0 %v1458
      %1523 = vmatprep.subr.mxu0 0.0
      %1524 = vmatpush2.msra.mxu0 0.0
      %1525 = vmatprep.subr.mxu0 0.0
      %1526 = vmatpush2.msra.mxu0 0.0
      %1527 = vmatprep.subr.mxu0 0.0
      %1528 = vmatpush2.msra.mxu0 0.0
      %1529 = vmatprep.subr.mxu0 0.0
      %1530 = vmatpush2.msra.mxu0 0.0
      %1531 = vmatprep.subr.mxu0 0.0
      %1532 = vmatpush2.msra.mxu0 0.0
      %1533 = vmatprep.subr.mxu0 0.0
      %1534 = vmatpush2.msra.mxu0 0.0
      %1535 = vmatprep.subr.mxu0 0.0
      %1536 = vmatpush2.msra.mxu0 0.0
      %1537 = vmatprep.subr.mxu0 0.0
      %1538 = vmatpush2.msra.mxu0 0.0
      %1539 = vmatprep.subr.mxu0 0.0
      %1540 = vmatpush2.msra.mxu0 0.0
      %1541 = vmatprep.subr.mxu0 0.0
      %1542 = vmatpush2.msra.mxu0 0.0
      %1543 = vmatprep.subr.mxu0 0.0
      %1544 = vmatpush2.msra.mxu0 0.0
      %1545 = vmatprep.subr.mxu0 0.0
      %1546 = vmatpush2.msra.mxu0 0.0
      %1547 = vmatprep.subr.mxu0 0.0
      %1548 = vmatpush2.msra.mxu0 0.0
      %1549 = vmatprep.subr.mxu0 0.0
      %1550 = vmatpush2.msra.mxu0 0.0
      %1551 = vmatprep.subr.mxu0 0.0
      %1552 = vmatpush2.msra.mxu0 0.0
      %1553 = vmatprep.subr.mxu0 0.0
      %1554 = vmatpush2.msra.mxu0 0.0
      %1555 = vmatprep.mubr.f32.mxu0 0.0
      %1556 = vmatmul.mubr.f32.gmra.mxu0 %v1480
      %v1557 = vpop.f32.mrf.mxu0
      %v1558 = vadd.f32 0.0, %v1557
      %v1559 = vpop.f32.mrf.mxu0
      %v1560 = vadd.f32 0.0, %v1559
      %1561 = vmatprep.mubr.f32.mxu0 0.0
      %1562 = vmatmul.mubr.f32.gmra.mxu0 %v1483
      %v1563 = vpop.f32.mrf.mxu0
      %v1564 = vadd.f32 0.0, %v1563
      %v1565 = vpop.f32.mrf.mxu0
      %v1566 = vadd.f32 0.0, %v1565
      %1567 = vmatprep.mubr.f32.mxu0 0.0
      %1568 = vmatmul.mubr.f32.gmra.mxu0 %v1486
      %v1569 = vpop.f32.mrf.mxu0
      %v1570 = vadd.f32 0.0, %v1569
      %v1571 = vpop.f32.mrf.mxu0
      %v1572 = vadd.f32 0.0, %v1571
      %1573 = vmatprep.mubr.f32.mxu0 0.0
      %1574 = vmatmul.mubr.f32.gmra.mxu0 %v1489
      %v1575 = vpop.f32.mrf.mxu0
      %v1576 = vadd.f32 0.0, %v1575
      %v1577 = vpop.f32.mrf.mxu0
      %v1578 = vadd.f32 0.0, %v1577
      %1579 = vdwg.mxu0
      %1580 = vmatprep.subr.mxu0 0.0
      %1581 = vmatpush1.msra.mxu0 0.0
      %1582 = vmatprep.subr.mxu0 0.0
      %1583 = vmatpush1.msra.mxu0 0.0
      %1584 = vmatprep.subr.mxu0 0.0
      %1585 = vmatpush1.msra.mxu0 0.0
      %1586 = vmatprep.subr.mxu0 0.0
      %1587 = vmatpush1.msra.mxu0 0.0
      %1588 = vmatprep.subr.mxu0 0.0
      %1589 = vmatpush1.msra.mxu0 0.0
      %1590 = vmatprep.subr.mxu0 0.0
      %1591 = vmatpush1.msra.mxu0 0.0
      %1592 = vmatprep.subr.mxu0 0.0
      %1593 = vmatpush1.msra.mxu0 0.0
      %1594 = vmatprep.subr.mxu0 0.0
      %1595 = vmatpush1.msra.mxu0 0.0
      %1596 = vmatprep.subr.mxu0 0.0
      %1597 = vmatpush1.msra.mxu0 0.0
      %1598 = vmatprep.subr.mxu0 0.0
      %1599 = vmatpush1.msra.mxu0 0.0
      %1600 = vmatprep.subr.mxu0 0.0
      %1601 = vmatpush1.msra.mxu0 0.0
      %1602 = vmatprep.subr.mxu0 0.0
      %1603 = vmatpush1.msra.mxu0 0.0
      %1604 = vmatprep.subr.mxu0 0.0
      %1605 = vmatpush1.msra.mxu0 0.0
      %1606 = vmatprep.subr.mxu0 0.0
      %1607 = vmatpush1.msra.mxu0 0.0
      %1608 = vmatprep.subr.mxu0 %v1466
      %1609 = vmatpush1.msra.mxu0 %v1465
      %1610 = vmatprep.subr.mxu0 %v1461
      %1611 = vmatpush1.msra.mxu0 %v1460
      %1612 = vmatprep.subr.mxu0 0.0
      %1613 = vmatpush2.msra.mxu0 0.0
      %1614 = vmatprep.subr.mxu0 0.0
      %1615 = vmatpush2.msra.mxu0 0.0
      %1616 = vmatprep.subr.mxu0 0.0
      %1617 = vmatpush2.msra.mxu0 0.0
      %1618 = vmatprep.subr.mxu0 0.0
      %1619 = vmatpush2.msra.mxu0 0.0
      %1620 = vmatprep.subr.mxu0 0.0
      %1621 = vmatpush2.msra.mxu0 0.0
      %1622 = vmatprep.subr.mxu0 0.0
      %1623 = vmatpush2.msra.mxu0 0.0
      %1624 = vmatprep.subr.mxu0 0.0
      %1625 = vmatpush2.msra.mxu0 0.0
      %1626 = vmatprep.subr.mxu0 0.0
      %1627 = vmatpush2.msra.mxu0 0.0
      %1628 = vmatprep.subr.mxu0 0.0
      %1629 = vmatpush2.msra.mxu0 0.0
      %1630 = vmatprep.subr.mxu0 0.0
      %1631 = vmatpush2.msra.mxu0 0.0
      %1632 = vmatprep.subr.mxu0 0.0
      %1633 = vmatpush2.msra.mxu0 0.0
      %1634 = vmatprep.subr.mxu0 0.0
      %1635 = vmatpush2.msra.mxu0 0.0
      %1636 = vmatprep.subr.mxu0 0.0
      %1637 = vmatpush2.msra.mxu0 0.0
      %1638 = vmatprep.subr.mxu0 0.0
      %1639 = vmatpush2.msra.mxu0 0.0
      %1640 = vmatprep.subr.mxu0 0.0
      %1641 = vmatpush2.msra.mxu0 0.0
      %1642 = vmatprep.subr.mxu0 0.0
      %1643 = vmatpush2.msra.mxu0 0.0
      %1644 = vmatprep.mubr.f32.mxu0 0.0
      %1645 = vmatmul.mubr.f32.gmra.mxu0 %v1480
      %v1646 = vpop.f32.mrf.mxu0
      %v1647 = vadd.f32 0.0, %v1646
      %v1648 = vpop.f32.mrf.mxu0
      %v1649 = vadd.f32 0.0, %v1648
      %1650 = vmatprep.mubr.f32.mxu0 0.0
      %1651 = vmatmul.mubr.f32.gmra.mxu0 %v1483
      %v1652 = vpop.f32.mrf.mxu0
      %v1653 = vadd.f32 0.0, %v1652
      %v1654 = vpop.f32.mrf.mxu0
      %v1655 = vadd.f32 0.0, %v1654
      %1656 = vmatprep.mubr.f32.mxu0 0.0
      %1657 = vmatmul.mubr.f32.gmra.mxu0 %v1486
      %v1658 = vpop.f32.mrf.mxu0
      %v1659 = vadd.f32 0.0, %v1658
      %v1660 = vpop.f32.mrf.mxu0
      %v1661 = vadd.f32 0.0, %v1660
      %1662 = vmatprep.mubr.f32.mxu0 0.0
      %1663 = vmatmul.mubr.f32.gmra.mxu0 %v1489
      %v1664 = vpop.f32.mrf.mxu0
      %v1665 = vadd.f32 0.0, %v1664
      %v1666 = vpop.f32.mrf.mxu0
      %v1667 = vadd.f32 0.0, %v1666
      %1668 = vdwg.mxu0
      %1669 = vmatprep.subr.mxu0 0.0
      %1670 = vmatpush1.msra.mxu0 0.0
      %1671 = vmatprep.subr.mxu0 0.0
      %1672 = vmatpush1.msra.mxu0 0.0
      %1673 = vmatprep.subr.mxu0 0.0
      %1674 = vmatpush1.msra.mxu0 0.0
      %1675 = vmatprep.subr.mxu0 0.0
      %1676 = vmatpush1.msra.mxu0 0.0
      %1677 = vmatprep.subr.mxu0 0.0
      %1678 = vmatpush1.msra.mxu0 0.0
      %1679 = vmatprep.subr.mxu0 0.0
      %1680 = vmatpush1.msra.mxu0 0.0
      %1681 = vmatprep.subr.mxu0 0.0
      %1682 = vmatpush1.msra.mxu0 0.0
      %1683 = vmatprep.subr.mxu0 0.0
      %1684 = vmatpush1.msra.mxu0 0.0
      %1685 = vmatprep.subr.mxu0 0.0
      %1686 = vmatpush1.msra.mxu0 0.0
      %1687 = vmatprep.subr.mxu0 0.0
      %1688 = vmatpush1.msra.mxu0 0.0
      %1689 = vmatprep.subr.mxu0 0.0
      %1690 = vmatpush1.msra.mxu0 0.0
      %1691 = vmatprep.subr.mxu0 0.0
      %1692 = vmatpush1.msra.mxu0 0.0
      %1693 = vmatprep.subr.mxu0 0.0
      %1694 = vmatpush1.msra.mxu0 0.0
      %1695 = vmatprep.subr.mxu0 0.0
      %1696 = vmatpush1.msra.mxu0 0.0
      %1697 = vmatprep.subr.mxu0 0.0
      %1698 = vmatpush1.msra.mxu0 %v1467
      %1699 = vmatprep.subr.mxu0 0.0
      %1700 = vmatpush1.msra.mxu0 %v1462
      %1701 = vmatprep.subr.mxu0 0.0
      %1702 = vmatpush2.msra.mxu0 0.0
      %1703 = vmatprep.subr.mxu0 0.0
      %1704 = vmatpush2.msra.mxu0 0.0
      %1705 = vmatprep.subr.mxu0 0.0
      %1706 = vmatpush2.msra.mxu0 0.0
      %1707 = vmatprep.subr.mxu0 0.0
      %1708 = vmatpush2.msra.mxu0 0.0
      %1709 = vmatprep.subr.mxu0 0.0
      %1710 = vmatpush2.msra.mxu0 0.0
      %1711 = vmatprep.subr.mxu0 0.0
      %1712 = vmatpush2.msra.mxu0 0.0
      %1713 = vmatprep.subr.mxu0 0.0
      %1714 = vmatpush2.msra.mxu0 0.0
      %1715 = vmatprep.subr.mxu0 0.0
      %1716 = vmatpush2.msra.mxu0 0.0
      %1717 = vmatprep.subr.mxu0 0.0
      %1718 = vmatpush2.msra.mxu0 0.0
      %1719 = vmatprep.subr.mxu0 0.0
      %1720 = vmatpush2.msra.mxu0 0.0
      %1721 = vmatprep.subr.mxu0 0.0
      %1722 = vmatpush2.msra.mxu0 0.0
      %1723 = vmatprep.subr.mxu0 0.0
      %1724 = vmatpush2.msra.mxu0 0.0
      %1725 = vmatprep.subr.mxu0 0.0
      %1726 = vmatpush2.msra.mxu0 0.0
      %1727 = vmatprep.subr.mxu0 0.0
      %1728 = vmatpush2.msra.mxu0 0.0
      %1729 = vmatprep.subr.mxu0 0.0
      %1730 = vmatpush2.msra.mxu0 0.0
      %1731 = vmatprep.subr.mxu0 0.0
      %1732 = vmatpush2.msra.mxu0 0.0
      %1733 = vmatprep.mubr.f32.mxu0 0.0
      %1734 = vmatmul.mubr.f32.gmra.mxu0 %v1480
      %v1735 = vpop.f32.mrf.mxu0
      %v1736 = vadd.f32 0.0, %v1735
      %v1737 = vpop.f32.mrf.mxu0
      %1738 = vmatprep.mubr.f32.mxu0 0.0
      %1739 = vmatmul.mubr.f32.gmra.mxu0 %v1483
      %v1740 = vpop.f32.mrf.mxu0
      %v1741 = vadd.f32 0.0, %v1740
      %v1742 = vpop.f32.mrf.mxu0
      %1743 = vmatprep.mubr.f32.mxu0 0.0
      %1744 = vmatmul.mubr.f32.gmra.mxu0 %v1486
      %v1745 = vpop.f32.mrf.mxu0
      %v1746 = vadd.f32 0.0, %v1745
      %v1747 = vpop.f32.mrf.mxu0
      %1748 = vmatprep.mubr.f32.mxu0 0.0
      %1749 = vmatmul.mubr.f32.gmra.mxu0 %v1489
      %v1750 = vpop.f32.mrf.mxu0
      %v1751 = vadd.f32 0.0, %v1750
      %v1752 = vpop.f32.mrf.mxu0
      %1753 = vdwg.mxu0
      %v1755 = vsel %vm1478, %v1391, 0
      %v1758 = vsel %vm1478, %v1392, 0
      %v1761 = vsel %vm1478, %v1393, 0
      %v1764 = vsel %vm1478, %v1394, 0
      %1766 = vmatprep.subr.mxu0 0.0
      %1767 = vmatpush1.msra.mxu0 0.0
      %1768 = vmatprep.subr.mxu0 0.0
      %1769 = vmatpush1.msra.mxu0 0.0
      %1770 = vmatprep.subr.mxu0 0.0
      %1771 = vmatpush1.msra.mxu0 0.0
      %1772 = vmatprep.subr.mxu0 0.0
      %1773 = vmatpush1.msra.mxu0 0.0
      %1774 = vmatprep.subr.mxu0 0.0
      %1775 = vmatpush1.msra.mxu0 0.0
      %1776 = vmatprep.subr.mxu0 0.0
      %1777 = vmatpush1.msra.mxu0 0.0
      %1778 = vmatprep.subr.mxu0 0.0
      %1779 = vmatpush1.msra.mxu0 0.0
      %1780 = vmatprep.subr.mxu0 0.0
      %1781 = vmatpush1.msra.mxu0 0.0
      %1782 = vmatprep.subr.mxu0 0.0
      %1783 = vmatpush1.msra.mxu0 0.0
      %1784 = vmatprep.subr.mxu0 0.0
      %1785 = vmatpush1.msra.mxu0 0.0
      %1786 = vmatprep.subr.mxu0 0.0
      %1787 = vmatpush1.msra.mxu0 0.0
      %1788 = vmatprep.subr.mxu0 0.0
      %1789 = vmatpush1.msra.mxu0 0.0
      %1790 = vmatprep.subr.mxu0 0.0
      %1791 = vmatpush1.msra.mxu0 0.0
      %1792 = vmatprep.subr.mxu0 0.0
      %1793 = vmatpush1.msra.mxu0 0.0
      %1794 = vmatprep.subr.mxu0 %v1401
      %1795 = vmatpush1.msra.mxu0 %v1400
      %1796 = vmatprep.subr.mxu0 %v1396
      %1797 = vmatpush1.msra.mxu0 %v1395
      %1798 = vmatprep.subr.mxu0 0.0
      %1799 = vmatpush2.msra.mxu0 0.0
      %1800 = vmatprep.subr.mxu0 0.0
      %1801 = vmatpush2.msra.mxu0 0.0
      %1802 = vmatprep.subr.mxu0 0.0
      %1803 = vmatpush2.msra.mxu0 0.0
      %1804 = vmatprep.subr.mxu0 0.0
      %1805 = vmatpush2.msra.mxu0 0.0
      %1806 = vmatprep.subr.mxu0 0.0
      %1807 = vmatpush2.msra.mxu0 0.0
      %1808 = vmatprep.subr.mxu0 0.0
      %1809 = vmatpush2.msra.mxu0 0.0
      %1810 = vmatprep.subr.mxu0 0.0
      %1811 = vmatpush2.msra.mxu0 0.0
      %1812 = vmatprep.subr.mxu0 0.0
      %1813 = vmatpush2.msra.mxu0 0.0
      %1814 = vmatprep.subr.mxu0 0.0
      %1815 = vmatpush2.msra.mxu0 0.0
      %1816 = vmatprep.subr.mxu0 0.0
      %1817 = vmatpush2.msra.mxu0 0.0
      %1818 = vmatprep.subr.mxu0 0.0
      %1819 = vmatpush2.msra.mxu0 0.0
      %1820 = vmatprep.subr.mxu0 0.0
      %1821 = vmatpush2.msra.mxu0 0.0
      %1822 = vmatprep.subr.mxu0 0.0
      %1823 = vmatpush2.msra.mxu0 0.0
      %1824 = vmatprep.subr.mxu0 0.0
      %1825 = vmatpush2.msra.mxu0 0.0
      %1826 = vmatprep.subr.mxu0 0.0
      %1827 = vmatpush2.msra.mxu0 0.0
      %1828 = vmatprep.subr.mxu0 0.0
      %1829 = vmatpush2.msra.mxu0 0.0
      %1830 = vmatprep.mubr.f32.mxu0 0.0
      %1831 = vmatmul.mubr.f32.gmra.mxu0 %v1755
      %v1832 = vpop.f32.mrf.mxu0
      %v1833 = vadd.f32 %v1558, %v1832
      %v1834 = vpop.f32.mrf.mxu0
      %v1835 = vadd.f32 %v1560, %v1834
      %1836 = vmatprep.mubr.f32.mxu0 0.0
      %1837 = vmatmul.mubr.f32.gmra.mxu0 %v1758
      %v1838 = vpop.f32.mrf.mxu0
      %v1839 = vadd.f32 %v1564, %v1838
      %v1840 = vpop.f32.mrf.mxu0
      %v1841 = vadd.f32 %v1566, %v1840
      %1842 = vmatprep.mubr.f32.mxu0 0.0
      %1843 = vmatmul.mubr.f32.gmra.mxu0 %v1761
      %v1844 = vpop.f32.mrf.mxu0
      %v1845 = vadd.f32 %v1570, %v1844
      %v1846 = vpop.f32.mrf.mxu0
      %v1847 = vadd.f32 %v1572, %v1846
      %1848 = vmatprep.mubr.f32.mxu0 0.0
      %1849 = vmatmul.mubr.f32.gmra.mxu0 %v1764
      %v1850 = vpop.f32.mrf.mxu0
      %v1851 = vadd.f32 %v1576, %v1850
      %v1852 = vpop.f32.mrf.mxu0
      %v1853 = vadd.f32 %v1578, %v1852
      %1854 = vdwg.mxu0
      %1855 = vmatprep.subr.mxu0 0.0
      %1856 = vmatpush1.msra.mxu0 0.0
      %1857 = vmatprep.subr.mxu0 0.0
      %1858 = vmatpush1.msra.mxu0 0.0
      %1859 = vmatprep.subr.mxu0 0.0
      %1860 = vmatpush1.msra.mxu0 0.0
      %1861 = vmatprep.subr.mxu0 0.0
      %1862 = vmatpush1.msra.mxu0 0.0
      %1863 = vmatprep.subr.mxu0 0.0
      %1864 = vmatpush1.msra.mxu0 0.0
      %1865 = vmatprep.subr.mxu0 0.0
      %1866 = vmatpush1.msra.mxu0 0.0
      %1867 = vmatprep.subr.mxu0 0.0
      %1868 = vmatpush1.msra.mxu0 0.0
      %1869 = vmatprep.subr.mxu0 0.0
      %1870 = vmatpush1.msra.mxu0 0.0
      %1871 = vmatprep.subr.mxu0 0.0
      %1872 = vmatpush1.msra.mxu0 0.0
      %1873 = vmatprep.subr.mxu0 0.0
      %1874 = vmatpush1.msra.mxu0 0.0
      %1875 = vmatprep.subr.mxu0 0.0
      %1876 = vmatpush1.msra.mxu0 0.0
      %1877 = vmatprep.subr.mxu0 0.0
      %1878 = vmatpush1.msra.mxu0 0.0
      %1879 = vmatprep.subr.mxu0 0.0
      %1880 = vmatpush1.msra.mxu0 0.0
      %1881 = vmatprep.subr.mxu0 0.0
      %1882 = vmatpush1.msra.mxu0 0.0
      %1883 = vmatprep.subr.mxu0 %v1403
      %1884 = vmatpush1.msra.mxu0 %v1402
      %1885 = vmatprep.subr.mxu0 %v1398
      %1886 = vmatpush1.msra.mxu0 %v1397
      %1887 = vmatprep.subr.mxu0 0.0
      %1888 = vmatpush2.msra.mxu0 0.0
      %1889 = vmatprep.subr.mxu0 0.0
      %1890 = vmatpush2.msra.mxu0 0.0
      %1891 = vmatprep.subr.mxu0 0.0
      %1892 = vmatpush2.msra.mxu0 0.0
      %1893 = vmatprep.subr.mxu0 0.0
      %1894 = vmatpush2.msra.mxu0 0.0
      %1895 = vmatprep.subr.mxu0 0.0
      %1896 = vmatpush2.msra.mxu0 0.0
      %1897 = vmatprep.subr.mxu0 0.0
      %1898 = vmatpush2.msra.mxu0 0.0
      %1899 = vmatprep.subr.mxu0 0.0
      %1900 = vmatpush2.msra.mxu0 0.0
      %1901 = vmatprep.subr.mxu0 0.0
      %1902 = vmatpush2.msra.mxu0 0.0
      %1903 = vmatprep.subr.mxu0 0.0
      %1904 = vmatpush2.msra.mxu0 0.0
      %1905 = vmatprep.subr.mxu0 0.0
      %1906 = vmatpush2.msra.mxu0 0.0
      %1907 = vmatprep.subr.mxu0 0.0
      %1908 = vmatpush2.msra.mxu0 0.0
      %1909 = vmatprep.subr.mxu0 0.0
      %1910 = vmatpush2.msra.mxu0 0.0
      %1911 = vmatprep.subr.mxu0 0.0
      %1912 = vmatpush2.msra.mxu0 0.0
      %1913 = vmatprep.subr.mxu0 0.0
      %1914 = vmatpush2.msra.mxu0 0.0
      %1915 = vmatprep.subr.mxu0 0.0
      %1916 = vmatpush2.msra.mxu0 0.0
      %1917 = vmatprep.subr.mxu0 0.0
      %1918 = vmatpush2.msra.mxu0 0.0
      %1919 = vmatprep.mubr.f32.mxu0 0.0
      %1920 = vmatmul.mubr.f32.gmra.mxu0 %v1755
      %v1921 = vpop.f32.mrf.mxu0
      %v1922 = vadd.f32 %v1647, %v1921
      %v1923 = vpop.f32.mrf.mxu0
      %v1924 = vadd.f32 %v1649, %v1923
      %1925 = vmatprep.mubr.f32.mxu0 0.0
      %1926 = vmatmul.mubr.f32.gmra.mxu0 %v1758
      %v1927 = vpop.f32.mrf.mxu0
      %v1928 = vadd.f32 %v1653, %v1927
      %v1929 = vpop.f32.mrf.mxu0
      %v1930 = vadd.f32 %v1655, %v1929
      %1931 = vmatprep.mubr.f32.mxu0 0.0
      %1932 = vmatmul.mubr.f32.gmra.mxu0 %v1761
      %v1933 = vpop.f32.mrf.mxu0
      %v1934 = vadd.f32 %v1659, %v1933
      %v1935 = vpop.f32.mrf.mxu0
      %v1936 = vadd.f32 %v1661, %v1935
      %1937 = vmatprep.mubr.f32.mxu0 0.0
      %1938 = vmatmul.mubr.f32.gmra.mxu0 %v1764
      %v1939 = vpop.f32.mrf.mxu0
      %v1940 = vadd.f32 %v1665, %v1939
      %v1941 = vpop.f32.mrf.mxu0
      %v1942 = vadd.f32 %v1667, %v1941
      %1943 = vdwg.mxu0
      %1944 = vmatprep.subr.mxu0 0.0
      %1945 = vmatpush1.msra.mxu0 0.0
      %1946 = vmatprep.subr.mxu0 0.0
      %1947 = vmatpush1.msra.mxu0 0.0
      %1948 = vmatprep.subr.mxu0 0.0
      %1949 = vmatpush1.msra.mxu0 0.0
      %1950 = vmatprep.subr.mxu0 0.0
      %1951 = vmatpush1.msra.mxu0 0.0
      %1952 = vmatprep.subr.mxu0 0.0
      %1953 = vmatpush1.msra.mxu0 0.0
      %1954 = vmatprep.subr.mxu0 0.0
      %1955 = vmatpush1.msra.mxu0 0.0
      %1956 = vmatprep.subr.mxu0 0.0
      %1957 = vmatpush1.msra.mxu0 0.0
      %1958 = vmatprep.subr.mxu0 0.0
      %1959 = vmatpush1.msra.mxu0 0.0
      %1960 = vmatprep.subr.mxu0 0.0
      %1961 = vmatpush1.msra.mxu0 0.0
      %1962 = vmatprep.subr.mxu0 0.0
      %1963 = vmatpush1.msra.mxu0 0.0
      %1964 = vmatprep.subr.mxu0 0.0
      %1965 = vmatpush1.msra.mxu0 0.0
      %1966 = vmatprep.subr.mxu0 0.0
      %1967 = vmatpush1.msra.mxu0 0.0
      %1968 = vmatprep.subr.mxu0 0.0
      %1969 = vmatpush1.msra.mxu0 0.0
      %1970 = vmatprep.subr.mxu0 0.0
      %1971 = vmatpush1.msra.mxu0 0.0
      %1972 = vmatprep.subr.mxu0 0.0
      %1973 = vmatpush1.msra.mxu0 %v1404
      %1974 = vmatprep.subr.mxu0 0.0
      %1975 = vmatpush1.msra.mxu0 %v1399
      %1976 = vmatprep.subr.mxu0 0.0
      %1977 = vmatpush2.msra.mxu0 0.0
      %1978 = vmatprep.subr.mxu0 0.0
      %1979 = vmatpush2.msra.mxu0 0.0
      %1980 = vmatprep.subr.mxu0 0.0
      %1981 = vmatpush2.msra.mxu0 0.0
      %1982 = vmatprep.subr.mxu0 0.0
      %1983 = vmatpush2.msra.mxu0 0.0
      %1984 = vmatprep.subr.mxu0 0.0
      %1985 = vmatpush2.msra.mxu0 0.0
      %1986 = vmatprep.subr.mxu0 0.0
      %1987 = vmatpush2.msra.mxu0 0.0
      %1988 = vmatprep.subr.mxu0 0.0
      %1989 = vmatpush2.msra.mxu0 0.0
      %1990 = vmatprep.subr.mxu0 0.0
      %1991 = vmatpush2.msra.mxu0 0.0
      %1992 = vmatprep.subr.mxu0 0.0
      %1993 = vmatpush2.msra.mxu0 0.0
      %1994 = vmatprep.subr.mxu0 0.0
      %1995 = vmatpush2.msra.mxu0 0.0
      %1996 = vmatprep.subr.mxu0 0.0
      %1997 = vmatpush2.msra.mxu0 0.0
      %1998 = vmatprep.subr.mxu0 0.0
      %1999 = vmatpush2.msra.mxu0 0.0
      %2000 = vmatprep.subr.mxu0 0.0
      %2001 = vmatpush2.msra.mxu0 0.0
      %2002 = vmatprep.subr.mxu0 0.0
      %2003 = vmatpush2.msra.mxu0 0.0
      %2004 = vmatprep.subr.mxu0 0.0
      %2005 = vmatpush2.msra.mxu0 0.0
      %2006 = vmatprep.subr.mxu0 0.0
      %2007 = vmatpush2.msra.mxu0 0.0
      %2008 = vmatprep.mubr.f32.mxu0 0.0
      %2009 = vmatmul.mubr.f32.gmra.mxu0 %v1755
      %v2010 = vpop.f32.mrf.mxu0
      %v2011 = vadd.f32 %v1736, %v2010
      %v2012 = vpop.f32.mrf.mxu0
      %2013 = vmatprep.mubr.f32.mxu0 0.0
      %2014 = vmatmul.mubr.f32.gmra.mxu0 %v1758
      %v2015 = vpop.f32.mrf.mxu0
      %v2016 = vadd.f32 %v1741, %v2015
      %v2017 = vpop.f32.mrf.mxu0
      %2018 = vmatprep.mubr.f32.mxu0 0.0
      %2019 = vmatmul.mubr.f32.gmra.mxu0 %v1761
      %v2020 = vpop.f32.mrf.mxu0
      %v2021 = vadd.f32 %v1746, %v2020
      %v2022 = vpop.f32.mrf.mxu0
      %2023 = vmatprep.mubr.f32.mxu0 0.0
      %2024 = vmatmul.mubr.f32.gmra.mxu0 %v1764
      %v2025 = vpop.f32.mrf.mxu0
      %v2026 = vadd.f32 %v1751, %v2025
      %v2027 = vpop.f32.mrf.mxu0
      %2028 = vdwg.mxu0
      %s2029 = scalar_lea.vmem %s3, 64
      %v2030 = vld [vmem:[%s2029] sm:$0xff]
      %v2031 = vld [vmem:[%s2029 + $0x8] sm:$0xff]
      %v2032 = vld [vmem:[%s2029 + $0x10] sm:$0xff]
      %v2033 = vld [vmem:[%s2029 + $0x18] sm:$0xff]
      %2034 = vrot.lane.b32.xlu0 %v1410, 126
      %v2035 = vpop.permute.xlu0 %2034
      %2036 = vrot.lane.b32.xlu0 %v1411, 126
      %v2037 = vpop.permute.xlu0 %2036
      %2038 = vrot.lane.b32.xlu0 %v1412, 126
      %v2039 = vpop.permute.xlu0 %2038
      %2040 = vrot.lane.b32.xlu0 %v1413, 126
      %v2041 = vpop.permute.xlu0 %2040
      %2042 = vrot.lane.b32.xlu0 %v1414, 126
      %v2043 = vpop.permute.xlu0 %2042
      %2044 = vrot.lane.b32.xlu0 %v1415, 126
      %v2045 = vpop.permute.xlu0 %2044
      %2046 = vrot.lane.b32.xlu0 %v1416, 126
      %v2047 = vpop.permute.xlu0 %2046
      %2048 = vrot.lane.b32.xlu0 %v1417, 126
      %v2049 = vpop.permute.xlu0 %2048
      %2050 = vrot.lane.b32.xlu0 %v1418, 126
      %v2051 = vpop.permute.xlu0 %2050
      %2052 = vrot.lane.b32.xlu0 %v1419, 126
      %v2053 = vpop.permute.xlu0 %2052
      %2054 = vrot.lane.b32.xlu0 %v1420, 126
      %v2055 = vpop.permute.xlu0 %2054
      %2056 = vrot.lane.b32.xlu0 %v1421, 126
      %v2057 = vpop.permute.xlu0 %2056
      %v2058 = vsel %vm736, %v2035, %v2037
      %v2059 = vsel %vm736, %v2037, %v2039
      %v2060 = vsel %vm736, %v2039, %v2041
      %v2061 = vsel %vm736, %v2041, %v2043
      %v2062 = vsel %vm736, %v2043, %v2045
      %v2063 = vsel %vm736, %v2047, %v2049
      %v2064 = vsel %vm736, %v2049, %v2051
      %v2065 = vsel %vm736, %v2051, %v2053
      %v2066 = vsel %vm736, %v2053, %v2055
      %v2067 = vsel %vm736, %v2055, %v2057
      %v2079 = vsel %vm1478, %v2030, 0
      %v2082 = vsel %vm1478, %v2031, 0
      %v2085 = vsel %vm1478, %v2032, 0
      %v2088 = vsel %vm1478, %v2033, 0
      %2090 = vmatprep.subr.mxu0 0.0
      %2091 = vmatpush1.msra.mxu0 0.0
      %2092 = vmatprep.subr.mxu0 0.0
      %2093 = vmatpush1.msra.mxu0 0.0
      %2094 = vmatprep.subr.mxu0 0.0
      %2095 = vmatpush1.msra.mxu0 0.0
      %2096 = vmatprep.subr.mxu0 0.0
      %2097 = vmatpush1.msra.mxu0 0.0
      %2098 = vmatprep.subr.mxu0 0.0
      %2099 = vmatpush1.msra.mxu0 0.0
      %2100 = vmatprep.subr.mxu0 0.0
      %2101 = vmatpush1.msra.mxu0 0.0
      %2102 = vmatprep.subr.mxu0 0.0
      %2103 = vmatpush1.msra.mxu0 0.0
      %2104 = vmatprep.subr.mxu0 0.0
      %2105 = vmatpush1.msra.mxu0 0.0
      %2106 = vmatprep.subr.mxu0 0.0
      %2107 = vmatpush1.msra.mxu0 0.0
      %2108 = vmatprep.subr.mxu0 0.0
      %2109 = vmatpush1.msra.mxu0 0.0
      %2110 = vmatprep.subr.mxu0 0.0
      %2111 = vmatpush1.msra.mxu0 0.0
      %2112 = vmatprep.subr.mxu0 0.0
      %2113 = vmatpush1.msra.mxu0 0.0
      %2114 = vmatprep.subr.mxu0 0.0
      %2115 = vmatpush1.msra.mxu0 0.0
      %2116 = vmatprep.subr.mxu0 0.0
      %2117 = vmatpush1.msra.mxu0 0.0
      %2118 = vmatprep.subr.mxu0 %v2064
      %2119 = vmatpush1.msra.mxu0 %v2063
      %2120 = vmatprep.subr.mxu0 %v2059
      %2121 = vmatpush1.msra.mxu0 %v2058
      %2122 = vmatprep.subr.mxu0 0.0
      %2123 = vmatpush2.msra.mxu0 0.0
      %2124 = vmatprep.subr.mxu0 0.0
      %2125 = vmatpush2.msra.mxu0 0.0
      %2126 = vmatprep.subr.mxu0 0.0
      %2127 = vmatpush2.msra.mxu0 0.0
      %2128 = vmatprep.subr.mxu0 0.0
      %2129 = vmatpush2.msra.mxu0 0.0
      %2130 = vmatprep.subr.mxu0 0.0
      %2131 = vmatpush2.msra.mxu0 0.0
      %2132 = vmatprep.subr.mxu0 0.0
      %2133 = vmatpush2.msra.mxu0 0.0
      %2134 = vmatprep.subr.mxu0 0.0
      %2135 = vmatpush2.msra.mxu0 0.0
      %2136 = vmatprep.subr.mxu0 0.0
      %2137 = vmatpush2.msra.mxu0 0.0
      %2138 = vmatprep.subr.mxu0 0.0
      %2139 = vmatpush2.msra.mxu0 0.0
      %2140 = vmatprep.subr.mxu0 0.0
      %2141 = vmatpush2.msra.mxu0 0.0
      %2142 = vmatprep.subr.mxu0 0.0
      %2143 = vmatpush2.msra.mxu0 0.0
      %2144 = vmatprep.subr.mxu0 0.0
      %2145 = vmatpush2.msra.mxu0 0.0
      %2146 = vmatprep.subr.mxu0 0.0
      %2147 = vmatpush2.msra.mxu0 0.0
      %2148 = vmatprep.subr.mxu0 0.0
      %2149 = vmatpush2.msra.mxu0 0.0
      %2150 = vmatprep.subr.mxu0 0.0
      %2151 = vmatpush2.msra.mxu0 0.0
      %2152 = vmatprep.subr.mxu0 0.0
      %2153 = vmatpush2.msra.mxu0 0.0
      %2154 = vmatprep.mubr.f32.mxu0 0.0
      %2155 = vmatmul.mubr.f32.gmra.mxu0 %v2079
      %v2156 = vpop.f32.mrf.mxu0
      %v2157 = vadd.f32 0.0, %v2156
      %v2158 = vpop.f32.mrf.mxu0
      %v2159 = vadd.f32 0.0, %v2158
      %2160 = vmatprep.mubr.f32.mxu0 0.0
      %2161 = vmatmul.mubr.f32.gmra.mxu0 %v2082
      %v2162 = vpop.f32.mrf.mxu0
      %v2163 = vadd.f32 0.0, %v2162
      %v2164 = vpop.f32.mrf.mxu0
      %v2165 = vadd.f32 0.0, %v2164
      %2166 = vmatprep.mubr.f32.mxu0 0.0
      %2167 = vmatmul.mubr.f32.gmra.mxu0 %v2085
      %v2168 = vpop.f32.mrf.mxu0
      %v2169 = vadd.f32 0.0, %v2168
      %v2170 = vpop.f32.mrf.mxu0
      %v2171 = vadd.f32 0.0, %v2170
      %2172 = vmatprep.mubr.f32.mxu0 0.0
      %2173 = vmatmul.mubr.f32.gmra.mxu0 %v2088
      %v2174 = vpop.f32.mrf.mxu0
      %v2175 = vadd.f32 0.0, %v2174
      %v2176 = vpop.f32.mrf.mxu0
      %v2177 = vadd.f32 0.0, %v2176
      %2178 = vdwg.mxu0
      %2179 = vmatprep.subr.mxu0 0.0
      %2180 = vmatpush1.msra.mxu0 0.0
      %2181 = vmatprep.subr.mxu0 0.0
      %2182 = vmatpush1.msra.mxu0 0.0
      %2183 = vmatprep.subr.mxu0 0.0
      %2184 = vmatpush1.msra.mxu0 0.0
      %2185 = vmatprep.subr.mxu0 0.0
      %2186 = vmatpush1.msra.mxu0 0.0
      %2187 = vmatprep.subr.mxu0 0.0
      %2188 = vmatpush1.msra.mxu0 0.0
      %2189 = vmatprep.subr.mxu0 0.0
      %2190 = vmatpush1.msra.mxu0 0.0
      %2191 = vmatprep.subr.mxu0 0.0
      %2192 = vmatpush1.msra.mxu0 0.0
      %2193 = vmatprep.subr.mxu0 0.0
      %2194 = vmatpush1.msra.mxu0 0.0
      %2195 = vmatprep.subr.mxu0 0.0
      %2196 = vmatpush1.msra.mxu0 0.0
      %2197 = vmatprep.subr.mxu0 0.0
      %2198 = vmatpush1.msra.mxu0 0.0
      %2199 = vmatprep.subr.mxu0 0.0
      %2200 = vmatpush1.msra.mxu0 0.0
      %2201 = vmatprep.subr.mxu0 0.0
      %2202 = vmatpush1.msra.mxu0 0.0
      %2203 = vmatprep.subr.mxu0 0.0
      %2204 = vmatpush1.msra.mxu0 0.0
      %2205 = vmatprep.subr.mxu0 0.0
      %2206 = vmatpush1.msra.mxu0 0.0
      %2207 = vmatprep.subr.mxu0 %v2066
      %2208 = vmatpush1.msra.mxu0 %v2065
      %2209 = vmatprep.subr.mxu0 %v2061
      %2210 = vmatpush1.msra.mxu0 %v2060
      %2211 = vmatprep.subr.mxu0 0.0
      %2212 = vmatpush2.msra.mxu0 0.0
      %2213 = vmatprep.subr.mxu0 0.0
      %2214 = vmatpush2.msra.mxu0 0.0
      %2215 = vmatprep.subr.mxu0 0.0
      %2216 = vmatpush2.msra.mxu0 0.0
      %2217 = vmatprep.subr.mxu0 0.0
      %2218 = vmatpush2.msra.mxu0 0.0
      %2219 = vmatprep.subr.mxu0 0.0
      %2220 = vmatpush2.msra.mxu0 0.0
      %2221 = vmatprep.subr.mxu0 0.0
      %2222 = vmatpush2.msra.mxu0 0.0
      %2223 = vmatprep.subr.mxu0 0.0
      %2224 = vmatpush2.msra.mxu0 0.0
      %2225 = vmatprep.subr.mxu0 0.0
      %2226 = vmatpush2.msra.mxu0 0.0
      %2227 = vmatprep.subr.mxu0 0.0
      %2228 = vmatpush2.msra.mxu0 0.0
      %2229 = vmatprep.subr.mxu0 0.0
      %2230 = vmatpush2.msra.mxu0 0.0
      %2231 = vmatprep.subr.mxu0 0.0
      %2232 = vmatpush2.msra.mxu0 0.0
      %2233 = vmatprep.subr.mxu0 0.0
      %2234 = vmatpush2.msra.mxu0 0.0
      %2235 = vmatprep.subr.mxu0 0.0
      %2236 = vmatpush2.msra.mxu0 0.0
      %2237 = vmatprep.subr.mxu0 0.0
      %2238 = vmatpush2.msra.mxu0 0.0
      %2239 = vmatprep.subr.mxu0 0.0
      %2240 = vmatpush2.msra.mxu0 0.0
      %2241 = vmatprep.subr.mxu0 0.0
      %2242 = vmatpush2.msra.mxu0 0.0
      %2243 = vmatprep.mubr.f32.mxu0 0.0
      %2244 = vmatmul.mubr.f32.gmra.mxu0 %v2079
      %v2245 = vpop.f32.mrf.mxu0
      %v2246 = vadd.f32 0.0, %v2245
      %v2247 = vpop.f32.mrf.mxu0
      %v2248 = vadd.f32 0.0, %v2247
      %2249 = vmatprep.mubr.f32.mxu0 0.0
      %2250 = vmatmul.mubr.f32.gmra.mxu0 %v2082
      %v2251 = vpop.f32.mrf.mxu0
      %v2252 = vadd.f32 0.0, %v2251
      %v2253 = vpop.f32.mrf.mxu0
      %v2254 = vadd.f32 0.0, %v2253
      %2255 = vmatprep.mubr.f32.mxu0 0.0
      %2256 = vmatmul.mubr.f32.gmra.mxu0 %v2085
      %v2257 = vpop.f32.mrf.mxu0
      %v2258 = vadd.f32 0.0, %v2257
      %v2259 = vpop.f32.mrf.mxu0
      %v2260 = vadd.f32 0.0, %v2259
      %2261 = vmatprep.mubr.f32.mxu0 0.0
      %2262 = vmatmul.mubr.f32.gmra.mxu0 %v2088
      %v2263 = vpop.f32.mrf.mxu0
      %v2264 = vadd.f32 0.0, %v2263
      %v2265 = vpop.f32.mrf.mxu0
      %v2266 = vadd.f32 0.0, %v2265
      %2267 = vdwg.mxu0
      %2268 = vmatprep.subr.mxu0 0.0
      %2269 = vmatpush1.msra.mxu0 0.0
      %2270 = vmatprep.subr.mxu0 0.0
      %2271 = vmatpush1.msra.mxu0 0.0
      %2272 = vmatprep.subr.mxu0 0.0
      %2273 = vmatpush1.msra.mxu0 0.0
      %2274 = vmatprep.subr.mxu0 0.0
      %2275 = vmatpush1.msra.mxu0 0.0
      %2276 = vmatprep.subr.mxu0 0.0
      %2277 = vmatpush1.msra.mxu0 0.0
      %2278 = vmatprep.subr.mxu0 0.0
      %2279 = vmatpush1.msra.mxu0 0.0
      %2280 = vmatprep.subr.mxu0 0.0
      %2281 = vmatpush1.msra.mxu0 0.0
      %2282 = vmatprep.subr.mxu0 0.0
      %2283 = vmatpush1.msra.mxu0 0.0
      %2284 = vmatprep.subr.mxu0 0.0
      %2285 = vmatpush1.msra.mxu0 0.0
      %2286 = vmatprep.subr.mxu0 0.0
      %2287 = vmatpush1.msra.mxu0 0.0
      %2288 = vmatprep.subr.mxu0 0.0
      %2289 = vmatpush1.msra.mxu0 0.0
      %2290 = vmatprep.subr.mxu0 0.0
      %2291 = vmatpush1.msra.mxu0 0.0
      %2292 = vmatprep.subr.mxu0 0.0
      %2293 = vmatpush1.msra.mxu0 0.0
      %2294 = vmatprep.subr.mxu0 0.0
      %2295 = vmatpush1.msra.mxu0 0.0
      %2296 = vmatprep.subr.mxu0 0.0
      %2297 = vmatpush1.msra.mxu0 %v2067
      %2298 = vmatprep.subr.mxu0 0.0
      %2299 = vmatpush1.msra.mxu0 %v2062
      %2300 = vmatprep.subr.mxu0 0.0
      %2301 = vmatpush2.msra.mxu0 0.0
      %2302 = vmatprep.subr.mxu0 0.0
      %2303 = vmatpush2.msra.mxu0 0.0
      %2304 = vmatprep.subr.mxu0 0.0
      %2305 = vmatpush2.msra.mxu0 0.0
      %2306 = vmatprep.subr.mxu0 0.0
      %2307 = vmatpush2.msra.mxu0 0.0
      %2308 = vmatprep.subr.mxu0 0.0
      %2309 = vmatpush2.msra.mxu0 0.0
      %2310 = vmatprep.subr.mxu0 0.0
      %2311 = vmatpush2.msra.mxu0 0.0
      %2312 = vmatprep.subr.mxu0 0.0
      %2313 = vmatpush2.msra.mxu0 0.0
      %2314 = vmatprep.subr.mxu0 0.0
      %2315 = vmatpush2.msra.mxu0 0.0
      %2316 = vmatprep.subr.mxu0 0.0
      %2317 = vmatpush2.msra.mxu0 0.0
      %2318 = vmatprep.subr.mxu0 0.0
      %2319 = vmatpush2.msra.mxu0 0.0
      %2320 = vmatprep.subr.mxu0 0.0
      %2321 = vmatpush2.msra.mxu0 0.0
      %2322 = vmatprep.subr.mxu0 0.0
      %2323 = vmatpush2.msra.mxu0 0.0
      %2324 = vmatprep.subr.mxu0 0.0
      %2325 = vmatpush2.msra.mxu0 0.0
      %2326 = vmatprep.subr.mxu0 0.0
      %2327 = vmatpush2.msra.mxu0 0.0
      %2328 = vmatprep.subr.mxu0 0.0
      %2329 = vmatpush2.msra.mxu0 0.0
      %2330 = vmatprep.subr.mxu0 0.0
      %2331 = vmatpush2.msra.mxu0 0.0
      %2332 = vmatprep.mubr.f32.mxu0 0.0
      %2333 = vmatmul.mubr.f32.gmra.mxu0 %v2079
      %v2334 = vpop.f32.mrf.mxu0
      %v2335 = vadd.f32 0.0, %v2334
      %v2336 = vpop.f32.mrf.mxu0
      %2337 = vmatprep.mubr.f32.mxu0 0.0
      %2338 = vmatmul.mubr.f32.gmra.mxu0 %v2082
      %v2339 = vpop.f32.mrf.mxu0
      %v2340 = vadd.f32 0.0, %v2339
      %v2341 = vpop.f32.mrf.mxu0
      %2342 = vmatprep.mubr.f32.mxu0 0.0
      %2343 = vmatmul.mubr.f32.gmra.mxu0 %v2085
      %v2344 = vpop.f32.mrf.mxu0
      %v2345 = vadd.f32 0.0, %v2344
      %v2346 = vpop.f32.mrf.mxu0
      %2347 = vmatprep.mubr.f32.mxu0 0.0
      %2348 = vmatmul.mubr.f32.gmra.mxu0 %v2088
      %v2349 = vpop.f32.mrf.mxu0
      %v2350 = vadd.f32 0.0, %v2349
      %v2351 = vpop.f32.mrf.mxu0
      %2352 = vdwg.mxu0
      %v2353 = vadd.f32 %v1833, %v2157
      %v2354 = vadd.f32 %v1835, %v2159
      %v2355 = vadd.f32 %v1922, %v2246
      %v2356 = vadd.f32 %v1924, %v2248
      %v2357 = vadd.f32 %v2011, %v2335
      %v2358 = vadd.f32 %v1839, %v2163
      %v2359 = vadd.f32 %v1841, %v2165
      %v2360 = vadd.f32 %v1928, %v2252
      %v2361 = vadd.f32 %v1930, %v2254
      %v2362 = vadd.f32 %v2016, %v2340
      %v2363 = vadd.f32 %v1845, %v2169
      %v2364 = vadd.f32 %v1847, %v2171
      %v2365 = vadd.f32 %v1934, %v2258
      %v2366 = vadd.f32 %v1936, %v2260
      %v2367 = vadd.f32 %v2021, %v2345
      %v2368 = vadd.f32 %v1851, %v2175
      %v2369 = vadd.f32 %v1853, %v2177
      %v2370 = vadd.f32 %v1940, %v2264
      %v2371 = vadd.f32 %v1942, %v2266
      %v2372 = vadd.f32 %v2026, %v2350
      %s2373 = scalar_lea.vmem %s3, 96
      %v2374 = vld [vmem:[%s2373] sm:$0xff]
      %v2375 = vld [vmem:[%s2373 + $0x8] sm:$0xff]
      %v2376 = vld [vmem:[%s2373 + $0x10] sm:$0xff]
      %v2377 = vld [vmem:[%s2373 + $0x18] sm:$0xff]
      %2378 = vrot.lane.b32.xlu0 %v1410, 102
      %v2379 = vpop.permute.xlu0 %2378
      %2380 = vrot.lane.b32.xlu0 %v1411, 102
      %v2381 = vpop.permute.xlu0 %2380
      %2382 = vrot.lane.b32.xlu0 %v1412, 102
      %v2383 = vpop.permute.xlu0 %2382
      %2384 = vrot.lane.b32.xlu0 %v1413, 102
      %v2385 = vpop.permute.xlu0 %2384
      %2386 = vrot.lane.b32.xlu0 %v1414, 102
      %v2387 = vpop.permute.xlu0 %2386
      %2388 = vrot.lane.b32.xlu0 %v1415, 102
      %v2389 = vpop.permute.xlu0 %2388
      %2390 = vrot.lane.b32.xlu0 %v1416, 102
      %v2391 = vpop.permute.xlu0 %2390
      %2392 = vrot.lane.b32.xlu0 %v1417, 102
      %v2393 = vpop.permute.xlu0 %2392
      %2394 = vrot.lane.b32.xlu0 %v1418, 102
      %v2395 = vpop.permute.xlu0 %2394
      %2396 = vrot.lane.b32.xlu0 %v1419, 102
      %v2397 = vpop.permute.xlu0 %2396
      %2398 = vrot.lane.b32.xlu0 %v1420, 102
      %v2399 = vpop.permute.xlu0 %2398
      %2400 = vrot.lane.b32.xlu0 %v1421, 102
      %v2401 = vpop.permute.xlu0 %2400
      %v2402 = vsel %vm837, %v2379, %v2381
      %v2403 = vsel %vm837, %v2381, %v2383
      %v2404 = vsel %vm837, %v2383, %v2385
      %v2405 = vsel %vm837, %v2385, %v2387
      %v2406 = vsel %vm837, %v2387, %v2389
      %v2407 = vsel %vm837, %v2391, %v2393
      %v2408 = vsel %vm837, %v2393, %v2395
      %v2409 = vsel %vm837, %v2395, %v2397
      %v2410 = vsel %vm837, %v2397, %v2399
      %v2411 = vsel %vm837, %v2399, %v2401
      %v2423 = vsel %vm1478, %v2374, 0
      %v2426 = vsel %vm1478, %v2375, 0
      %v2429 = vsel %vm1478, %v2376, 0
      %v2432 = vsel %vm1478, %v2377, 0
      %2434 = vmatprep.subr.mxu0 0.0
      %2435 = vmatpush1.msra.mxu0 0.0
      %2436 = vmatprep.subr.mxu0 0.0
      %2437 = vmatpush1.msra.mxu0 0.0
      %2438 = vmatprep.subr.mxu0 0.0
      %2439 = vmatpush1.msra.mxu0 0.0
      %2440 = vmatprep.subr.mxu0 0.0
      %2441 = vmatpush1.msra.mxu0 0.0
      %2442 = vmatprep.subr.mxu0 0.0
      %2443 = vmatpush1.msra.mxu0 0.0
      %2444 = vmatprep.subr.mxu0 0.0
      %2445 = vmatpush1.msra.mxu0 0.0
      %2446 = vmatprep.subr.mxu0 0.0
      %2447 = vmatpush1.msra.mxu0 0.0
      %2448 = vmatprep.subr.mxu0 0.0
      %2449 = vmatpush1.msra.mxu0 0.0
      %2450 = vmatprep.subr.mxu0 0.0
      %2451 = vmatpush1.msra.mxu0 0.0
      %2452 = vmatprep.subr.mxu0 0.0
      %2453 = vmatpush1.msra.mxu0 0.0
      %2454 = vmatprep.subr.mxu0 0.0
      %2455 = vmatpush1.msra.mxu0 0.0
      %2456 = vmatprep.subr.mxu0 0.0
      %2457 = vmatpush1.msra.mxu0 0.0
      %2458 = vmatprep.subr.mxu0 0.0
      %2459 = vmatpush1.msra.mxu0 0.0
      %2460 = vmatprep.subr.mxu0 0.0
      %2461 = vmatpush1.msra.mxu0 0.0
      %2462 = vmatprep.subr.mxu0 %v2408
      %2463 = vmatpush1.msra.mxu0 %v2407
      %2464 = vmatprep.subr.mxu0 %v2403
      %2465 = vmatpush1.msra.mxu0 %v2402
      %2466 = vmatprep.subr.mxu0 0.0
      %2467 = vmatpush2.msra.mxu0 0.0
      %2468 = vmatprep.subr.mxu0 0.0
      %2469 = vmatpush2.msra.mxu0 0.0
      %2470 = vmatprep.subr.mxu0 0.0
      %2471 = vmatpush2.msra.mxu0 0.0
      %2472 = vmatprep.subr.mxu0 0.0
      %2473 = vmatpush2.msra.mxu0 0.0
      %2474 = vmatprep.subr.mxu0 0.0
      %2475 = vmatpush2.msra.mxu0 0.0
      %2476 = vmatprep.subr.mxu0 0.0
      %2477 = vmatpush2.msra.mxu0 0.0
      %2478 = vmatprep.subr.mxu0 0.0
      %2479 = vmatpush2.msra.mxu0 0.0
      %2480 = vmatprep.subr.mxu0 0.0
      %2481 = vmatpush2.msra.mxu0 0.0
      %2482 = vmatprep.subr.mxu0 0.0
      %2483 = vmatpush2.msra.mxu0 0.0
      %2484 = vmatprep.subr.mxu0 0.0
      %2485 = vmatpush2.msra.mxu0 0.0
      %2486 = vmatprep.subr.mxu0 0.0
      %2487 = vmatpush2.msra.mxu0 0.0
      %2488 = vmatprep.subr.mxu0 0.0
      %2489 = vmatpush2.msra.mxu0 0.0
      %2490 = vmatprep.subr.mxu0 0.0
      %2491 = vmatpush2.msra.mxu0 0.0
      %2492 = vmatprep.subr.mxu0 0.0
      %2493 = vmatpush2.msra.mxu0 0.0
      %2494 = vmatprep.subr.mxu0 0.0
      %2495 = vmatpush2.msra.mxu0 0.0
      %2496 = vmatprep.subr.mxu0 0.0
      %2497 = vmatpush2.msra.mxu0 0.0
      %2498 = vmatprep.mubr.f32.mxu0 0.0
      %2499 = vmatmul.mubr.f32.gmra.mxu0 %v2423
      %v2500 = vpop.f32.mrf.mxu0
      %v2501 = vadd.f32 0.0, %v2500
      %v2502 = vpop.f32.mrf.mxu0
      %v2503 = vadd.f32 0.0, %v2502
      %2504 = vmatprep.mubr.f32.mxu0 0.0
      %2505 = vmatmul.mubr.f32.gmra.mxu0 %v2426
      %v2506 = vpop.f32.mrf.mxu0
      %v2507 = vadd.f32 0.0, %v2506
      %v2508 = vpop.f32.mrf.mxu0
      %v2509 = vadd.f32 0.0, %v2508
      %2510 = vmatprep.mubr.f32.mxu0 0.0
      %2511 = vmatmul.mubr.f32.gmra.mxu0 %v2429
      %v2512 = vpop.f32.mrf.mxu0
      %v2513 = vadd.f32 0.0, %v2512
      %v2514 = vpop.f32.mrf.mxu0
      %v2515 = vadd.f32 0.0, %v2514
      %2516 = vmatprep.mubr.f32.mxu0 0.0
      %2517 = vmatmul.mubr.f32.gmra.mxu0 %v2432
      %v2518 = vpop.f32.mrf.mxu0
      %v2519 = vadd.f32 0.0, %v2518
      %v2520 = vpop.f32.mrf.mxu0
      %v2521 = vadd.f32 0.0, %v2520
      %2522 = vdwg.mxu0
      %2523 = vmatprep.subr.mxu0 0.0
      %2524 = vmatpush1.msra.mxu0 0.0
      %2525 = vmatprep.subr.mxu0 0.0
      %2526 = vmatpush1.msra.mxu0 0.0
      %2527 = vmatprep.subr.mxu0 0.0
      %2528 = vmatpush1.msra.mxu0 0.0
      %2529 = vmatprep.subr.mxu0 0.0
      %2530 = vmatpush1.msra.mxu0 0.0
      %2531 = vmatprep.subr.mxu0 0.0
      %2532 = vmatpush1.msra.mxu0 0.0
      %2533 = vmatprep.subr.mxu0 0.0
      %2534 = vmatpush1.msra.mxu0 0.0
      %2535 = vmatprep.subr.mxu0 0.0
      %2536 = vmatpush1.msra.mxu0 0.0
      %2537 = vmatprep.subr.mxu0 0.0
      %2538 = vmatpush1.msra.mxu0 0.0
      %2539 = vmatprep.subr.mxu0 0.0
      %2540 = vmatpush1.msra.mxu0 0.0
      %2541 = vmatprep.subr.mxu0 0.0
      %2542 = vmatpush1.msra.mxu0 0.0
      %2543 = vmatprep.subr.mxu0 0.0
      %2544 = vmatpush1.msra.mxu0 0.0
      %2545 = vmatprep.subr.mxu0 0.0
      %2546 = vmatpush1.msra.mxu0 0.0
      %2547 = vmatprep.subr.mxu0 0.0
      %2548 = vmatpush1.msra.mxu0 0.0
      %2549 = vmatprep.subr.mxu0 0.0
      %2550 = vmatpush1.msra.mxu0 0.0
      %2551 = vmatprep.subr.mxu0 %v2410
      %2552 = vmatpush1.msra.mxu0 %v2409
      %2553 = vmatprep.subr.mxu0 %v2405
      %2554 = vmatpush1.msra.mxu0 %v2404
      %2555 = vmatprep.subr.mxu0 0.0
      %2556 = vmatpush2.msra.mxu0 0.0
      %2557 = vmatprep.subr.mxu0 0.0
      %2558 = vmatpush2.msra.mxu0 0.0
      %2559 = vmatprep.subr.mxu0 0.0
      %2560 = vmatpush2.msra.mxu0 0.0
      %2561 = vmatprep.subr.mxu0 0.0
      %2562 = vmatpush2.msra.mxu0 0.0
      %2563 = vmatprep.subr.mxu0 0.0
      %2564 = vmatpush2.msra.mxu0 0.0
      %2565 = vmatprep.subr.mxu0 0.0
      %2566 = vmatpush2.msra.mxu0 0.0
      %2567 = vmatprep.subr.mxu0 0.0
      %2568 = vmatpush2.msra.mxu0 0.0
      %2569 = vmatprep.subr.mxu0 0.0
      %2570 = vmatpush2.msra.mxu0 0.0
      %2571 = vmatprep.subr.mxu0 0.0
      %2572 = vmatpush2.msra.mxu0 0.0
      %2573 = vmatprep.subr.mxu0 0.0
      %2574 = vmatpush2.msra.mxu0 0.0
      %2575 = vmatprep.subr.mxu0 0.0
      %2576 = vmatpush2.msra.mxu0 0.0
      %2577 = vmatprep.subr.mxu0 0.0
      %2578 = vmatpush2.msra.mxu0 0.0
      %2579 = vmatprep.subr.mxu0 0.0
      %2580 = vmatpush2.msra.mxu0 0.0
      %2581 = vmatprep.subr.mxu0 0.0
      %2582 = vmatpush2.msra.mxu0 0.0
      %2583 = vmatprep.subr.mxu0 0.0
      %2584 = vmatpush2.msra.mxu0 0.0
      %2585 = vmatprep.subr.mxu0 0.0
      %2586 = vmatpush2.msra.mxu0 0.0
      %2587 = vmatprep.mubr.f32.mxu0 0.0
      %2588 = vmatmul.mubr.f32.gmra.mxu0 %v2423
      %v2589 = vpop.f32.mrf.mxu0
      %v2590 = vadd.f32 0.0, %v2589
      %v2591 = vpop.f32.mrf.mxu0
      %v2592 = vadd.f32 0.0, %v2591
      %2593 = vmatprep.mubr.f32.mxu0 0.0
      %2594 = vmatmul.mubr.f32.gmra.mxu0 %v2426
      %v2595 = vpop.f32.mrf.mxu0
      %v2596 = vadd.f32 0.0, %v2595
      %v2597 = vpop.f32.mrf.mxu0
      %v2598 = vadd.f32 0.0, %v2597
      %2599 = vmatprep.mubr.f32.mxu0 0.0
      %2600 = vmatmul.mubr.f32.gmra.mxu0 %v2429
      %v2601 = vpop.f32.mrf.mxu0
      %v2602 = vadd.f32 0.0, %v2601
      %v2603 = vpop.f32.mrf.mxu0
      %v2604 = vadd.f32 0.0, %v2603
      %2605 = vmatprep.mubr.f32.mxu0 0.0
      %2606 = vmatmul.mubr.f32.gmra.mxu0 %v2432
      %v2607 = vpop.f32.mrf.mxu0
      %v2608 = vadd.f32 0.0, %v2607
      %v2609 = vpop.f32.mrf.mxu0
      %v2610 = vadd.f32 0.0, %v2609
      %2611 = vdwg.mxu0
      %2612 = vmatprep.subr.mxu0 0.0
      %2613 = vmatpush1.msra.mxu0 0.0
      %2614 = vmatprep.subr.mxu0 0.0
      %2615 = vmatpush1.msra.mxu0 0.0
      %2616 = vmatprep.subr.mxu0 0.0
      %2617 = vmatpush1.msra.mxu0 0.0
      %2618 = vmatprep.subr.mxu0 0.0
      %2619 = vmatpush1.msra.mxu0 0.0
      %2620 = vmatprep.subr.mxu0 0.0
      %2621 = vmatpush1.msra.mxu0 0.0
      %2622 = vmatprep.subr.mxu0 0.0
      %2623 = vmatpush1.msra.mxu0 0.0
      %2624 = vmatprep.subr.mxu0 0.0
      %2625 = vmatpush1.msra.mxu0 0.0
      %2626 = vmatprep.subr.mxu0 0.0
      %2627 = vmatpush1.msra.mxu0 0.0
      %2628 = vmatprep.subr.mxu0 0.0
      %2629 = vmatpush1.msra.mxu0 0.0
      %2630 = vmatprep.subr.mxu0 0.0
      %2631 = vmatpush1.msra.mxu0 0.0
      %2632 = vmatprep.subr.mxu0 0.0
      %2633 = vmatpush1.msra.mxu0 0.0
      %2634 = vmatprep.subr.mxu0 0.0
      %2635 = vmatpush1.msra.mxu0 0.0
      %2636 = vmatprep.subr.mxu0 0.0
      %2637 = vmatpush1.msra.mxu0 0.0
      %2638 = vmatprep.subr.mxu0 0.0
      %2639 = vmatpush1.msra.mxu0 0.0
      %2640 = vmatprep.subr.mxu0 0.0
      %2641 = vmatpush1.msra.mxu0 %v2411
      %2642 = vmatprep.subr.mxu0 0.0
      %2643 = vmatpush1.msra.mxu0 %v2406
      %2644 = vmatprep.subr.mxu0 0.0
      %2645 = vmatpush2.msra.mxu0 0.0
      %2646 = vmatprep.subr.mxu0 0.0
      %2647 = vmatpush2.msra.mxu0 0.0
      %2648 = vmatprep.subr.mxu0 0.0
      %2649 = vmatpush2.msra.mxu0 0.0
      %2650 = vmatprep.subr.mxu0 0.0
      %2651 = vmatpush2.msra.mxu0 0.0
      %2652 = vmatprep.subr.mxu0 0.0
      %2653 = vmatpush2.msra.mxu0 0.0
      %2654 = vmatprep.subr.mxu0 0.0
      %2655 = vmatpush2.msra.mxu0 0.0
      %2656 = vmatprep.subr.mxu0 0.0
      %2657 = vmatpush2.msra.mxu0 0.0
      %2658 = vmatprep.subr.mxu0 0.0
      %2659 = vmatpush2.msra.mxu0 0.0
      %2660 = vmatprep.subr.mxu0 0.0
      %2661 = vmatpush2.msra.mxu0 0.0
      %2662 = vmatprep.subr.mxu0 0.0
      %2663 = vmatpush2.msra.mxu0 0.0
      %2664 = vmatprep.subr.mxu0 0.0
      %2665 = vmatpush2.msra.mxu0 0.0
      %2666 = vmatprep.subr.mxu0 0.0
      %2667 = vmatpush2.msra.mxu0 0.0
      %2668 = vmatprep.subr.mxu0 0.0
      %2669 = vmatpush2.msra.mxu0 0.0
      %2670 = vmatprep.subr.mxu0 0.0
      %2671 = vmatpush2.msra.mxu0 0.0
      %2672 = vmatprep.subr.mxu0 0.0
      %2673 = vmatpush2.msra.mxu0 0.0
      %2674 = vmatprep.subr.mxu0 0.0
      %2675 = vmatpush2.msra.mxu0 0.0
      %2676 = vmatprep.mubr.f32.mxu0 0.0
      %2677 = vmatmul.mubr.f32.gmra.mxu0 %v2423
      %v2678 = vpop.f32.mrf.mxu0
      %v2679 = vadd.f32 0.0, %v2678
      %v2680 = vpop.f32.mrf.mxu0
      %2681 = vmatprep.mubr.f32.mxu0 0.0
      %2682 = vmatmul.mubr.f32.gmra.mxu0 %v2426
      %v2683 = vpop.f32.mrf.mxu0
      %v2684 = vadd.f32 0.0, %v2683
      %v2685 = vpop.f32.mrf.mxu0
      %2686 = vmatprep.mubr.f32.mxu0 0.0
      %2687 = vmatmul.mubr.f32.gmra.mxu0 %v2429
      %v2688 = vpop.f32.mrf.mxu0
      %v2689 = vadd.f32 0.0, %v2688
      %v2690 = vpop.f32.mrf.mxu0
      %2691 = vmatprep.mubr.f32.mxu0 0.0
      %2692 = vmatmul.mubr.f32.gmra.mxu0 %v2432
      %v2693 = vpop.f32.mrf.mxu0
      %v2694 = vadd.f32 0.0, %v2693
      %v2695 = vpop.f32.mrf.mxu0
      %2696 = vdwg.mxu0
      %v2697 = vadd.f32 %v2353, %v2501
      %v2698 = vadd.f32 %v2354, %v2503
      %v2699 = vadd.f32 %v2355, %v2590
      %v2700 = vadd.f32 %v2356, %v2592
      %v2701 = vadd.f32 %v2357, %v2679
      %v2702 = vadd.f32 %v2358, %v2507
      %v2703 = vadd.f32 %v2359, %v2509
      %v2704 = vadd.f32 %v2360, %v2596
      %v2705 = vadd.f32 %v2361, %v2598
      %v2706 = vadd.f32 %v2362, %v2684
      %v2707 = vadd.f32 %v2363, %v2513
      %v2708 = vadd.f32 %v2364, %v2515
      %v2709 = vadd.f32 %v2365, %v2602
      %v2710 = vadd.f32 %v2366, %v2604
      %v2711 = vadd.f32 %v2367, %v2689
      %v2712 = vadd.f32 %v2368, %v2519
      %v2713 = vadd.f32 %v2369, %v2521
      %v2714 = vadd.f32 %v2370, %v2608
      %v2715 = vadd.f32 %v2371, %v2610
      %v2716 = vadd.f32 %v2372, %v2694
      %s2717 = scalar_lea.vmem %s3, 128
      %v2718 = vld [vmem:[%s2717] sm:$0xff]
      %v2719 = vld [vmem:[%s2717 + $0x8] sm:$0xff]
      %v2720 = vld [vmem:[%s2717 + $0x10] sm:$0xff]
      %v2721 = vld [vmem:[%s2717 + $0x18] sm:$0xff]
      %2722 = vrot.lane.b32.xlu0 %v1410, 101
      %v2723 = vpop.permute.xlu0 %2722
      %2724 = vrot.lane.b32.xlu0 %v1411, 101
      %v2725 = vpop.permute.xlu0 %2724
      %2726 = vrot.lane.b32.xlu0 %v1412, 101
      %v2727 = vpop.permute.xlu0 %2726
      %2728 = vrot.lane.b32.xlu0 %v1413, 101
      %v2729 = vpop.permute.xlu0 %2728
      %2730 = vrot.lane.b32.xlu0 %v1414, 101
      %v2731 = vpop.permute.xlu0 %2730
      %2732 = vrot.lane.b32.xlu0 %v1415, 101
      %v2733 = vpop.permute.xlu0 %2732
      %2734 = vrot.lane.b32.xlu0 %v1416, 101
      %v2735 = vpop.permute.xlu0 %2734
      %2736 = vrot.lane.b32.xlu0 %v1417, 101
      %v2737 = vpop.permute.xlu0 %2736
      %2738 = vrot.lane.b32.xlu0 %v1418, 101
      %v2739 = vpop.permute.xlu0 %2738
      %2740 = vrot.lane.b32.xlu0 %v1419, 101
      %v2741 = vpop.permute.xlu0 %2740
      %2742 = vrot.lane.b32.xlu0 %v1420, 101
      %v2743 = vpop.permute.xlu0 %2742
      %2744 = vrot.lane.b32.xlu0 %v1421, 101
      %v2745 = vpop.permute.xlu0 %2744
      %v2746 = vsel %vm938, %v2723, %v2725
      %v2747 = vsel %vm938, %v2725, %v2727
      %v2748 = vsel %vm938, %v2727, %v2729
      %v2749 = vsel %vm938, %v2729, %v2731
      %v2750 = vsel %vm938, %v2731, %v2733
      %v2751 = vsel %vm938, %v2735, %v2737
      %v2752 = vsel %vm938, %v2737, %v2739
      %v2753 = vsel %vm938, %v2739, %v2741
      %v2754 = vsel %vm938, %v2741, %v2743
      %v2755 = vsel %vm938, %v2743, %v2745
      %v2767 = vsel %vm1478, %v2718, 0
      %v2770 = vsel %vm1478, %v2719, 0
      %v2773 = vsel %vm1478, %v2720, 0
      %v2776 = vsel %vm1478, %v2721, 0
      %2778 = vmatprep.subr.mxu0 0.0
      %2779 = vmatpush1.msra.mxu0 0.0
      %2780 = vmatprep.subr.mxu0 0.0
      %2781 = vmatpush1.msra.mxu0 0.0
      %2782 = vmatprep.subr.mxu0 0.0
      %2783 = vmatpush1.msra.mxu0 0.0
      %2784 = vmatprep.subr.mxu0 0.0
      %2785 = vmatpush1.msra.mxu0 0.0
      %2786 = vmatprep.subr.mxu0 0.0
      %2787 = vmatpush1.msra.mxu0 0.0
      %2788 = vmatprep.subr.mxu0 0.0
      %2789 = vmatpush1.msra.mxu0 0.0
      %2790 = vmatprep.subr.mxu0 0.0
      %2791 = vmatpush1.msra.mxu0 0.0
      %2792 = vmatprep.subr.mxu0 0.0
      %2793 = vmatpush1.msra.mxu0 0.0
      %2794 = vmatprep.subr.mxu0 0.0
      %2795 = vmatpush1.msra.mxu0 0.0
      %2796 = vmatprep.subr.mxu0 0.0
      %2797 = vmatpush1.msra.mxu0 0.0
      %2798 = vmatprep.subr.mxu0 0.0
      %2799 = vmatpush1.msra.mxu0 0.0
      %2800 = vmatprep.subr.mxu0 0.0
      %2801 = vmatpush1.msra.mxu0 0.0
      %2802 = vmatprep.subr.mxu0 0.0
      %2803 = vmatpush1.msra.mxu0 0.0
      %2804 = vmatprep.subr.mxu0 0.0
      %2805 = vmatpush1.msra.mxu0 0.0
      %2806 = vmatprep.subr.mxu0 %v2752
      %2807 = vmatpush1.msra.mxu0 %v2751
      %2808 = vmatprep.subr.mxu0 %v2747
      %2809 = vmatpush1.msra.mxu0 %v2746
      %2810 = vmatprep.subr.mxu0 0.0
      %2811 = vmatpush2.msra.mxu0 0.0
      %2812 = vmatprep.subr.mxu0 0.0
      %2813 = vmatpush2.msra.mxu0 0.0
      %2814 = vmatprep.subr.mxu0 0.0
      %2815 = vmatpush2.msra.mxu0 0.0
      %2816 = vmatprep.subr.mxu0 0.0
      %2817 = vmatpush2.msra.mxu0 0.0
      %2818 = vmatprep.subr.mxu0 0.0
      %2819 = vmatpush2.msra.mxu0 0.0
      %2820 = vmatprep.subr.mxu0 0.0
      %2821 = vmatpush2.msra.mxu0 0.0
      %2822 = vmatprep.subr.mxu0 0.0
      %2823 = vmatpush2.msra.mxu0 0.0
      %2824 = vmatprep.subr.mxu0 0.0
      %2825 = vmatpush2.msra.mxu0 0.0
      %2826 = vmatprep.subr.mxu0 0.0
      %2827 = vmatpush2.msra.mxu0 0.0
      %2828 = vmatprep.subr.mxu0 0.0
      %2829 = vmatpush2.msra.mxu0 0.0
      %2830 = vmatprep.subr.mxu0 0.0
      %2831 = vmatpush2.msra.mxu0 0.0
      %2832 = vmatprep.subr.mxu0 0.0
      %2833 = vmatpush2.msra.mxu0 0.0
      %2834 = vmatprep.subr.mxu0 0.0
      %2835 = vmatpush2.msra.mxu0 0.0
      %2836 = vmatprep.subr.mxu0 0.0
      %2837 = vmatpush2.msra.mxu0 0.0
      %2838 = vmatprep.subr.mxu0 0.0
      %2839 = vmatpush2.msra.mxu0 0.0
      %2840 = vmatprep.subr.mxu0 0.0
      %2841 = vmatpush2.msra.mxu0 0.0
      %2842 = vmatprep.mubr.f32.mxu0 0.0
      %2843 = vmatmul.mubr.f32.gmra.mxu0 %v2767
      %v2844 = vpop.f32.mrf.mxu0
      %v2845 = vadd.f32 0.0, %v2844
      %v2846 = vpop.f32.mrf.mxu0
      %v2847 = vadd.f32 0.0, %v2846
      %2848 = vmatprep.mubr.f32.mxu0 0.0
      %2849 = vmatmul.mubr.f32.gmra.mxu0 %v2770
      %v2850 = vpop.f32.mrf.mxu0
      %v2851 = vadd.f32 0.0, %v2850
      %v2852 = vpop.f32.mrf.mxu0
      %v2853 = vadd.f32 0.0, %v2852
      %2854 = vmatprep.mubr.f32.mxu0 0.0
      %2855 = vmatmul.mubr.f32.gmra.mxu0 %v2773
      %v2856 = vpop.f32.mrf.mxu0
      %v2857 = vadd.f32 0.0, %v2856
      %v2858 = vpop.f32.mrf.mxu0
      %v2859 = vadd.f32 0.0, %v2858
      %2860 = vmatprep.mubr.f32.mxu0 0.0
      %2861 = vmatmul.mubr.f32.gmra.mxu0 %v2776
      %v2862 = vpop.f32.mrf.mxu0
      %v2863 = vadd.f32 0.0, %v2862
      %v2864 = vpop.f32.mrf.mxu0
      %v2865 = vadd.f32 0.0, %v2864
      %2866 = vdwg.mxu0
      %2867 = vmatprep.subr.mxu0 0.0
      %2868 = vmatpush1.msra.mxu0 0.0
      %2869 = vmatprep.subr.mxu0 0.0
      %2870 = vmatpush1.msra.mxu0 0.0
      %2871 = vmatprep.subr.mxu0 0.0
      %2872 = vmatpush1.msra.mxu0 0.0
      %2873 = vmatprep.subr.mxu0 0.0
      %2874 = vmatpush1.msra.mxu0 0.0
      %2875 = vmatprep.subr.mxu0 0.0
      %2876 = vmatpush1.msra.mxu0 0.0
      %2877 = vmatprep.subr.mxu0 0.0
      %2878 = vmatpush1.msra.mxu0 0.0
      %2879 = vmatprep.subr.mxu0 0.0
      %2880 = vmatpush1.msra.mxu0 0.0
      %2881 = vmatprep.subr.mxu0 0.0
      %2882 = vmatpush1.msra.mxu0 0.0
      %2883 = vmatprep.subr.mxu0 0.0
      %2884 = vmatpush1.msra.mxu0 0.0
      %2885 = vmatprep.subr.mxu0 0.0
      %2886 = vmatpush1.msra.mxu0 0.0
      %2887 = vmatprep.subr.mxu0 0.0
      %2888 = vmatpush1.msra.mxu0 0.0
      %2889 = vmatprep.subr.mxu0 0.0
      %2890 = vmatpush1.msra.mxu0 0.0
      %2891 = vmatprep.subr.mxu0 0.0
      %2892 = vmatpush1.msra.mxu0 0.0
      %2893 = vmatprep.subr.mxu0 0.0
      %2894 = vmatpush1.msra.mxu0 0.0
      %2895 = vmatprep.subr.mxu0 %v2754
      %2896 = vmatpush1.msra.mxu0 %v2753
      %2897 = vmatprep.subr.mxu0 %v2749
      %2898 = vmatpush1.msra.mxu0 %v2748
      %2899 = vmatprep.subr.mxu0 0.0
      %2900 = vmatpush2.msra.mxu0 0.0
      %2901 = vmatprep.subr.mxu0 0.0
      %2902 = vmatpush2.msra.mxu0 0.0
      %2903 = vmatprep.subr.mxu0 0.0
      %2904 = vmatpush2.msra.mxu0 0.0
      %2905 = vmatprep.subr.mxu0 0.0
      %2906 = vmatpush2.msra.mxu0 0.0
      %2907 = vmatprep.subr.mxu0 0.0
      %2908 = vmatpush2.msra.mxu0 0.0
      %2909 = vmatprep.subr.mxu0 0.0
      %2910 = vmatpush2.msra.mxu0 0.0
      %2911 = vmatprep.subr.mxu0 0.0
      %2912 = vmatpush2.msra.mxu0 0.0
      %2913 = vmatprep.subr.mxu0 0.0
      %2914 = vmatpush2.msra.mxu0 0.0
      %2915 = vmatprep.subr.mxu0 0.0
      %2916 = vmatpush2.msra.mxu0 0.0
      %2917 = vmatprep.subr.mxu0 0.0
      %2918 = vmatpush2.msra.mxu0 0.0
      %2919 = vmatprep.subr.mxu0 0.0
      %2920 = vmatpush2.msra.mxu0 0.0
      %2921 = vmatprep.subr.mxu0 0.0
      %2922 = vmatpush2.msra.mxu0 0.0
      %2923 = vmatprep.subr.mxu0 0.0
      %2924 = vmatpush2.msra.mxu0 0.0
      %2925 = vmatprep.subr.mxu0 0.0
      %2926 = vmatpush2.msra.mxu0 0.0
      %2927 = vmatprep.subr.mxu0 0.0
      %2928 = vmatpush2.msra.mxu0 0.0
      %2929 = vmatprep.subr.mxu0 0.0
      %2930 = vmatpush2.msra.mxu0 0.0
      %2931 = vmatprep.mubr.f32.mxu0 0.0
      %2932 = vmatmul.mubr.f32.gmra.mxu0 %v2767
      %v2933 = vpop.f32.mrf.mxu0
      %v2934 = vadd.f32 0.0, %v2933
      %v2935 = vpop.f32.mrf.mxu0
      %v2936 = vadd.f32 0.0, %v2935
      %2937 = vmatprep.mubr.f32.mxu0 0.0
      %2938 = vmatmul.mubr.f32.gmra.mxu0 %v2770
      %v2939 = vpop.f32.mrf.mxu0
      %v2940 = vadd.f32 0.0, %v2939
      %v2941 = vpop.f32.mrf.mxu0
      %v2942 = vadd.f32 0.0, %v2941
      %2943 = vmatprep.mubr.f32.mxu0 0.0
      %2944 = vmatmul.mubr.f32.gmra.mxu0 %v2773
      %v2945 = vpop.f32.mrf.mxu0
      %v2946 = vadd.f32 0.0, %v2945
      %v2947 = vpop.f32.mrf.mxu0
      %v2948 = vadd.f32 0.0, %v2947
      %2949 = vmatprep.mubr.f32.mxu0 0.0
      %2950 = vmatmul.mubr.f32.gmra.mxu0 %v2776
      %v2951 = vpop.f32.mrf.mxu0
      %v2952 = vadd.f32 0.0, %v2951
      %v2953 = vpop.f32.mrf.mxu0
      %v2954 = vadd.f32 0.0, %v2953
      %2955 = vdwg.mxu0
      %2956 = vmatprep.subr.mxu0 0.0
      %2957 = vmatpush1.msra.mxu0 0.0
      %2958 = vmatprep.subr.mxu0 0.0
      %2959 = vmatpush1.msra.mxu0 0.0
      %2960 = vmatprep.subr.mxu0 0.0
      %2961 = vmatpush1.msra.mxu0 0.0
      %2962 = vmatprep.subr.mxu0 0.0
      %2963 = vmatpush1.msra.mxu0 0.0
      %2964 = vmatprep.subr.mxu0 0.0
      %2965 = vmatpush1.msra.mxu0 0.0
      %2966 = vmatprep.subr.mxu0 0.0
      %2967 = vmatpush1.msra.mxu0 0.0
      %2968 = vmatprep.subr.mxu0 0.0
      %2969 = vmatpush1.msra.mxu0 0.0
      %2970 = vmatprep.subr.mxu0 0.0
      %2971 = vmatpush1.msra.mxu0 0.0
      %2972 = vmatprep.subr.mxu0 0.0
      %2973 = vmatpush1.msra.mxu0 0.0
      %2974 = vmatprep.subr.mxu0 0.0
      %2975 = vmatpush1.msra.mxu0 0.0
      %2976 = vmatprep.subr.mxu0 0.0
      %2977 = vmatpush1.msra.mxu0 0.0
      %2978 = vmatprep.subr.mxu0 0.0
      %2979 = vmatpush1.msra.mxu0 0.0
      %2980 = vmatprep.subr.mxu0 0.0
      %2981 = vmatpush1.msra.mxu0 0.0
      %2982 = vmatprep.subr.mxu0 0.0
      %2983 = vmatpush1.msra.mxu0 0.0
      %2984 = vmatprep.subr.mxu0 0.0
      %2985 = vmatpush1.msra.mxu0 %v2755
      %2986 = vmatprep.subr.mxu0 0.0
      %2987 = vmatpush1.msra.mxu0 %v2750
      %2988 = vmatprep.subr.mxu0 0.0
      %2989 = vmatpush2.msra.mxu0 0.0
      %2990 = vmatprep.subr.mxu0 0.0
      %2991 = vmatpush2.msra.mxu0 0.0
      %2992 = vmatprep.subr.mxu0 0.0
      %2993 = vmatpush2.msra.mxu0 0.0
      %2994 = vmatprep.subr.mxu0 0.0
      %2995 = vmatpush2.msra.mxu0 0.0
      %2996 = vmatprep.subr.mxu0 0.0
      %2997 = vmatpush2.msra.mxu0 0.0
      %2998 = vmatprep.subr.mxu0 0.0
      %2999 = vmatpush2.msra.mxu0 0.0
      %3000 = vmatprep.subr.mxu0 0.0
      %3001 = vmatpush2.msra.mxu0 0.0
      %3002 = vmatprep.subr.mxu0 0.0
      %3003 = vmatpush2.msra.mxu0 0.0
      %3004 = vmatprep.subr.mxu0 0.0
      %3005 = vmatpush2.msra.mxu0 0.0
      %3006 = vmatprep.subr.mxu0 0.0
      %3007 = vmatpush2.msra.mxu0 0.0
      %3008 = vmatprep.subr.mxu0 0.0
      %3009 = vmatpush2.msra.mxu0 0.0
      %3010 = vmatprep.subr.mxu0 0.0
      %3011 = vmatpush2.msra.mxu0 0.0
      %3012 = vmatprep.subr.mxu0 0.0
      %3013 = vmatpush2.msra.mxu0 0.0
      %3014 = vmatprep.subr.mxu0 0.0
      %3015 = vmatpush2.msra.mxu0 0.0
      %3016 = vmatprep.subr.mxu0 0.0
      %3017 = vmatpush2.msra.mxu0 0.0
      %3018 = vmatprep.subr.mxu0 0.0
      %3019 = vmatpush2.msra.mxu0 0.0
      %3020 = vmatprep.mubr.f32.mxu0 0.0
      %3021 = vmatmul.mubr.f32.gmra.mxu0 %v2767
      %v3022 = vpop.f32.mrf.mxu0
      %v3023 = vadd.f32 0.0, %v3022
      %v3024 = vpop.f32.mrf.mxu0
      %3025 = vmatprep.mubr.f32.mxu0 0.0
      %3026 = vmatmul.mubr.f32.gmra.mxu0 %v2770
      %v3027 = vpop.f32.mrf.mxu0
      %v3028 = vadd.f32 0.0, %v3027
      %v3029 = vpop.f32.mrf.mxu0
      %3030 = vmatprep.mubr.f32.mxu0 0.0
      %3031 = vmatmul.mubr.f32.gmra.mxu0 %v2773
      %v3032 = vpop.f32.mrf.mxu0
      %v3033 = vadd.f32 0.0, %v3032
      %v3034 = vpop.f32.mrf.mxu0
      %3035 = vmatprep.mubr.f32.mxu0 0.0
      %3036 = vmatmul.mubr.f32.gmra.mxu0 %v2776
      %v3037 = vpop.f32.mrf.mxu0
      %v3038 = vadd.f32 0.0, %v3037
      %v3039 = vpop.f32.mrf.mxu0
      %3040 = vdwg.mxu0
      %v3041 = vadd.f32 %v2697, %v2845
      %v3042 = vadd.f32 %v2698, %v2847
      %v3043 = vadd.f32 %v2699, %v2934
      %v3044 = vadd.f32 %v2700, %v2936
      %v3045 = vadd.f32 %v2701, %v3023
      %v3046 = vadd.f32 %v2702, %v2851
      %v3047 = vadd.f32 %v2703, %v2853
      %v3048 = vadd.f32 %v2704, %v2940
      %v3049 = vadd.f32 %v2705, %v2942
      %v3050 = vadd.f32 %v2706, %v3028
      %v3051 = vadd.f32 %v2707, %v2857
      %v3052 = vadd.f32 %v2708, %v2859
      %v3053 = vadd.f32 %v2709, %v2946
      %v3054 = vadd.f32 %v2710, %v2948
      %v3055 = vadd.f32 %v2711, %v3033
      %v3056 = vadd.f32 %v2712, %v2863
      %v3057 = vadd.f32 %v2713, %v2865
      %v3058 = vadd.f32 %v2714, %v2952
      %v3059 = vadd.f32 %v2715, %v2954
      %v3060 = vadd.f32 %v2716, %v3038
      %s3061 = scalar_lea.vmem %s3, 160
      %v3062 = vld [vmem:[%s3061] sm:$0xff]
      %v3063 = vld [vmem:[%s3061 + $0x8] sm:$0xff]
      %v3064 = vld [vmem:[%s3061 + $0x10] sm:$0xff]
      %v3065 = vld [vmem:[%s3061 + $0x18] sm:$0xff]
      %3066 = vrot.lane.b32.xlu0 %v1410, 100
      %v3067 = vpop.permute.xlu0 %3066
      %3068 = vrot.lane.b32.xlu0 %v1411, 100
      %v3069 = vpop.permute.xlu0 %3068
      %3070 = vrot.lane.b32.xlu0 %v1412, 100
      %v3071 = vpop.permute.xlu0 %3070
      %3072 = vrot.lane.b32.xlu0 %v1413, 100
      %v3073 = vpop.permute.xlu0 %3072
      %3074 = vrot.lane.b32.xlu0 %v1414, 100
      %v3075 = vpop.permute.xlu0 %3074
      %3076 = vrot.lane.b32.xlu0 %v1415, 100
      %v3077 = vpop.permute.xlu0 %3076
      %3078 = vrot.lane.b32.xlu0 %v1416, 100
      %v3079 = vpop.permute.xlu0 %3078
      %3080 = vrot.lane.b32.xlu0 %v1417, 100
      %v3081 = vpop.permute.xlu0 %3080
      %3082 = vrot.lane.b32.xlu0 %v1418, 100
      %v3083 = vpop.permute.xlu0 %3082
      %3084 = vrot.lane.b32.xlu0 %v1419, 100
      %v3085 = vpop.permute.xlu0 %3084
      %3086 = vrot.lane.b32.xlu0 %v1420, 100
      %v3087 = vpop.permute.xlu0 %3086
      %3088 = vrot.lane.b32.xlu0 %v1421, 100
      %v3089 = vpop.permute.xlu0 %3088
      %v3090 = vsel %vm1039, %v3067, %v3069
      %v3091 = vsel %vm1039, %v3069, %v3071
      %v3092 = vsel %vm1039, %v3071, %v3073
      %v3093 = vsel %vm1039, %v3073, %v3075
      %v3094 = vsel %vm1039, %v3075, %v3077
      %v3095 = vsel %vm1039, %v3079, %v3081
      %v3096 = vsel %vm1039, %v3081, %v3083
      %v3097 = vsel %vm1039, %v3083, %v3085
      %v3098 = vsel %vm1039, %v3085, %v3087
      %v3099 = vsel %vm1039, %v3087, %v3089
      %v3111 = vsel %vm1478, %v3062, 0
      %v3114 = vsel %vm1478, %v3063, 0
      %v3117 = vsel %vm1478, %v3064, 0
      %v3120 = vsel %vm1478, %v3065, 0
      %3122 = vmatprep.subr.mxu0 0.0
      %3123 = vmatpush1.msra.mxu0 0.0
      %3124 = vmatprep.subr.mxu0 0.0
      %3125 = vmatpush1.msra.mxu0 0.0
      %3126 = vmatprep.subr.mxu0 0.0
      %3127 = vmatpush1.msra.mxu0 0.0
      %3128 = vmatprep.subr.mxu0 0.0
      %3129 = vmatpush1.msra.mxu0 0.0
      %3130 = vmatprep.subr.mxu0 0.0
      %3131 = vmatpush1.msra.mxu0 0.0
      %3132 = vmatprep.subr.mxu0 0.0
      %3133 = vmatpush1.msra.mxu0 0.0
      %3134 = vmatprep.subr.mxu0 0.0
      %3135 = vmatpush1.msra.mxu0 0.0
      %3136 = vmatprep.subr.mxu0 0.0
      %3137 = vmatpush1.msra.mxu0 0.0
      %3138 = vmatprep.subr.mxu0 0.0
      %3139 = vmatpush1.msra.mxu0 0.0
      %3140 = vmatprep.subr.mxu0 0.0
      %3141 = vmatpush1.msra.mxu0 0.0
      %3142 = vmatprep.subr.mxu0 0.0
      %3143 = vmatpush1.msra.mxu0 0.0
      %3144 = vmatprep.subr.mxu0 0.0
      %3145 = vmatpush1.msra.mxu0 0.0
      %3146 = vmatprep.subr.mxu0 0.0
      %3147 = vmatpush1.msra.mxu0 0.0
      %3148 = vmatprep.subr.mxu0 0.0
      %3149 = vmatpush1.msra.mxu0 0.0
      %3150 = vmatprep.subr.mxu0 %v3096
      %3151 = vmatpush1.msra.mxu0 %v3095
      %3152 = vmatprep.subr.mxu0 %v3091
      %3153 = vmatpush1.msra.mxu0 %v3090
      %3154 = vmatprep.subr.mxu0 0.0
      %3155 = vmatpush2.msra.mxu0 0.0
      %3156 = vmatprep.subr.mxu0 0.0
      %3157 = vmatpush2.msra.mxu0 0.0
      %3158 = vmatprep.subr.mxu0 0.0
      %3159 = vmatpush2.msra.mxu0 0.0
      %3160 = vmatprep.subr.mxu0 0.0
      %3161 = vmatpush2.msra.mxu0 0.0
      %3162 = vmatprep.subr.mxu0 0.0
      %3163 = vmatpush2.msra.mxu0 0.0
      %3164 = vmatprep.subr.mxu0 0.0
      %3165 = vmatpush2.msra.mxu0 0.0
      %3166 = vmatprep.subr.mxu0 0.0
      %3167 = vmatpush2.msra.mxu0 0.0
      %3168 = vmatprep.subr.mxu0 0.0
      %3169 = vmatpush2.msra.mxu0 0.0
      %3170 = vmatprep.subr.mxu0 0.0
      %3171 = vmatpush2.msra.mxu0 0.0
      %3172 = vmatprep.subr.mxu0 0.0
      %3173 = vmatpush2.msra.mxu0 0.0
      %3174 = vmatprep.subr.mxu0 0.0
      %3175 = vmatpush2.msra.mxu0 0.0
      %3176 = vmatprep.subr.mxu0 0.0
      %3177 = vmatpush2.msra.mxu0 0.0
      %3178 = vmatprep.subr.mxu0 0.0
      %3179 = vmatpush2.msra.mxu0 0.0
      %3180 = vmatprep.subr.mxu0 0.0
      %3181 = vmatpush2.msra.mxu0 0.0
      %3182 = vmatprep.subr.mxu0 0.0
      %3183 = vmatpush2.msra.mxu0 0.0
      %3184 = vmatprep.subr.mxu0 0.0
      %3185 = vmatpush2.msra.mxu0 0.0
      %3186 = vmatprep.mubr.f32.mxu0 0.0
      %3187 = vmatmul.mubr.f32.gmra.mxu0 %v3111
      %v3188 = vpop.f32.mrf.mxu0
      %v3189 = vadd.f32 0.0, %v3188
      %v3190 = vpop.f32.mrf.mxu0
      %v3191 = vadd.f32 0.0, %v3190
      %3192 = vmatprep.mubr.f32.mxu0 0.0
      %3193 = vmatmul.mubr.f32.gmra.mxu0 %v3114
      %v3194 = vpop.f32.mrf.mxu0
      %v3195 = vadd.f32 0.0, %v3194
      %v3196 = vpop.f32.mrf.mxu0
      %v3197 = vadd.f32 0.0, %v3196
      %3198 = vmatprep.mubr.f32.mxu0 0.0
      %3199 = vmatmul.mubr.f32.gmra.mxu0 %v3117
      %v3200 = vpop.f32.mrf.mxu0
      %v3201 = vadd.f32 0.0, %v3200
      %v3202 = vpop.f32.mrf.mxu0
      %v3203 = vadd.f32 0.0, %v3202
      %3204 = vmatprep.mubr.f32.mxu0 0.0
      %3205 = vmatmul.mubr.f32.gmra.mxu0 %v3120
      %v3206 = vpop.f32.mrf.mxu0
      %v3207 = vadd.f32 0.0, %v3206
      %v3208 = vpop.f32.mrf.mxu0
      %v3209 = vadd.f32 0.0, %v3208
      %3210 = vdwg.mxu0
      %3211 = vmatprep.subr.mxu0 0.0
      %3212 = vmatpush1.msra.mxu0 0.0
      %3213 = vmatprep.subr.mxu0 0.0
      %3214 = vmatpush1.msra.mxu0 0.0
      %3215 = vmatprep.subr.mxu0 0.0
      %3216 = vmatpush1.msra.mxu0 0.0
      %3217 = vmatprep.subr.mxu0 0.0
      %3218 = vmatpush1.msra.mxu0 0.0
      %3219 = vmatprep.subr.mxu0 0.0
      %3220 = vmatpush1.msra.mxu0 0.0
      %3221 = vmatprep.subr.mxu0 0.0
      %3222 = vmatpush1.msra.mxu0 0.0
      %3223 = vmatprep.subr.mxu0 0.0
      %3224 = vmatpush1.msra.mxu0 0.0
      %3225 = vmatprep.subr.mxu0 0.0
      %3226 = vmatpush1.msra.mxu0 0.0
      %3227 = vmatprep.subr.mxu0 0.0
      %3228 = vmatpush1.msra.mxu0 0.0
      %3229 = vmatprep.subr.mxu0 0.0
      %3230 = vmatpush1.msra.mxu0 0.0
      %3231 = vmatprep.subr.mxu0 0.0
      %3232 = vmatpush1.msra.mxu0 0.0
      %3233 = vmatprep.subr.mxu0 0.0
      %3234 = vmatpush1.msra.mxu0 0.0
      %3235 = vmatprep.subr.mxu0 0.0
      %3236 = vmatpush1.msra.mxu0 0.0
      %3237 = vmatprep.subr.mxu0 0.0
      %3238 = vmatpush1.msra.mxu0 0.0
      %3239 = vmatprep.subr.mxu0 %v3098
      %3240 = vmatpush1.msra.mxu0 %v3097
      %3241 = vmatprep.subr.mxu0 %v3093
      %3242 = vmatpush1.msra.mxu0 %v3092
      %3243 = vmatprep.subr.mxu0 0.0
      %3244 = vmatpush2.msra.mxu0 0.0
      %3245 = vmatprep.subr.mxu0 0.0
      %3246 = vmatpush2.msra.mxu0 0.0
      %3247 = vmatprep.subr.mxu0 0.0
      %3248 = vmatpush2.msra.mxu0 0.0
      %3249 = vmatprep.subr.mxu0 0.0
      %3250 = vmatpush2.msra.mxu0 0.0
      %3251 = vmatprep.subr.mxu0 0.0
      %3252 = vmatpush2.msra.mxu0 0.0
      %3253 = vmatprep.subr.mxu0 0.0
      %3254 = vmatpush2.msra.mxu0 0.0
      %3255 = vmatprep.subr.mxu0 0.0
      %3256 = vmatpush2.msra.mxu0 0.0
      %3257 = vmatprep.subr.mxu0 0.0
      %3258 = vmatpush2.msra.mxu0 0.0
      %3259 = vmatprep.subr.mxu0 0.0
      %3260 = vmatpush2.msra.mxu0 0.0
      %3261 = vmatprep.subr.mxu0 0.0
      %3262 = vmatpush2.msra.mxu0 0.0
      %3263 = vmatprep.subr.mxu0 0.0
      %3264 = vmatpush2.msra.mxu0 0.0
      %3265 = vmatprep.subr.mxu0 0.0
      %3266 = vmatpush2.msra.mxu0 0.0
      %3267 = vmatprep.subr.mxu0 0.0
      %3268 = vmatpush2.msra.mxu0 0.0
      %3269 = vmatprep.subr.mxu0 0.0
      %3270 = vmatpush2.msra.mxu0 0.0
      %3271 = vmatprep.subr.mxu0 0.0
      %3272 = vmatpush2.msra.mxu0 0.0
      %3273 = vmatprep.subr.mxu0 0.0
      %3274 = vmatpush2.msra.mxu0 0.0
      %3275 = vmatprep.mubr.f32.mxu0 0.0
      %3276 = vmatmul.mubr.f32.gmra.mxu0 %v3111
      %v3277 = vpop.f32.mrf.mxu0
      %v3278 = vadd.f32 0.0, %v3277
      %v3279 = vpop.f32.mrf.mxu0
      %v3280 = vadd.f32 0.0, %v3279
      %3281 = vmatprep.mubr.f32.mxu0 0.0
      %3282 = vmatmul.mubr.f32.gmra.mxu0 %v3114
      %v3283 = vpop.f32.mrf.mxu0
      %v3284 = vadd.f32 0.0, %v3283
      %v3285 = vpop.f32.mrf.mxu0
      %v3286 = vadd.f32 0.0, %v3285
      %3287 = vmatprep.mubr.f32.mxu0 0.0
      %3288 = vmatmul.mubr.f32.gmra.mxu0 %v3117
      %v3289 = vpop.f32.mrf.mxu0
      %v3290 = vadd.f32 0.0, %v3289
      %v3291 = vpop.f32.mrf.mxu0
      %v3292 = vadd.f32 0.0, %v3291
      %3293 = vmatprep.mubr.f32.mxu0 0.0
      %3294 = vmatmul.mubr.f32.gmra.mxu0 %v3120
      %v3295 = vpop.f32.mrf.mxu0
      %v3296 = vadd.f32 0.0, %v3295
      %v3297 = vpop.f32.mrf.mxu0
      %v3298 = vadd.f32 0.0, %v3297
      %3299 = vdwg.mxu0
      %3300 = vmatprep.subr.mxu0 0.0
      %3301 = vmatpush1.msra.mxu0 0.0
      %3302 = vmatprep.subr.mxu0 0.0
      %3303 = vmatpush1.msra.mxu0 0.0
      %3304 = vmatprep.subr.mxu0 0.0
      %3305 = vmatpush1.msra.mxu0 0.0
      %3306 = vmatprep.subr.mxu0 0.0
      %3307 = vmatpush1.msra.mxu0 0.0
      %3308 = vmatprep.subr.mxu0 0.0
      %3309 = vmatpush1.msra.mxu0 0.0
      %3310 = vmatprep.subr.mxu0 0.0
      %3311 = vmatpush1.msra.mxu0 0.0
      %3312 = vmatprep.subr.mxu0 0.0
      %3313 = vmatpush1.msra.mxu0 0.0
      %3314 = vmatprep.subr.mxu0 0.0
      %3315 = vmatpush1.msra.mxu0 0.0
      %3316 = vmatprep.subr.mxu0 0.0
      %3317 = vmatpush1.msra.mxu0 0.0
      %3318 = vmatprep.subr.mxu0 0.0
      %3319 = vmatpush1.msra.mxu0 0.0
      %3320 = vmatprep.subr.mxu0 0.0
      %3321 = vmatpush1.msra.mxu0 0.0
      %3322 = vmatprep.subr.mxu0 0.0
      %3323 = vmatpush1.msra.mxu0 0.0
      %3324 = vmatprep.subr.mxu0 0.0
      %3325 = vmatpush1.msra.mxu0 0.0
      %3326 = vmatprep.subr.mxu0 0.0
      %3327 = vmatpush1.msra.mxu0 0.0
      %3328 = vmatprep.subr.mxu0 0.0
      %3329 = vmatpush1.msra.mxu0 %v3099
      %3330 = vmatprep.subr.mxu0 0.0
      %3331 = vmatpush1.msra.mxu0 %v3094
      %3332 = vmatprep.subr.mxu0 0.0
      %3333 = vmatpush2.msra.mxu0 0.0
      %3334 = vmatprep.subr.mxu0 0.0
      %3335 = vmatpush2.msra.mxu0 0.0
      %3336 = vmatprep.subr.mxu0 0.0
      %3337 = vmatpush2.msra.mxu0 0.0
      %3338 = vmatprep.subr.mxu0 0.0
      %3339 = vmatpush2.msra.mxu0 0.0
      %3340 = vmatprep.subr.mxu0 0.0
      %3341 = vmatpush2.msra.mxu0 0.0
      %3342 = vmatprep.subr.mxu0 0.0
      %3343 = vmatpush2.msra.mxu0 0.0
      %3344 = vmatprep.subr.mxu0 0.0
      %3345 = vmatpush2.msra.mxu0 0.0
      %3346 = vmatprep.subr.mxu0 0.0
      %3347 = vmatpush2.msra.mxu0 0.0
      %3348 = vmatprep.subr.mxu0 0.0
      %3349 = vmatpush2.msra.mxu0 0.0
      %3350 = vmatprep.subr.mxu0 0.0
      %3351 = vmatpush2.msra.mxu0 0.0
      %3352 = vmatprep.subr.mxu0 0.0
      %3353 = vmatpush2.msra.mxu0 0.0
      %3354 = vmatprep.subr.mxu0 0.0
      %3355 = vmatpush2.msra.mxu0 0.0
      %3356 = vmatprep.subr.mxu0 0.0
      %3357 = vmatpush2.msra.mxu0 0.0
      %3358 = vmatprep.subr.mxu0 0.0
      %3359 = vmatpush2.msra.mxu0 0.0
      %3360 = vmatprep.subr.mxu0 0.0
      %3361 = vmatpush2.msra.mxu0 0.0
      %3362 = vmatprep.subr.mxu0 0.0
      %3363 = vmatpush2.msra.mxu0 0.0
      %3364 = vmatprep.mubr.f32.mxu0 0.0
      %3365 = vmatmul.mubr.f32.gmra.mxu0 %v3111
      %v3366 = vpop.f32.mrf.mxu0
      %v3367 = vadd.f32 0.0, %v3366
      %v3368 = vpop.f32.mrf.mxu0
      %3369 = vmatprep.mubr.f32.mxu0 0.0
      %3370 = vmatmul.mubr.f32.gmra.mxu0 %v3114
      %v3371 = vpop.f32.mrf.mxu0
      %v3372 = vadd.f32 0.0, %v3371
      %v3373 = vpop.f32.mrf.mxu0
      %3374 = vmatprep.mubr.f32.mxu0 0.0
      %3375 = vmatmul.mubr.f32.gmra.mxu0 %v3117
      %v3376 = vpop.f32.mrf.mxu0
      %v3377 = vadd.f32 0.0, %v3376
      %v3378 = vpop.f32.mrf.mxu0
      %3379 = vmatprep.mubr.f32.mxu0 0.0
      %3380 = vmatmul.mubr.f32.gmra.mxu0 %v3120
      %v3381 = vpop.f32.mrf.mxu0
      %v3382 = vadd.f32 0.0, %v3381
      %v3383 = vpop.f32.mrf.mxu0
      %3384 = vdwg.mxu0
      %v3385 = vadd.f32 %v3041, %v3189
      %v3386 = vadd.f32 %v3042, %v3191
      %v3387 = vadd.f32 %v3043, %v3278
      %v3388 = vadd.f32 %v3044, %v3280
      %v3389 = vadd.f32 %v3045, %v3367
      %v3390 = vadd.f32 %v3046, %v3195
      %v3391 = vadd.f32 %v3047, %v3197
      %v3392 = vadd.f32 %v3048, %v3284
      %v3393 = vadd.f32 %v3049, %v3286
      %v3394 = vadd.f32 %v3050, %v3372
      %v3395 = vadd.f32 %v3051, %v3201
      %v3396 = vadd.f32 %v3052, %v3203
      %v3397 = vadd.f32 %v3053, %v3290
      %v3398 = vadd.f32 %v3054, %v3292
      %v3399 = vadd.f32 %v3055, %v3377
      %v3400 = vadd.f32 %v3056, %v3207
      %v3401 = vadd.f32 %v3057, %v3209
      %v3402 = vadd.f32 %v3058, %v3296
      %v3403 = vadd.f32 %v3059, %v3298
      %v3404 = vadd.f32 %v3060, %v3382
      %s3405 = scalar_lea.vmem %s3, 192
      %v3406 = vld [vmem:[%s3405] sm:$0xff]
      %v3407 = vld [vmem:[%s3405 + $0x8] sm:$0xff]
      %v3408 = vld [vmem:[%s3405 + $0x10] sm:$0xff]
      %v3409 = vld [vmem:[%s3405 + $0x18] sm:$0xff]
      %3410 = vrot.lane.b32.xlu0 %v1410, 76
      %v3411 = vpop.permute.xlu0 %3410
      %3412 = vrot.lane.b32.xlu0 %v1411, 76
      %v3413 = vpop.permute.xlu0 %3412
      %3414 = vrot.lane.b32.xlu0 %v1412, 76
      %v3415 = vpop.permute.xlu0 %3414
      %3416 = vrot.lane.b32.xlu0 %v1413, 76
      %v3417 = vpop.permute.xlu0 %3416
      %3418 = vrot.lane.b32.xlu0 %v1414, 76
      %v3419 = vpop.permute.xlu0 %3418
      %3420 = vrot.lane.b32.xlu0 %v1415, 76
      %v3421 = vpop.permute.xlu0 %3420
      %3422 = vrot.lane.b32.xlu0 %v1416, 76
      %v3423 = vpop.permute.xlu0 %3422
      %3424 = vrot.lane.b32.xlu0 %v1417, 76
      %v3425 = vpop.permute.xlu0 %3424
      %3426 = vrot.lane.b32.xlu0 %v1418, 76
      %v3427 = vpop.permute.xlu0 %3426
      %3428 = vrot.lane.b32.xlu0 %v1419, 76
      %v3429 = vpop.permute.xlu0 %3428
      %3430 = vrot.lane.b32.xlu0 %v1420, 76
      %v3431 = vpop.permute.xlu0 %3430
      %3432 = vrot.lane.b32.xlu0 %v1421, 76
      %v3433 = vpop.permute.xlu0 %3432
      %v3434 = vsel %vm1140, %v3411, %v3413
      %v3435 = vsel %vm1140, %v3413, %v3415
      %v3436 = vsel %vm1140, %v3415, %v3417
      %v3437 = vsel %vm1140, %v3417, %v3419
      %v3438 = vsel %vm1140, %v3419, %v3421
      %v3439 = vsel %vm1140, %v3423, %v3425
      %v3440 = vsel %vm1140, %v3425, %v3427
      %v3441 = vsel %vm1140, %v3427, %v3429
      %v3442 = vsel %vm1140, %v3429, %v3431
      %v3443 = vsel %vm1140, %v3431, %v3433
      %v3455 = vsel %vm1478, %v3406, 0
      %v3458 = vsel %vm1478, %v3407, 0
      %v3461 = vsel %vm1478, %v3408, 0
      %v3464 = vsel %vm1478, %v3409, 0
      %3466 = vmatprep.subr.mxu0 0.0
      %3467 = vmatpush1.msra.mxu0 0.0
      %3468 = vmatprep.subr.mxu0 0.0
      %3469 = vmatpush1.msra.mxu0 0.0
      %3470 = vmatprep.subr.mxu0 0.0
      %3471 = vmatpush1.msra.mxu0 0.0
      %3472 = vmatprep.subr.mxu0 0.0
      %3473 = vmatpush1.msra.mxu0 0.0
      %3474 = vmatprep.subr.mxu0 0.0
      %3475 = vmatpush1.msra.mxu0 0.0
      %3476 = vmatprep.subr.mxu0 0.0
      %3477 = vmatpush1.msra.mxu0 0.0
      %3478 = vmatprep.subr.mxu0 0.0
      %3479 = vmatpush1.msra.mxu0 0.0
      %3480 = vmatprep.subr.mxu0 0.0
      %3481 = vmatpush1.msra.mxu0 0.0
      %3482 = vmatprep.subr.mxu0 0.0
      %3483 = vmatpush1.msra.mxu0 0.0
      %3484 = vmatprep.subr.mxu0 0.0
      %3485 = vmatpush1.msra.mxu0 0.0
      %3486 = vmatprep.subr.mxu0 0.0
      %3487 = vmatpush1.msra.mxu0 0.0
      %3488 = vmatprep.subr.mxu0 0.0
      %3489 = vmatpush1.msra.mxu0 0.0
      %3490 = vmatprep.subr.mxu0 0.0
      %3491 = vmatpush1.msra.mxu0 0.0
      %3492 = vmatprep.subr.mxu0 0.0
      %3493 = vmatpush1.msra.mxu0 0.0
      %3494 = vmatprep.subr.mxu0 %v3440
      %3495 = vmatpush1.msra.mxu0 %v3439
      %3496 = vmatprep.subr.mxu0 %v3435
      %3497 = vmatpush1.msra.mxu0 %v3434
      %3498 = vmatprep.subr.mxu0 0.0
      %3499 = vmatpush2.msra.mxu0 0.0
      %3500 = vmatprep.subr.mxu0 0.0
      %3501 = vmatpush2.msra.mxu0 0.0
      %3502 = vmatprep.subr.mxu0 0.0
      %3503 = vmatpush2.msra.mxu0 0.0
      %3504 = vmatprep.subr.mxu0 0.0
      %3505 = vmatpush2.msra.mxu0 0.0
      %3506 = vmatprep.subr.mxu0 0.0
      %3507 = vmatpush2.msra.mxu0 0.0
      %3508 = vmatprep.subr.mxu0 0.0
      %3509 = vmatpush2.msra.mxu0 0.0
      %3510 = vmatprep.subr.mxu0 0.0
      %3511 = vmatpush2.msra.mxu0 0.0
      %3512 = vmatprep.subr.mxu0 0.0
      %3513 = vmatpush2.msra.mxu0 0.0
      %3514 = vmatprep.subr.mxu0 0.0
      %3515 = vmatpush2.msra.mxu0 0.0
      %3516 = vmatprep.subr.mxu0 0.0
      %3517 = vmatpush2.msra.mxu0 0.0
      %3518 = vmatprep.subr.mxu0 0.0
      %3519 = vmatpush2.msra.mxu0 0.0
      %3520 = vmatprep.subr.mxu0 0.0
      %3521 = vmatpush2.msra.mxu0 0.0
      %3522 = vmatprep.subr.mxu0 0.0
      %3523 = vmatpush2.msra.mxu0 0.0
      %3524 = vmatprep.subr.mxu0 0.0
      %3525 = vmatpush2.msra.mxu0 0.0
      %3526 = vmatprep.subr.mxu0 0.0
      %3527 = vmatpush2.msra.mxu0 0.0
      %3528 = vmatprep.subr.mxu0 0.0
      %3529 = vmatpush2.msra.mxu0 0.0
      %3530 = vmatprep.mubr.f32.mxu0 0.0
      %3531 = vmatmul.mubr.f32.gmra.mxu0 %v3455
      %v3532 = vpop.f32.mrf.mxu0
      %v3533 = vadd.f32 0.0, %v3532
      %v3534 = vpop.f32.mrf.mxu0
      %v3535 = vadd.f32 0.0, %v3534
      %3536 = vmatprep.mubr.f32.mxu0 0.0
      %3537 = vmatmul.mubr.f32.gmra.mxu0 %v3458
      %v3538 = vpop.f32.mrf.mxu0
      %v3539 = vadd.f32 0.0, %v3538
      %v3540 = vpop.f32.mrf.mxu0
      %v3541 = vadd.f32 0.0, %v3540
      %3542 = vmatprep.mubr.f32.mxu0 0.0
      %3543 = vmatmul.mubr.f32.gmra.mxu0 %v3461
      %v3544 = vpop.f32.mrf.mxu0
      %v3545 = vadd.f32 0.0, %v3544
      %v3546 = vpop.f32.mrf.mxu0
      %v3547 = vadd.f32 0.0, %v3546
      %3548 = vmatprep.mubr.f32.mxu0 0.0
      %3549 = vmatmul.mubr.f32.gmra.mxu0 %v3464
      %v3550 = vpop.f32.mrf.mxu0
      %v3551 = vadd.f32 0.0, %v3550
      %v3552 = vpop.f32.mrf.mxu0
      %v3553 = vadd.f32 0.0, %v3552
      %3554 = vdwg.mxu0
      %3555 = vmatprep.subr.mxu0 0.0
      %3556 = vmatpush1.msra.mxu0 0.0
      %3557 = vmatprep.subr.mxu0 0.0
      %3558 = vmatpush1.msra.mxu0 0.0
      %3559 = vmatprep.subr.mxu0 0.0
      %3560 = vmatpush1.msra.mxu0 0.0
      %3561 = vmatprep.subr.mxu0 0.0
      %3562 = vmatpush1.msra.mxu0 0.0
      %3563 = vmatprep.subr.mxu0 0.0
      %3564 = vmatpush1.msra.mxu0 0.0
      %3565 = vmatprep.subr.mxu0 0.0
      %3566 = vmatpush1.msra.mxu0 0.0
      %3567 = vmatprep.subr.mxu0 0.0
      %3568 = vmatpush1.msra.mxu0 0.0
      %3569 = vmatprep.subr.mxu0 0.0
      %3570 = vmatpush1.msra.mxu0 0.0
      %3571 = vmatprep.subr.mxu0 0.0
      %3572 = vmatpush1.msra.mxu0 0.0
      %3573 = vmatprep.subr.mxu0 0.0
      %3574 = vmatpush1.msra.mxu0 0.0
      %3575 = vmatprep.subr.mxu0 0.0
      %3576 = vmatpush1.msra.mxu0 0.0
      %3577 = vmatprep.subr.mxu0 0.0
      %3578 = vmatpush1.msra.mxu0 0.0
      %3579 = vmatprep.subr.mxu0 0.0
      %3580 = vmatpush1.msra.mxu0 0.0
      %3581 = vmatprep.subr.mxu0 0.0
      %3582 = vmatpush1.msra.mxu0 0.0
      %3583 = vmatprep.subr.mxu0 %v3442
      %3584 = vmatpush1.msra.mxu0 %v3441
      %3585 = vmatprep.subr.mxu0 %v3437
      %3586 = vmatpush1.msra.mxu0 %v3436
      %3587 = vmatprep.subr.mxu0 0.0
      %3588 = vmatpush2.msra.mxu0 0.0
      %3589 = vmatprep.subr.mxu0 0.0
      %3590 = vmatpush2.msra.mxu0 0.0
      %3591 = vmatprep.subr.mxu0 0.0
      %3592 = vmatpush2.msra.mxu0 0.0
      %3593 = vmatprep.subr.mxu0 0.0
      %3594 = vmatpush2.msra.mxu0 0.0
      %3595 = vmatprep.subr.mxu0 0.0
      %3596 = vmatpush2.msra.mxu0 0.0
      %3597 = vmatprep.subr.mxu0 0.0
      %3598 = vmatpush2.msra.mxu0 0.0
      %3599 = vmatprep.subr.mxu0 0.0
      %3600 = vmatpush2.msra.mxu0 0.0
      %3601 = vmatprep.subr.mxu0 0.0
      %3602 = vmatpush2.msra.mxu0 0.0
      %3603 = vmatprep.subr.mxu0 0.0
      %3604 = vmatpush2.msra.mxu0 0.0
      %3605 = vmatprep.subr.mxu0 0.0
      %3606 = vmatpush2.msra.mxu0 0.0
      %3607 = vmatprep.subr.mxu0 0.0
      %3608 = vmatpush2.msra.mxu0 0.0
      %3609 = vmatprep.subr.mxu0 0.0
      %3610 = vmatpush2.msra.mxu0 0.0
      %3611 = vmatprep.subr.mxu0 0.0
      %3612 = vmatpush2.msra.mxu0 0.0
      %3613 = vmatprep.subr.mxu0 0.0
      %3614 = vmatpush2.msra.mxu0 0.0
      %3615 = vmatprep.subr.mxu0 0.0
      %3616 = vmatpush2.msra.mxu0 0.0
      %3617 = vmatprep.subr.mxu0 0.0
      %3618 = vmatpush2.msra.mxu0 0.0
      %3619 = vmatprep.mubr.f32.mxu0 0.0
      %3620 = vmatmul.mubr.f32.gmra.mxu0 %v3455
      %v3621 = vpop.f32.mrf.mxu0
      %v3622 = vadd.f32 0.0, %v3621
      %v3623 = vpop.f32.mrf.mxu0
      %v3624 = vadd.f32 0.0, %v3623
      %3625 = vmatprep.mubr.f32.mxu0 0.0
      %3626 = vmatmul.mubr.f32.gmra.mxu0 %v3458
      %v3627 = vpop.f32.mrf.mxu0
      %v3628 = vadd.f32 0.0, %v3627
      %v3629 = vpop.f32.mrf.mxu0
      %v3630 = vadd.f32 0.0, %v3629
      %3631 = vmatprep.mubr.f32.mxu0 0.0
      %3632 = vmatmul.mubr.f32.gmra.mxu0 %v3461
      %v3633 = vpop.f32.mrf.mxu0
      %v3634 = vadd.f32 0.0, %v3633
      %v3635 = vpop.f32.mrf.mxu0
      %v3636 = vadd.f32 0.0, %v3635
      %3637 = vmatprep.mubr.f32.mxu0 0.0
      %3638 = vmatmul.mubr.f32.gmra.mxu0 %v3464
      %v3639 = vpop.f32.mrf.mxu0
      %v3640 = vadd.f32 0.0, %v3639
      %v3641 = vpop.f32.mrf.mxu0
      %v3642 = vadd.f32 0.0, %v3641
      %3643 = vdwg.mxu0
      %3644 = vmatprep.subr.mxu0 0.0
      %3645 = vmatpush1.msra.mxu0 0.0
      %3646 = vmatprep.subr.mxu0 0.0
      %3647 = vmatpush1.msra.mxu0 0.0
      %3648 = vmatprep.subr.mxu0 0.0
      %3649 = vmatpush1.msra.mxu0 0.0
      %3650 = vmatprep.subr.mxu0 0.0
      %3651 = vmatpush1.msra.mxu0 0.0
      %3652 = vmatprep.subr.mxu0 0.0
      %3653 = vmatpush1.msra.mxu0 0.0
      %3654 = vmatprep.subr.mxu0 0.0
      %3655 = vmatpush1.msra.mxu0 0.0
      %3656 = vmatprep.subr.mxu0 0.0
      %3657 = vmatpush1.msra.mxu0 0.0
      %3658 = vmatprep.subr.mxu0 0.0
      %3659 = vmatpush1.msra.mxu0 0.0
      %3660 = vmatprep.subr.mxu0 0.0
      %3661 = vmatpush1.msra.mxu0 0.0
      %3662 = vmatprep.subr.mxu0 0.0
      %3663 = vmatpush1.msra.mxu0 0.0
      %3664 = vmatprep.subr.mxu0 0.0
      %3665 = vmatpush1.msra.mxu0 0.0
      %3666 = vmatprep.subr.mxu0 0.0
      %3667 = vmatpush1.msra.mxu0 0.0
      %3668 = vmatprep.subr.mxu0 0.0
      %3669 = vmatpush1.msra.mxu0 0.0
      %3670 = vmatprep.subr.mxu0 0.0
      %3671 = vmatpush1.msra.mxu0 0.0
      %3672 = vmatprep.subr.mxu0 0.0
      %3673 = vmatpush1.msra.mxu0 %v3443
      %3674 = vmatprep.subr.mxu0 0.0
      %3675 = vmatpush1.msra.mxu0 %v3438
      %3676 = vmatprep.subr.mxu0 0.0
      %3677 = vmatpush2.msra.mxu0 0.0
      %3678 = vmatprep.subr.mxu0 0.0
      %3679 = vmatpush2.msra.mxu0 0.0
      %3680 = vmatprep.subr.mxu0 0.0
      %3681 = vmatpush2.msra.mxu0 0.0
      %3682 = vmatprep.subr.mxu0 0.0
      %3683 = vmatpush2.msra.mxu0 0.0
      %3684 = vmatprep.subr.mxu0 0.0
      %3685 = vmatpush2.msra.mxu0 0.0
      %3686 = vmatprep.subr.mxu0 0.0
      %3687 = vmatpush2.msra.mxu0 0.0
      %3688 = vmatprep.subr.mxu0 0.0
      %3689 = vmatpush2.msra.mxu0 0.0
      %3690 = vmatprep.subr.mxu0 0.0
      %3691 = vmatpush2.msra.mxu0 0.0
      %3692 = vmatprep.subr.mxu0 0.0
      %3693 = vmatpush2.msra.mxu0 0.0
      %3694 = vmatprep.subr.mxu0 0.0
      %3695 = vmatpush2.msra.mxu0 0.0
      %3696 = vmatprep.subr.mxu0 0.0
      %3697 = vmatpush2.msra.mxu0 0.0
      %3698 = vmatprep.subr.mxu0 0.0
      %3699 = vmatpush2.msra.mxu0 0.0
      %3700 = vmatprep.subr.mxu0 0.0
      %3701 = vmatpush2.msra.mxu0 0.0
      %3702 = vmatprep.subr.mxu0 0.0
      %3703 = vmatpush2.msra.mxu0 0.0
      %3704 = vmatprep.subr.mxu0 0.0
      %3705 = vmatpush2.msra.mxu0 0.0
      %3706 = vmatprep.subr.mxu0 0.0
      %3707 = vmatpush2.msra.mxu0 0.0
      %3708 = vmatprep.mubr.f32.mxu0 0.0
      %3709 = vmatmul.mubr.f32.gmra.mxu0 %v3455
      %v3710 = vpop.f32.mrf.mxu0
      %v3711 = vadd.f32 0.0, %v3710
      %v3712 = vpop.f32.mrf.mxu0
      %3713 = vmatprep.mubr.f32.mxu0 0.0
      %3714 = vmatmul.mubr.f32.gmra.mxu0 %v3458
      %v3715 = vpop.f32.mrf.mxu0
      %v3716 = vadd.f32 0.0, %v3715
      %v3717 = vpop.f32.mrf.mxu0
      %3718 = vmatprep.mubr.f32.mxu0 0.0
      %3719 = vmatmul.mubr.f32.gmra.mxu0 %v3461
      %v3720 = vpop.f32.mrf.mxu0
      %v3721 = vadd.f32 0.0, %v3720
      %v3722 = vpop.f32.mrf.mxu0
      %3723 = vmatprep.mubr.f32.mxu0 0.0
      %3724 = vmatmul.mubr.f32.gmra.mxu0 %v3464
      %v3725 = vpop.f32.mrf.mxu0
      %v3726 = vadd.f32 0.0, %v3725
      %v3727 = vpop.f32.mrf.mxu0
      %3728 = vdwg.mxu0
      %v3729 = vadd.f32 %v3385, %v3533
      %v3730 = vadd.f32 %v3386, %v3535
      %v3731 = vadd.f32 %v3387, %v3622
      %v3732 = vadd.f32 %v3388, %v3624
      %v3733 = vadd.f32 %v3389, %v3711
      %v3734 = vadd.f32 %v3390, %v3539
      %v3735 = vadd.f32 %v3391, %v3541
      %v3736 = vadd.f32 %v3392, %v3628
      %v3737 = vadd.f32 %v3393, %v3630
      %v3738 = vadd.f32 %v3394, %v3716
      %v3739 = vadd.f32 %v3395, %v3545
      %v3740 = vadd.f32 %v3396, %v3547
      %v3741 = vadd.f32 %v3397, %v3634
      %v3742 = vadd.f32 %v3398, %v3636
      %v3743 = vadd.f32 %v3399, %v3721
      %v3744 = vadd.f32 %v3400, %v3551
      %v3745 = vadd.f32 %v3401, %v3553
      %v3746 = vadd.f32 %v3402, %v3640
      %v3747 = vadd.f32 %v3403, %v3642
      %v3748 = vadd.f32 %v3404, %v3726
      %s3749 = scalar_lea.vmem %s3, 224
      %v3750 = vld [vmem:[%s3749] sm:$0xff]
      %v3751 = vld [vmem:[%s3749 + $0x8] sm:$0xff]
      %v3752 = vld [vmem:[%s3749 + $0x10] sm:$0xff]
      %v3753 = vld [vmem:[%s3749 + $0x18] sm:$0xff]
      %3754 = vrot.lane.b32.xlu0 %v1410, 75
      %v3755 = vpop.permute.xlu0 %3754
      %3756 = vrot.lane.b32.xlu0 %v1411, 75
      %v3757 = vpop.permute.xlu0 %3756
      %3758 = vrot.lane.b32.xlu0 %v1412, 75
      %v3759 = vpop.permute.xlu0 %3758
      %3760 = vrot.lane.b32.xlu0 %v1413, 75
      %v3761 = vpop.permute.xlu0 %3760
      %3762 = vrot.lane.b32.xlu0 %v1414, 75
      %v3763 = vpop.permute.xlu0 %3762
      %3764 = vrot.lane.b32.xlu0 %v1415, 75
      %v3765 = vpop.permute.xlu0 %3764
      %3766 = vrot.lane.b32.xlu0 %v1416, 75
      %v3767 = vpop.permute.xlu0 %3766
      %3768 = vrot.lane.b32.xlu0 %v1417, 75
      %v3769 = vpop.permute.xlu0 %3768
      %3770 = vrot.lane.b32.xlu0 %v1418, 75
      %v3771 = vpop.permute.xlu0 %3770
      %3772 = vrot.lane.b32.xlu0 %v1419, 75
      %v3773 = vpop.permute.xlu0 %3772
      %3774 = vrot.lane.b32.xlu0 %v1420, 75
      %v3775 = vpop.permute.xlu0 %3774
      %3776 = vrot.lane.b32.xlu0 %v1421, 75
      %v3777 = vpop.permute.xlu0 %3776
      %v3778 = vsel %vm1241, %v3755, %v3757
      %v3779 = vsel %vm1241, %v3757, %v3759
      %v3780 = vsel %vm1241, %v3759, %v3761
      %v3781 = vsel %vm1241, %v3761, %v3763
      %v3782 = vsel %vm1241, %v3763, %v3765
      %v3783 = vsel %vm1241, %v3767, %v3769
      %v3784 = vsel %vm1241, %v3769, %v3771
      %v3785 = vsel %vm1241, %v3771, %v3773
      %v3786 = vsel %vm1241, %v3773, %v3775
      %v3787 = vsel %vm1241, %v3775, %v3777
      %v3799 = vsel %vm1478, %v3750, 0
      %v3802 = vsel %vm1478, %v3751, 0
      %v3805 = vsel %vm1478, %v3752, 0
      %v3808 = vsel %vm1478, %v3753, 0
      %3810 = vmatprep.subr.mxu0 0.0
      %3811 = vmatpush1.msra.mxu0 0.0
      %3812 = vmatprep.subr.mxu0 0.0
      %3813 = vmatpush1.msra.mxu0 0.0
      %3814 = vmatprep.subr.mxu0 0.0
      %3815 = vmatpush1.msra.mxu0 0.0
      %3816 = vmatprep.subr.mxu0 0.0
      %3817 = vmatpush1.msra.mxu0 0.0
      %3818 = vmatprep.subr.mxu0 0.0
      %3819 = vmatpush1.msra.mxu0 0.0
      %3820 = vmatprep.subr.mxu0 0.0
      %3821 = vmatpush1.msra.mxu0 0.0
      %3822 = vmatprep.subr.mxu0 0.0
      %3823 = vmatpush1.msra.mxu0 0.0
      %3824 = vmatprep.subr.mxu0 0.0
      %3825 = vmatpush1.msra.mxu0 0.0
      %3826 = vmatprep.subr.mxu0 0.0
      %3827 = vmatpush1.msra.mxu0 0.0
      %3828 = vmatprep.subr.mxu0 0.0
      %3829 = vmatpush1.msra.mxu0 0.0
      %3830 = vmatprep.subr.mxu0 0.0
      %3831 = vmatpush1.msra.mxu0 0.0
      %3832 = vmatprep.subr.mxu0 0.0
      %3833 = vmatpush1.msra.mxu0 0.0
      %3834 = vmatprep.subr.mxu0 0.0
      %3835 = vmatpush1.msra.mxu0 0.0
      %3836 = vmatprep.subr.mxu0 0.0
      %3837 = vmatpush1.msra.mxu0 0.0
      %3838 = vmatprep.subr.mxu0 %v3784
      %3839 = vmatpush1.msra.mxu0 %v3783
      %3840 = vmatprep.subr.mxu0 %v3779
      %3841 = vmatpush1.msra.mxu0 %v3778
      %3842 = vmatprep.subr.mxu0 0.0
      %3843 = vmatpush2.msra.mxu0 0.0
      %3844 = vmatprep.subr.mxu0 0.0
      %3845 = vmatpush2.msra.mxu0 0.0
      %3846 = vmatprep.subr.mxu0 0.0
      %3847 = vmatpush2.msra.mxu0 0.0
      %3848 = vmatprep.subr.mxu0 0.0
      %3849 = vmatpush2.msra.mxu0 0.0
      %3850 = vmatprep.subr.mxu0 0.0
      %3851 = vmatpush2.msra.mxu0 0.0
      %3852 = vmatprep.subr.mxu0 0.0
      %3853 = vmatpush2.msra.mxu0 0.0
      %3854 = vmatprep.subr.mxu0 0.0
      %3855 = vmatpush2.msra.mxu0 0.0
      %3856 = vmatprep.subr.mxu0 0.0
      %3857 = vmatpush2.msra.mxu0 0.0
      %3858 = vmatprep.subr.mxu0 0.0
      %3859 = vmatpush2.msra.mxu0 0.0
      %3860 = vmatprep.subr.mxu0 0.0
      %3861 = vmatpush2.msra.mxu0 0.0
      %3862 = vmatprep.subr.mxu0 0.0
      %3863 = vmatpush2.msra.mxu0 0.0
      %3864 = vmatprep.subr.mxu0 0.0
      %3865 = vmatpush2.msra.mxu0 0.0
      %3866 = vmatprep.subr.mxu0 0.0
      %3867 = vmatpush2.msra.mxu0 0.0
      %3868 = vmatprep.subr.mxu0 0.0
      %3869 = vmatpush2.msra.mxu0 0.0
      %3870 = vmatprep.subr.mxu0 0.0
      %3871 = vmatpush2.msra.mxu0 0.0
      %3872 = vmatprep.subr.mxu0 0.0
      %3873 = vmatpush2.msra.mxu0 0.0
      %3874 = vmatprep.mubr.f32.mxu0 0.0
      %3875 = vmatmul.mubr.f32.gmra.mxu0 %v3799
      %v3876 = vpop.f32.mrf.mxu0
      %v3877 = vadd.f32 0.0, %v3876
      %v3878 = vpop.f32.mrf.mxu0
      %v3879 = vadd.f32 0.0, %v3878
      %3880 = vmatprep.mubr.f32.mxu0 0.0
      %3881 = vmatmul.mubr.f32.gmra.mxu0 %v3802
      %v3882 = vpop.f32.mrf.mxu0
      %v3883 = vadd.f32 0.0, %v3882
      %v3884 = vpop.f32.mrf.mxu0
      %v3885 = vadd.f32 0.0, %v3884
      %3886 = vmatprep.mubr.f32.mxu0 0.0
      %3887 = vmatmul.mubr.f32.gmra.mxu0 %v3805
      %v3888 = vpop.f32.mrf.mxu0
      %v3889 = vadd.f32 0.0, %v3888
      %v3890 = vpop.f32.mrf.mxu0
      %v3891 = vadd.f32 0.0, %v3890
      %3892 = vmatprep.mubr.f32.mxu0 0.0
      %3893 = vmatmul.mubr.f32.gmra.mxu0 %v3808
      %v3894 = vpop.f32.mrf.mxu0
      %v3895 = vadd.f32 0.0, %v3894
      %v3896 = vpop.f32.mrf.mxu0
      %v3897 = vadd.f32 0.0, %v3896
      %3898 = vdwg.mxu0
      %3899 = vmatprep.subr.mxu0 0.0
      %3900 = vmatpush1.msra.mxu0 0.0
      %3901 = vmatprep.subr.mxu0 0.0
      %3902 = vmatpush1.msra.mxu0 0.0
      %3903 = vmatprep.subr.mxu0 0.0
      %3904 = vmatpush1.msra.mxu0 0.0
      %3905 = vmatprep.subr.mxu0 0.0
      %3906 = vmatpush1.msra.mxu0 0.0
      %3907 = vmatprep.subr.mxu0 0.0
      %3908 = vmatpush1.msra.mxu0 0.0
      %3909 = vmatprep.subr.mxu0 0.0
      %3910 = vmatpush1.msra.mxu0 0.0
      %3911 = vmatprep.subr.mxu0 0.0
      %3912 = vmatpush1.msra.mxu0 0.0
      %3913 = vmatprep.subr.mxu0 0.0
      %3914 = vmatpush1.msra.mxu0 0.0
      %3915 = vmatprep.subr.mxu0 0.0
      %3916 = vmatpush1.msra.mxu0 0.0
      %3917 = vmatprep.subr.mxu0 0.0
      %3918 = vmatpush1.msra.mxu0 0.0
      %3919 = vmatprep.subr.mxu0 0.0
      %3920 = vmatpush1.msra.mxu0 0.0
      %3921 = vmatprep.subr.mxu0 0.0
      %3922 = vmatpush1.msra.mxu0 0.0
      %3923 = vmatprep.subr.mxu0 0.0
      %3924 = vmatpush1.msra.mxu0 0.0
      %3925 = vmatprep.subr.mxu0 0.0
      %3926 = vmatpush1.msra.mxu0 0.0
      %3927 = vmatprep.subr.mxu0 %v3786
      %3928 = vmatpush1.msra.mxu0 %v3785
      %3929 = vmatprep.subr.mxu0 %v3781
      %3930 = vmatpush1.msra.mxu0 %v3780
      %3931 = vmatprep.subr.mxu0 0.0
      %3932 = vmatpush2.msra.mxu0 0.0
      %3933 = vmatprep.subr.mxu0 0.0
      %3934 = vmatpush2.msra.mxu0 0.0
      %3935 = vmatprep.subr.mxu0 0.0
      %3936 = vmatpush2.msra.mxu0 0.0
      %3937 = vmatprep.subr.mxu0 0.0
      %3938 = vmatpush2.msra.mxu0 0.0
      %3939 = vmatprep.subr.mxu0 0.0
      %3940 = vmatpush2.msra.mxu0 0.0
      %3941 = vmatprep.subr.mxu0 0.0
      %3942 = vmatpush2.msra.mxu0 0.0
      %3943 = vmatprep.subr.mxu0 0.0
      %3944 = vmatpush2.msra.mxu0 0.0
      %3945 = vmatprep.subr.mxu0 0.0
      %3946 = vmatpush2.msra.mxu0 0.0
      %3947 = vmatprep.subr.mxu0 0.0
      %3948 = vmatpush2.msra.mxu0 0.0
      %3949 = vmatprep.subr.mxu0 0.0
      %3950 = vmatpush2.msra.mxu0 0.0
      %3951 = vmatprep.subr.mxu0 0.0
      %3952 = vmatpush2.msra.mxu0 0.0
      %3953 = vmatprep.subr.mxu0 0.0
      %3954 = vmatpush2.msra.mxu0 0.0
      %3955 = vmatprep.subr.mxu0 0.0
      %3956 = vmatpush2.msra.mxu0 0.0
      %3957 = vmatprep.subr.mxu0 0.0
      %3958 = vmatpush2.msra.mxu0 0.0
      %3959 = vmatprep.subr.mxu0 0.0
      %3960 = vmatpush2.msra.mxu0 0.0
      %3961 = vmatprep.subr.mxu0 0.0
      %3962 = vmatpush2.msra.mxu0 0.0
      %3963 = vmatprep.mubr.f32.mxu0 0.0
      %3964 = vmatmul.mubr.f32.gmra.mxu0 %v3799
      %v3965 = vpop.f32.mrf.mxu0
      %v3966 = vadd.f32 0.0, %v3965
      %v3967 = vpop.f32.mrf.mxu0
      %v3968 = vadd.f32 0.0, %v3967
      %3969 = vmatprep.mubr.f32.mxu0 0.0
      %3970 = vmatmul.mubr.f32.gmra.mxu0 %v3802
      %v3971 = vpop.f32.mrf.mxu0
      %v3972 = vadd.f32 0.0, %v3971
      %v3973 = vpop.f32.mrf.mxu0
      %v3974 = vadd.f32 0.0, %v3973
      %3975 = vmatprep.mubr.f32.mxu0 0.0
      %3976 = vmatmul.mubr.f32.gmra.mxu0 %v3805
      %v3977 = vpop.f32.mrf.mxu0
      %v3978 = vadd.f32 0.0, %v3977
      %v3979 = vpop.f32.mrf.mxu0
      %v3980 = vadd.f32 0.0, %v3979
      %3981 = vmatprep.mubr.f32.mxu0 0.0
      %3982 = vmatmul.mubr.f32.gmra.mxu0 %v3808
      %v3983 = vpop.f32.mrf.mxu0
      %v3984 = vadd.f32 0.0, %v3983
      %v3985 = vpop.f32.mrf.mxu0
      %v3986 = vadd.f32 0.0, %v3985
      %3987 = vdwg.mxu0
      %3988 = vmatprep.subr.mxu0 0.0
      %3989 = vmatpush1.msra.mxu0 0.0
      %3990 = vmatprep.subr.mxu0 0.0
      %3991 = vmatpush1.msra.mxu0 0.0
      %3992 = vmatprep.subr.mxu0 0.0
      %3993 = vmatpush1.msra.mxu0 0.0
      %3994 = vmatprep.subr.mxu0 0.0
      %3995 = vmatpush1.msra.mxu0 0.0
      %3996 = vmatprep.subr.mxu0 0.0
      %3997 = vmatpush1.msra.mxu0 0.0
      %3998 = vmatprep.subr.mxu0 0.0
      %3999 = vmatpush1.msra.mxu0 0.0
      %4000 = vmatprep.subr.mxu0 0.0
      %4001 = vmatpush1.msra.mxu0 0.0
      %4002 = vmatprep.subr.mxu0 0.0
      %4003 = vmatpush1.msra.mxu0 0.0
      %4004 = vmatprep.subr.mxu0 0.0
      %4005 = vmatpush1.msra.mxu0 0.0
      %4006 = vmatprep.subr.mxu0 0.0
      %4007 = vmatpush1.msra.mxu0 0.0
      %4008 = vmatprep.subr.mxu0 0.0
      %4009 = vmatpush1.msra.mxu0 0.0
      %4010 = vmatprep.subr.mxu0 0.0
      %4011 = vmatpush1.msra.mxu0 0.0
      %4012 = vmatprep.subr.mxu0 0.0
      %4013 = vmatpush1.msra.mxu0 0.0
      %4014 = vmatprep.subr.mxu0 0.0
      %4015 = vmatpush1.msra.mxu0 0.0
      %4016 = vmatprep.subr.mxu0 0.0
      %4017 = vmatpush1.msra.mxu0 %v3787
      %4018 = vmatprep.subr.mxu0 0.0
      %4019 = vmatpush1.msra.mxu0 %v3782
      %4020 = vmatprep.subr.mxu0 0.0
      %4021 = vmatpush2.msra.mxu0 0.0
      %4022 = vmatprep.subr.mxu0 0.0
      %4023 = vmatpush2.msra.mxu0 0.0
      %4024 = vmatprep.subr.mxu0 0.0
      %4025 = vmatpush2.msra.mxu0 0.0
      %4026 = vmatprep.subr.mxu0 0.0
      %4027 = vmatpush2.msra.mxu0 0.0
      %4028 = vmatprep.subr.mxu0 0.0
      %4029 = vmatpush2.msra.mxu0 0.0
      %4030 = vmatprep.subr.mxu0 0.0
      %4031 = vmatpush2.msra.mxu0 0.0
      %4032 = vmatprep.subr.mxu0 0.0
      %4033 = vmatpush2.msra.mxu0 0.0
      %4034 = vmatprep.subr.mxu0 0.0
      %4035 = vmatpush2.msra.mxu0 0.0
      %4036 = vmatprep.subr.mxu0 0.0
      %4037 = vmatpush2.msra.mxu0 0.0
      %4038 = vmatprep.subr.mxu0 0.0
      %4039 = vmatpush2.msra.mxu0 0.0
      %4040 = vmatprep.subr.mxu0 0.0
      %4041 = vmatpush2.msra.mxu0 0.0
      %4042 = vmatprep.subr.mxu0 0.0
      %4043 = vmatpush2.msra.mxu0 0.0
      %4044 = vmatprep.subr.mxu0 0.0
      %4045 = vmatpush2.msra.mxu0 0.0
      %4046 = vmatprep.subr.mxu0 0.0
      %4047 = vmatpush2.msra.mxu0 0.0
      %4048 = vmatprep.subr.mxu0 0.0
      %4049 = vmatpush2.msra.mxu0 0.0
      %4050 = vmatprep.subr.mxu0 0.0
      %4051 = vmatpush2.msra.mxu0 0.0
      %4052 = vmatprep.mubr.f32.mxu0 0.0
      %4053 = vmatmul.mubr.f32.gmra.mxu0 %v3799
      %v4054 = vpop.f32.mrf.mxu0
      %v4055 = vadd.f32 0.0, %v4054
      %v4056 = vpop.f32.mrf.mxu0
      %4057 = vmatprep.mubr.f32.mxu0 0.0
      %4058 = vmatmul.mubr.f32.gmra.mxu0 %v3802
      %v4059 = vpop.f32.mrf.mxu0
      %v4060 = vadd.f32 0.0, %v4059
      %v4061 = vpop.f32.mrf.mxu0
      %4062 = vmatprep.mubr.f32.mxu0 0.0
      %4063 = vmatmul.mubr.f32.gmra.mxu0 %v3805
      %v4064 = vpop.f32.mrf.mxu0
      %v4065 = vadd.f32 0.0, %v4064
      %v4066 = vpop.f32.mrf.mxu0
      %4067 = vmatprep.mubr.f32.mxu0 0.0
      %4068 = vmatmul.mubr.f32.gmra.mxu0 %v3808
      %v4069 = vpop.f32.mrf.mxu0
      %v4070 = vadd.f32 0.0, %v4069
      %v4071 = vpop.f32.mrf.mxu0
      %4072 = vdwg.mxu0
      %v4073 = vadd.f32 %v3729, %v3877
      %v4074 = vadd.f32 %v3730, %v3879
      %v4075 = vadd.f32 %v3731, %v3966
      %v4076 = vadd.f32 %v3732, %v3968
      %v4077 = vadd.f32 %v3733, %v4055
      %v4078 = vadd.f32 %v3734, %v3883
      %v4079 = vadd.f32 %v3735, %v3885
      %v4080 = vadd.f32 %v3736, %v3972
      %v4081 = vadd.f32 %v3737, %v3974
      %v4082 = vadd.f32 %v3738, %v4060
      %v4083 = vadd.f32 %v3739, %v3889
      %v4084 = vadd.f32 %v3740, %v3891
      %v4085 = vadd.f32 %v3741, %v3978
      %v4086 = vadd.f32 %v3742, %v3980
      %v4087 = vadd.f32 %v3743, %v4065
      %v4088 = vadd.f32 %v3744, %v3895
      %v4089 = vadd.f32 %v3745, %v3897
      %v4090 = vadd.f32 %v3746, %v3984
      %v4091 = vadd.f32 %v3747, %v3986
      %v4092 = vadd.f32 %v3748, %v4070
      %s4093 = scalar_lea.vmem %s3, 256
      %v4094 = vld [vmem:[%s4093] sm:$0xff]
      %v4095 = vld [vmem:[%s4093 + $0x8] sm:$0xff]
      %v4096 = vld [vmem:[%s4093 + $0x10] sm:$0xff]
      %v4097 = vld [vmem:[%s4093 + $0x18] sm:$0xff]
      %4098 = vrot.lane.b32.xlu0 %v1410, 74
      %v4099 = vpop.permute.xlu0 %4098
      %4100 = vrot.lane.b32.xlu0 %v1411, 74
      %v4101 = vpop.permute.xlu0 %4100
      %4102 = vrot.lane.b32.xlu0 %v1412, 74
      %v4103 = vpop.permute.xlu0 %4102
      %4104 = vrot.lane.b32.xlu0 %v1413, 74
      %v4105 = vpop.permute.xlu0 %4104
      %4106 = vrot.lane.b32.xlu0 %v1414, 74
      %v4107 = vpop.permute.xlu0 %4106
      %4108 = vrot.lane.b32.xlu0 %v1415, 74
      %v4109 = vpop.permute.xlu0 %4108
      %4110 = vrot.lane.b32.xlu0 %v1416, 74
      %v4111 = vpop.permute.xlu0 %4110
      %4112 = vrot.lane.b32.xlu0 %v1417, 74
      %v4113 = vpop.permute.xlu0 %4112
      %4114 = vrot.lane.b32.xlu0 %v1418, 74
      %v4115 = vpop.permute.xlu0 %4114
      %4116 = vrot.lane.b32.xlu0 %v1419, 74
      %v4117 = vpop.permute.xlu0 %4116
      %4118 = vrot.lane.b32.xlu0 %v1420, 74
      %v4119 = vpop.permute.xlu0 %4118
      %4120 = vrot.lane.b32.xlu0 %v1421, 74
      %v4121 = vpop.permute.xlu0 %4120
      %v4122 = vsel %vm1342, %v4099, %v4101
      %v4123 = vsel %vm1342, %v4101, %v4103
      %v4124 = vsel %vm1342, %v4103, %v4105
      %v4125 = vsel %vm1342, %v4105, %v4107
      %v4126 = vsel %vm1342, %v4107, %v4109
      %v4127 = vsel %vm1342, %v4111, %v4113
      %v4128 = vsel %vm1342, %v4113, %v4115
      %v4129 = vsel %vm1342, %v4115, %v4117
      %v4130 = vsel %vm1342, %v4117, %v4119
      %v4131 = vsel %vm1342, %v4119, %v4121
      %v4143 = vsel %vm1478, %v4094, 0
      %v4146 = vsel %vm1478, %v4095, 0
      %v4149 = vsel %vm1478, %v4096, 0
      %v4152 = vsel %vm1478, %v4097, 0
      %4154 = vmatprep.subr.mxu0 0.0
      %4155 = vmatpush1.msra.mxu0 0.0
      %4156 = vmatprep.subr.mxu0 0.0
      %4157 = vmatpush1.msra.mxu0 0.0
      %4158 = vmatprep.subr.mxu0 0.0
      %4159 = vmatpush1.msra.mxu0 0.0
      %4160 = vmatprep.subr.mxu0 0.0
      %4161 = vmatpush1.msra.mxu0 0.0
      %4162 = vmatprep.subr.mxu0 0.0
      %4163 = vmatpush1.msra.mxu0 0.0
      %4164 = vmatprep.subr.mxu0 0.0
      %4165 = vmatpush1.msra.mxu0 0.0
      %4166 = vmatprep.subr.mxu0 0.0
      %4167 = vmatpush1.msra.mxu0 0.0
      %4168 = vmatprep.subr.mxu0 0.0
      %4169 = vmatpush1.msra.mxu0 0.0
      %4170 = vmatprep.subr.mxu0 0.0
      %4171 = vmatpush1.msra.mxu0 0.0
      %4172 = vmatprep.subr.mxu0 0.0
      %4173 = vmatpush1.msra.mxu0 0.0
      %4174 = vmatprep.subr.mxu0 0.0
      %4175 = vmatpush1.msra.mxu0 0.0
      %4176 = vmatprep.subr.mxu0 0.0
      %4177 = vmatpush1.msra.mxu0 0.0
      %4178 = vmatprep.subr.mxu0 0.0
      %4179 = vmatpush1.msra.mxu0 0.0
      %4180 = vmatprep.subr.mxu0 0.0
      %4181 = vmatpush1.msra.mxu0 0.0
      %4182 = vmatprep.subr.mxu0 %v4128
      %4183 = vmatpush1.msra.mxu0 %v4127
      %4184 = vmatprep.subr.mxu0 %v4123
      %4185 = vmatpush1.msra.mxu0 %v4122
      %4186 = vmatprep.subr.mxu0 0.0
      %4187 = vmatpush2.msra.mxu0 0.0
      %4188 = vmatprep.subr.mxu0 0.0
      %4189 = vmatpush2.msra.mxu0 0.0
      %4190 = vmatprep.subr.mxu0 0.0
      %4191 = vmatpush2.msra.mxu0 0.0
      %4192 = vmatprep.subr.mxu0 0.0
      %4193 = vmatpush2.msra.mxu0 0.0
      %4194 = vmatprep.subr.mxu0 0.0
      %4195 = vmatpush2.msra.mxu0 0.0
      %4196 = vmatprep.subr.mxu0 0.0
      %4197 = vmatpush2.msra.mxu0 0.0
      %4198 = vmatprep.subr.mxu0 0.0
      %4199 = vmatpush2.msra.mxu0 0.0
      %4200 = vmatprep.subr.mxu0 0.0
      %4201 = vmatpush2.msra.mxu0 0.0
      %4202 = vmatprep.subr.mxu0 0.0
      %4203 = vmatpush2.msra.mxu0 0.0
      %4204 = vmatprep.subr.mxu0 0.0
      %4205 = vmatpush2.msra.mxu0 0.0
      %4206 = vmatprep.subr.mxu0 0.0
      %4207 = vmatpush2.msra.mxu0 0.0
      %4208 = vmatprep.subr.mxu0 0.0
      %4209 = vmatpush2.msra.mxu0 0.0
      %4210 = vmatprep.subr.mxu0 0.0
      %4211 = vmatpush2.msra.mxu0 0.0
      %4212 = vmatprep.subr.mxu0 0.0
      %4213 = vmatpush2.msra.mxu0 0.0
      %4214 = vmatprep.subr.mxu0 0.0
      %4215 = vmatpush2.msra.mxu0 0.0
      %4216 = vmatprep.subr.mxu0 0.0
      %4217 = vmatpush2.msra.mxu0 0.0
      %4218 = vmatprep.mubr.f32.mxu0 0.0
      %4219 = vmatmul.mubr.f32.gmra.mxu0 %v4143
      %v4220 = vpop.f32.mrf.mxu0
      %v4221 = vadd.f32 0.0, %v4220
      %v4222 = vpop.f32.mrf.mxu0
      %v4223 = vadd.f32 0.0, %v4222
      %4224 = vmatprep.mubr.f32.mxu0 0.0
      %4225 = vmatmul.mubr.f32.gmra.mxu0 %v4146
      %v4226 = vpop.f32.mrf.mxu0
      %v4227 = vadd.f32 0.0, %v4226
      %v4228 = vpop.f32.mrf.mxu0
      %v4229 = vadd.f32 0.0, %v4228
      %4230 = vmatprep.mubr.f32.mxu0 0.0
      %4231 = vmatmul.mubr.f32.gmra.mxu0 %v4149
      %v4232 = vpop.f32.mrf.mxu0
      %v4233 = vadd.f32 0.0, %v4232
      %v4234 = vpop.f32.mrf.mxu0
      %v4235 = vadd.f32 0.0, %v4234
      %4236 = vmatprep.mubr.f32.mxu0 0.0
      %4237 = vmatmul.mubr.f32.gmra.mxu0 %v4152
      %v4238 = vpop.f32.mrf.mxu0
      %v4239 = vadd.f32 0.0, %v4238
      %v4240 = vpop.f32.mrf.mxu0
      %v4241 = vadd.f32 0.0, %v4240
      %4242 = vdwg.mxu0
      %4243 = vmatprep.subr.mxu0 0.0
      %4244 = vmatpush1.msra.mxu0 0.0
      %4245 = vmatprep.subr.mxu0 0.0
      %4246 = vmatpush1.msra.mxu0 0.0
      %4247 = vmatprep.subr.mxu0 0.0
      %4248 = vmatpush1.msra.mxu0 0.0
      %4249 = vmatprep.subr.mxu0 0.0
      %4250 = vmatpush1.msra.mxu0 0.0
      %4251 = vmatprep.subr.mxu0 0.0
      %4252 = vmatpush1.msra.mxu0 0.0
      %4253 = vmatprep.subr.mxu0 0.0
      %4254 = vmatpush1.msra.mxu0 0.0
      %4255 = vmatprep.subr.mxu0 0.0
      %4256 = vmatpush1.msra.mxu0 0.0
      %4257 = vmatprep.subr.mxu0 0.0
      %4258 = vmatpush1.msra.mxu0 0.0
      %4259 = vmatprep.subr.mxu0 0.0
      %4260 = vmatpush1.msra.mxu0 0.0
      %4261 = vmatprep.subr.mxu0 0.0
      %4262 = vmatpush1.msra.mxu0 0.0
      %4263 = vmatprep.subr.mxu0 0.0
      %4264 = vmatpush1.msra.mxu0 0.0
      %4265 = vmatprep.subr.mxu0 0.0
      %4266 = vmatpush1.msra.mxu0 0.0
      %4267 = vmatprep.subr.mxu0 0.0
      %4268 = vmatpush1.msra.mxu0 0.0
      %4269 = vmatprep.subr.mxu0 0.0
      %4270 = vmatpush1.msra.mxu0 0.0
      %4271 = vmatprep.subr.mxu0 %v4130
      %4272 = vmatpush1.msra.mxu0 %v4129
      %4273 = vmatprep.subr.mxu0 %v4125
      %4274 = vmatpush1.msra.mxu0 %v4124
      %4275 = vmatprep.subr.mxu0 0.0
      %4276 = vmatpush2.msra.mxu0 0.0
      %4277 = vmatprep.subr.mxu0 0.0
      %4278 = vmatpush2.msra.mxu0 0.0
      %4279 = vmatprep.subr.mxu0 0.0
      %4280 = vmatpush2.msra.mxu0 0.0
      %4281 = vmatprep.subr.mxu0 0.0
      %4282 = vmatpush2.msra.mxu0 0.0
      %4283 = vmatprep.subr.mxu0 0.0
      %4284 = vmatpush2.msra.mxu0 0.0
      %4285 = vmatprep.subr.mxu0 0.0
      %4286 = vmatpush2.msra.mxu0 0.0
      %4287 = vmatprep.subr.mxu0 0.0
      %4288 = vmatpush2.msra.mxu0 0.0
      %4289 = vmatprep.subr.mxu0 0.0
      %4290 = vmatpush2.msra.mxu0 0.0
      %4291 = vmatprep.subr.mxu0 0.0
      %4292 = vmatpush2.msra.mxu0 0.0
      %4293 = vmatprep.subr.mxu0 0.0
      %4294 = vmatpush2.msra.mxu0 0.0
      %4295 = vmatprep.subr.mxu0 0.0
      %4296 = vmatpush2.msra.mxu0 0.0
      %4297 = vmatprep.subr.mxu0 0.0
      %4298 = vmatpush2.msra.mxu0 0.0
      %4299 = vmatprep.subr.mxu0 0.0
      %4300 = vmatpush2.msra.mxu0 0.0
      %4301 = vmatprep.subr.mxu0 0.0
      %4302 = vmatpush2.msra.mxu0 0.0
      %4303 = vmatprep.subr.mxu0 0.0
      %4304 = vmatpush2.msra.mxu0 0.0
      %4305 = vmatprep.subr.mxu0 0.0
      %4306 = vmatpush2.msra.mxu0 0.0
      %4307 = vmatprep.mubr.f32.mxu0 0.0
      %4308 = vmatmul.mubr.f32.gmra.mxu0 %v4143
      %v4309 = vpop.f32.mrf.mxu0
      %v4310 = vadd.f32 0.0, %v4309
      %v4311 = vpop.f32.mrf.mxu0
      %v4312 = vadd.f32 0.0, %v4311
      %4313 = vmatprep.mubr.f32.mxu0 0.0
      %4314 = vmatmul.mubr.f32.gmra.mxu0 %v4146
      %v4315 = vpop.f32.mrf.mxu0
      %v4316 = vadd.f32 0.0, %v4315
      %v4317 = vpop.f32.mrf.mxu0
      %v4318 = vadd.f32 0.0, %v4317
      %4319 = vmatprep.mubr.f32.mxu0 0.0
      %4320 = vmatmul.mubr.f32.gmra.mxu0 %v4149
      %v4321 = vpop.f32.mrf.mxu0
      %v4322 = vadd.f32 0.0, %v4321
      %v4323 = vpop.f32.mrf.mxu0
      %v4324 = vadd.f32 0.0, %v4323
      %4325 = vmatprep.mubr.f32.mxu0 0.0
      %4326 = vmatmul.mubr.f32.gmra.mxu0 %v4152
      %v4327 = vpop.f32.mrf.mxu0
      %v4328 = vadd.f32 0.0, %v4327
      %v4329 = vpop.f32.mrf.mxu0
      %v4330 = vadd.f32 0.0, %v4329
      %4331 = vdwg.mxu0
      %4332 = vmatprep.subr.mxu0 0.0
      %4333 = vmatpush1.msra.mxu0 0.0
      %4334 = vmatprep.subr.mxu0 0.0
      %4335 = vmatpush1.msra.mxu0 0.0
      %4336 = vmatprep.subr.mxu0 0.0
      %4337 = vmatpush1.msra.mxu0 0.0
      %4338 = vmatprep.subr.mxu0 0.0
      %4339 = vmatpush1.msra.mxu0 0.0
      %4340 = vmatprep.subr.mxu0 0.0
      %4341 = vmatpush1.msra.mxu0 0.0
      %4342 = vmatprep.subr.mxu0 0.0
      %4343 = vmatpush1.msra.mxu0 0.0
      %4344 = vmatprep.subr.mxu0 0.0
      %4345 = vmatpush1.msra.mxu0 0.0
      %4346 = vmatprep.subr.mxu0 0.0
      %4347 = vmatpush1.msra.mxu0 0.0
      %4348 = vmatprep.subr.mxu0 0.0
      %4349 = vmatpush1.msra.mxu0 0.0
      %4350 = vmatprep.subr.mxu0 0.0
      %4351 = vmatpush1.msra.mxu0 0.0
      %4352 = vmatprep.subr.mxu0 0.0
      %4353 = vmatpush1.msra.mxu0 0.0
      %4354 = vmatprep.subr.mxu0 0.0
      %4355 = vmatpush1.msra.mxu0 0.0
      %4356 = vmatprep.subr.mxu0 0.0
      %4357 = vmatpush1.msra.mxu0 0.0
      %4358 = vmatprep.subr.mxu0 0.0
      %4359 = vmatpush1.msra.mxu0 0.0
      %4360 = vmatprep.subr.mxu0 0.0
      %4361 = vmatpush1.msra.mxu0 %v4131
      %4362 = vmatprep.subr.mxu0 0.0
      %4363 = vmatpush1.msra.mxu0 %v4126
      %4364 = vmatprep.subr.mxu0 0.0
      %4365 = vmatpush2.msra.mxu0 0.0
      %4366 = vmatprep.subr.mxu0 0.0
      %4367 = vmatpush2.msra.mxu0 0.0
      %4368 = vmatprep.subr.mxu0 0.0
      %4369 = vmatpush2.msra.mxu0 0.0
      %4370 = vmatprep.subr.mxu0 0.0
      %4371 = vmatpush2.msra.mxu0 0.0
      %4372 = vmatprep.subr.mxu0 0.0
      %4373 = vmatpush2.msra.mxu0 0.0
      %4374 = vmatprep.subr.mxu0 0.0
      %4375 = vmatpush2.msra.mxu0 0.0
      %4376 = vmatprep.subr.mxu0 0.0
      %4377 = vmatpush2.msra.mxu0 0.0
      %4378 = vmatprep.subr.mxu0 0.0
      %4379 = vmatpush2.msra.mxu0 0.0
      %4380 = vmatprep.subr.mxu0 0.0
      %4381 = vmatpush2.msra.mxu0 0.0
      %4382 = vmatprep.subr.mxu0 0.0
      %4383 = vmatpush2.msra.mxu0 0.0
      %4384 = vmatprep.subr.mxu0 0.0
      %4385 = vmatpush2.msra.mxu0 0.0
      %4386 = vmatprep.subr.mxu0 0.0
      %4387 = vmatpush2.msra.mxu0 0.0
      %4388 = vmatprep.subr.mxu0 0.0
      %4389 = vmatpush2.msra.mxu0 0.0
      %4390 = vmatprep.subr.mxu0 0.0
      %4391 = vmatpush2.msra.mxu0 0.0
      %4392 = vmatprep.subr.mxu0 0.0
      %4393 = vmatpush2.msra.mxu0 0.0
      %4394 = vmatprep.subr.mxu0 0.0
      %4395 = vmatpush2.msra.mxu0 0.0
      %4396 = vmatprep.mubr.f32.mxu0 0.0
      %4397 = vmatmul.mubr.f32.gmra.mxu0 %v4143
      %v4398 = vpop.f32.mrf.mxu0
      %v4399 = vadd.f32 0.0, %v4398
      %v4400 = vpop.f32.mrf.mxu0
      %4401 = vmatprep.mubr.f32.mxu0 0.0
      %4402 = vmatmul.mubr.f32.gmra.mxu0 %v4146
      %v4403 = vpop.f32.mrf.mxu0
      %v4404 = vadd.f32 0.0, %v4403
      %v4405 = vpop.f32.mrf.mxu0
      %4406 = vmatprep.mubr.f32.mxu0 0.0
      %4407 = vmatmul.mubr.f32.gmra.mxu0 %v4149
      %v4408 = vpop.f32.mrf.mxu0
      %v4409 = vadd.f32 0.0, %v4408
      %v4410 = vpop.f32.mrf.mxu0
      %4411 = vmatprep.mubr.f32.mxu0 0.0
      %4412 = vmatmul.mubr.f32.gmra.mxu0 %v4152
      %v4413 = vpop.f32.mrf.mxu0
      %v4414 = vadd.f32 0.0, %v4413
      %v4415 = vpop.f32.mrf.mxu0
      %4416 = vdwg.mxu0
      %v4417 = vadd.f32 %v4073, %v4221
      %v4418 = vadd.f32 %v4074, %v4223
      %v4419 = vadd.f32 %v4075, %v4310
      %v4420 = vadd.f32 %v4076, %v4312
      %v4421 = vadd.f32 %v4077, %v4399
      %v4422 = vadd.f32 %v4078, %v4227
      %v4423 = vadd.f32 %v4079, %v4229
      %v4424 = vadd.f32 %v4080, %v4316
      %v4425 = vadd.f32 %v4081, %v4318
      %v4426 = vadd.f32 %v4082, %v4404
      %v4427 = vadd.f32 %v4083, %v4233
      %v4428 = vadd.f32 %v4084, %v4235
      %v4429 = vadd.f32 %v4085, %v4322
      %v4430 = vadd.f32 %v4086, %v4324
      %v4431 = vadd.f32 %v4087, %v4409
      %v4432 = vadd.f32 %v4088, %v4239
      %v4433 = vadd.f32 %v4089, %v4241
      %v4434 = vadd.f32 %v4090, %v4328
      %v4435 = vadd.f32 %v4091, %v4330
      %v4436 = vadd.f32 %v4092, %v4414
      %4438 = vset.pattern.permute.xlu0 0
      %4439 = vperm.xlu0 %4438, %v234
      %v4440 = vpop.permute.xlu0 %4439
      %4443 = vset.pattern.permute.xlu0 0
      %4444 = vperm.xlu0 %4443, %v235
      %v4445 = vpop.permute.xlu0 %4444
      %4448 = vset.pattern.permute.xlu0 0
      %4449 = vperm.xlu0 %4448, %v236
      %v4450 = vpop.permute.xlu0 %4449
      %4453 = vset.pattern.permute.xlu0 0
      %4454 = vperm.xlu0 %4453, %v237
      %v4455 = vpop.permute.xlu0 %4454
      %v4457 = vadd.f32 %v4417, %v4440
      %v4458 = vadd.f32 %v4418, %v4440
      %v4459 = vadd.f32 %v4419, %v4440
      %v4460 = vadd.f32 %v4420, %v4440
      %v4461 = vadd.f32 %v4421, %v4440
      %v4462 = vadd.f32 %v4422, %v4445
      %v4463 = vadd.f32 %v4423, %v4445
      %v4464 = vadd.f32 %v4424, %v4445
      %v4465 = vadd.f32 %v4425, %v4445
      %v4466 = vadd.f32 %v4426, %v4445
      %v4467 = vadd.f32 %v4427, %v4450
      %v4468 = vadd.f32 %v4428, %v4450
      %v4469 = vadd.f32 %v4429, %v4450
      %v4470 = vadd.f32 %v4430, %v4450
      %v4471 = vadd.f32 %v4431, %v4450
      %v4472 = vadd.f32 %v4432, %v4455
      %v4473 = vadd.f32 %v4433, %v4455
      %v4474 = vadd.f32 %v4434, %v4455
      %v4475 = vadd.f32 %v4435, %v4455
      %v4476 = vadd.f32 %v4436, %v4455
      %4477 = vst [vmem:[%s224] sm:$0xff] %v4457
      %4478 = vst [vmem:[%s224 + $0x8] sm:$0xff] %v4458
      %4479 = vst [vmem:[%s224 + $0x10] sm:$0xff] %v4459
      %4480 = vst [vmem:[%s224 + $0x18] sm:$0xff] %v4460
      %4481 = vst [vmem:[%s224 + $0x20] sm:$0xff] %v4461
      %4482 = vst [vmem:[%s224 + $0x28] sm:$0xff] %v4462
      %4483 = vst [vmem:[%s224 + $0x30] sm:$0xff] %v4463
      %4484 = vst [vmem:[%s224 + $0x38] sm:$0xff] %v4464
      %4485 = vst [vmem:[%s224 + $0x40] sm:$0xff] %v4465
      %4486 = vst [vmem:[%s224 + $0x48] sm:$0xff] %v4466
      %4487 = vst [vmem:[%s224 + $0x50] sm:$0xff] %v4467
      %4488 = vst [vmem:[%s224 + $0x58] sm:$0xff] %v4468
      %4489 = vst [vmem:[%s224 + $0x60] sm:$0xff] %v4469
      %4490 = vst [vmem:[%s224 + $0x68] sm:$0xff] %v4470
      %4491 = vst [vmem:[%s224 + $0x70] sm:$0xff] %v4471
      %4492 = vst [vmem:[%s224 + $0x78] sm:$0xff] %v4472
      %4493 = vst [vmem:[%s224 + $0x80] sm:$0xff] %v4473
      %4494 = vst [vmem:[%s224 + $0x88] sm:$0xff] %v4474
      %4495 = vst [vmem:[%s224 + $0x90] sm:$0xff] %v4475
      %4496 = vst [vmem:[%s224 + $0x98] sm:$0xff] %v4476
      %p4497 = scmp.lt.s32.totalorder %s16, 1
      %s4498 = scalar_select %p4497, %s16, 1
      %s4499 = smul.addr %s4498, 20
      %s4500 = smul.addr %s4499, 8
      %s4501 = scalar_lea.vmem %s5, %s4500
      // Predicated region
      $region41: #{model_forward.1} parent=39 // pred_check
        %p4502 = pneg %p144
      $region42: #{model_forward.1} parent=39 // pred_check_branch
        %4504 = sbr.rel (%p4502) target = $region44
      $region43: #{model_forward.1} parent=39 // pred_region
        _
      $region44: #{model_forward.1} parent=39 // pred_fallthru
        _
    $region40: #{model_forward.1} parent=5 // pred_fallthru
      _
    %p4505 = scmp.le.s32.totalorder 2, %s11
    // Predicated region
    $region45: #{model_forward.1} parent=5 // pred_check
      %p4506 = pneg %p4505
    $region46: #{model_forward.1} parent=5 // pred_check_branch
      %4508 = sbr.rel (%p4506) target = $region48
    $region47: #{model_forward.1} parent=5 // pred_region
      %s4509 = ssub.s32 %s11, 2
      // Predicated region
      $region49: #{model_forward.1} parent=47 // pred_check
        %p4510 = pneg %p150
      $region50: #{model_forward.1} parent=47 // pred_check_branch
        %4512 = sbr.rel (%p4510) target = $region52
      $region51: #{model_forward.1} parent=47 // pred_region
        %p4513 = scmp.lt.s32.totalorder %s17, 1
        %s4514 = scalar_select %p4513, %s17, 1
        %s4515 = smul.addr %s4514, 20
        %s4516 = smul.addr %s4515, 8
        %s4517 = scalar_lea.vmem %s5, %s4516
      $region52: #{model_forward.1} parent=47 // pred_fallthru
        _
    $region48: #{model_forward.1} parent=5 // pred_fallthru
      _
  $region6: #{model_forward.1} parent=0 // loop_footer
    %s15 = sadd.s32 1, %s11
  $region7: #{model_forward.1} parent=0 // loop_footer_branch
    %10 = sbr.rel target = $region3
  $region8: #{model_forward.1} parent=0 // loop_exit
    _

</llo_original>
